<compile_context>
chip_gen: v7x
topology: tpu7x:2x2x1
jax: 0.10.0
libtpu: 0.0.40
codegen_flags: <defaults>
</compile_context>

<pallas_src>
import jax
import jax.numpy as jnp
from jax.experimental import pallas as pl
from jax.experimental.pallas import tpu as pltpu

LANE = 128


def _round_up(n, m):
    return (n + m - 1) // m * m


def _vae_kernel(x_ref, eps_ref,
                w1_ref, b1_ref, wh_ref, bh_ref,
                wd1_ref, bd1_ref, wdh_ref, bdh_ref,
                mu_ref, lv_ref, z_ref, rmu_ref, rlv_ref):
    Lp = eps_ref.shape[-1]          # padded latent width (multiple of 128)
    Dinp = x_ref.shape[-1]          # padded input width (multiple of 128)

    # ---- encoder: h = relu(x W1 + b1) ----  (in-kernel bf16 cast, f32 acc)
    x = x_ref[...].astype(jnp.bfloat16)
    h = jnp.dot(x, w1_ref[...], preferred_element_type=jnp.float32) + b1_ref[...]
    h = jnp.maximum(h, 0.0)

    # ---- fused encoder head: [mu | logvar] in one MXU pass ----
    head = (jnp.dot(h.astype(jnp.bfloat16), wh_ref[...],
                    preferred_element_type=jnp.float32) + bh_ref[...])
    mu = head[:, :Lp]
    lv = head[:, Lp:]

    # ---- reparameterized sample (qz_x.rsample, K=1), f32 elementwise ----
    z = mu + jnp.exp(0.5 * lv) * eps_ref[...]

    mu_ref[...] = mu
    lv_ref[...] = lv
    z_ref[...] = z

    # ---- decoder: hd = relu(z Wd1 + bd1) ----
    hd = (jnp.dot(z.astype(jnp.bfloat16), wd1_ref[...],
                  preferred_element_type=jnp.float32) + bd1_ref[...])
    hd = jnp.maximum(hd, 0.0)

    # ---- fused decoder head: [rec_mu | rec_logvar] in one MXU pass ----
    rec = (jnp.dot(hd.astype(jnp.bfloat16), wdh_ref[...],
                   preferred_element_type=jnp.float32) + bdh_ref[...])
    rmu_ref[...] = rec[:, :Dinp].astype(rmu_ref.dtype)
    rlv_ref[...] = rec[:, Dinp:].astype(rlv_ref.dtype)


def base_vae_forward(x_nchw, eps, params, rec_dtype=jnp.bfloat16):
    """Fused BaseVae forward (Normal prior, K=1).

    x_nchw: [B, C, H, W] float32
    eps:    [B, L]       float32 standard-normal noise (K=1)
    returns (mu, logvar, zs, rec_mu, rec_logvar); rec_* in `rec_dtype`.
    """
    (w1, b1, wmu, bmu, wlv, blv, wd1, bd1, wdmu, bdmu, wdlv, bdlv) = params
    B = x_nchw.shape[0]
    Din = x_nchw.shape[1] * x_nchw.shape[2] * x_nchw.shape[3]
    HID = w1.shape[1]
    L = wmu.shape[1]
    assert eps.shape == (B, L)  # TODO(synk): K>1 posterior sampling not implemented.

    # padded, lane-aligned dims
    Dinp = _round_up(Din, LANE)
    HIDp = _round_up(HID, LANE)
    Lp = _round_up(L, LANE)

    # ---- batch tiling: avoid near-doubling of work, keep 2 TCs busy on v7x
    num_tiles = pl.cdiv(B, 256)
    if num_tiles == 1 and B >= 32:
        num_tiles = 2                       # split batch across v7x TensorCores
    TM = pl.cdiv(B, num_tiles)
    TM = _round_up(TM, 16) if TM >= 16 else B   # tiny batch: one full-extent block
    B_pad = _round_up(B, TM)
    grid = (B_pad // TM,)

    def pad2(a, r, c):
        pr, pc = r - a.shape[0], c - a.shape[1]
        if pr == 0 and pc == 0:
            return a
        return jnp.pad(a, ((0, pr), (0, pc)))

    # x stays f32 (no wrapper-side bf16 copy); reshape only.
    x_p = pad2(x_nchw.reshape(B, Din).astype(jnp.float32), B_pad, Dinp)
    eps_p = pad2(eps.astype(jnp.float32), B_pad, Lp)

    # weights: bf16 for MXU; biases kept f32 and 2D [1, F]
    w1_p = pad2(w1, Dinp, HIDp).astype(jnp.bfloat16)
    b1_p = pad2(b1, 1, HIDp).astype(jnp.float32)
    wh_p = jnp.concatenate([pad2(wmu, HIDp, Lp), pad2(wlv, HIDp, Lp)],
                           axis=1).astype(jnp.bfloat16)              # [HIDp, 2*Lp]
    bh_p = jnp.concatenate([pad2(bmu, 1, Lp), pad2(blv, 1, Lp)],
                           axis=1).astype(jnp.float32)
    wd1_p = pad2(wd1, Lp, HIDp).astype(jnp.bfloat16)
    bd1_p = pad2(bd1, 1, HIDp).astype(jnp.float32)
    wdh_p = jnp.concatenate([pad2(wdmu, HIDp, Dinp), pad2(wdlv, HIDp, Dinp)],
                            axis=1).astype(jnp.bfloat16)             # [HIDp, 2*Dinp]
    bdh_p = jnp.concatenate([pad2(bdmu, 1, Dinp), pad2(bdlv, 1, Dinp)],
                            axis=1).astype(jnp.float32)

    inputs = (x_p, eps_p, w1_p, b1_p, wh_p, bh_p, wd1_p, bd1_p, wdh_p, bdh_p)
    weight_bytes = sum(int(a.size) * a.dtype.itemsize for a in inputs[2:])
    rec_isz = jnp.dtype(rec_dtype).itemsize

    out_shapes = (
        jax.ShapeDtypeStruct((B_pad, Lp), jnp.float32),   # mu
        jax.ShapeDtypeStruct((B_pad, Lp), jnp.float32),   # logvar
        jax.ShapeDtypeStruct((B_pad, Lp), jnp.float32),   # z
        jax.ShapeDtypeStruct((B_pad, Dinp), rec_dtype),   # rec_mu
        jax.ShapeDtypeStruct((B_pad, Dinp), rec_dtype),   # rec_logvar
    )

    in_bytes = sum(int(a.size) * a.dtype.itemsize for a in inputs)
    out_bytes = B_pad * (3 * Lp * 4 + 2 * Dinp * rec_isz)
    flops = 2 * B_pad * (Dinp * HIDp + HIDp * 2 * Lp + Lp * HIDp + HIDp * 2 * Dinp)
    cost = pl.CostEstimate(flops=flops, transcendentals=B_pad * Lp,
                           bytes_accessed=in_bytes + out_bytes)

    # generation-aware VMEM budget (v7x has 64 MiB/TC vs 128 MiB on v5e/v6e)
    try:
        vmem_cap = int(pltpu.get_tpu_info().vmem_capacity_bytes)
    except Exception:
        vmem_cap = 64 << 20        # conservative: smallest across generations

    def _run(use_pipeline_modes):
        kw_w = {"pipeline_mode": pl.Buffered(1)} if use_pipeline_modes else {}
        deep_io = use_pipeline_modes and grid[0] >= 3
        kw_io = {"pipeline_mode": pl.Buffered(3)} if deep_io else {}

        def resident(a):
            return pl.BlockSpec(a.shape, lambda i: (0, 0), **kw_w)

        def row(cols, **kw):
            return pl.BlockSpec((TM, cols), lambda i: (i, 0), **kw)

        in_specs = [
            row(Dinp, **kw_io),                     # x tile
            row(Lp),                                # eps tile
            resident(w1_p), resident(b1_p), resident(wh_p), resident(bh_p),
            resident(wd1_p), resident(bd1_p), resident(wdh_p), resident(bdh_p),
        ]
        out_specs = [
            row(Lp), row(Lp), row(Lp),              # mu, logvar, z
            row(Dinp, **kw_io), row(Dinp, **kw_io),  # rec_mu, rec_logvar
        ]

        weight_buf = 1 if use_pipeline_modes else 2
        io_buf = 3 if deep_io else 2
        tile_bytes = (io_buf * TM * Dinp * 4            # x tiles (f32)
                      + 2 * TM * Lp * 4                 # eps tiles
                      + 2 * 3 * TM * Lp * 4             # mu/logvar/z tiles
                      + io_buf * 2 * TM * Dinp * rec_isz)  # rec tiles
        vmem_limit = min(int(0.75 * vmem_cap),
                         max(32 << 20,
                             weight_buf * weight_bytes + tile_bytes + (16 << 20)))

        return pl.pallas_call(
            _vae_kernel,
            out_shape=out_shapes,
            grid=grid,
            in_specs=in_specs,
            out_specs=out_specs,
            compiler_params=pltpu.CompilerParams(
                dimension_semantics=("parallel",),
                vmem_limit_bytes=int(vmem_limit)),
            cost_estimate=cost,
        )(*inputs)

    try:
        outs = jax.block_until_ready(_run(True))
    except Exception:
        # pipeline_mode / Buffered not supported by this jax build — plain specs.
        outs = jax.block_until_ready(_run(False))

    mu_f, lv_f, z_f, rmu_f, rlv_f = outs

    def trim(a, rows, cols):
        return a if a.shape == (rows, cols) else a[:rows, :cols]

    mu = trim(mu_f, B, L)
    logvar = trim(lv_f, B, L)
    zs = trim(z_f, B, L)
    rec_mu = trim(rmu_f, B, Din)    # no-op slice when B, Din already aligned
    rec_lv = trim(rlv_f, B, Din)
    return mu, logvar, zs, rec_mu, rec_lv


def init_params(key, din, hidden, latent):
    """Deterministic parameter init (Glorot-ish scaling), all float32.
    Biases are kept 2D [1, F] so in-kernel broadcasting stays lane-aligned."""
    ks = jax.random.split(key, 6)

    def lin(k, fan_in, fan_out):
        scale = 1.0 / jnp.sqrt(jnp.float32(fan_in))
        return jax.random.normal(k, (fan_in, fan_out), jnp.float32) * scale

    w1 = lin(ks[0], din, hidden);     b1 = jnp.zeros((1, hidden), jnp.float32)
    wmu = lin(ks[1], hidden, latent); bmu = jnp.zeros((1, latent), jnp.float32)
    wlv = lin(ks[2], hidden, latent); blv = jnp.zeros((1, latent), jnp.float32)
    wd1 = lin(ks[3], latent, hidden); bd1 = jnp.zeros((1, hidden), jnp.float32)
    wdmu = lin(ks[4], hidden, din);   bdmu = jnp.zeros((1, din), jnp.float32)
    wdlv = lin(ks[5], hidden, din);   bdlv = jnp.zeros((1, din), jnp.float32)
    return (w1, b1, wmu, bmu, wlv, blv, wd1, bd1, wdmu, bdmu, wdlv, bdlv)


def reference_forward(x_nchw, eps, params):
    """Plain-JAX reference mirroring the PyTorch semantics (matmul operands in
    bf16 / f32 accumulate, same as the kernel)."""
    (w1, b1, wmu, bmu, wlv, blv, wd1, bd1, wdmu, bdmu, wdlv, bdlv) = params
    B = x_nchw.shape[0]
    x = x_nchw.reshape(B, -1).astype(jnp.float32)
    bf = lambda a: a.astype(jnp.bfloat16)
    mm = lambda a, w: jnp.dot(bf(a), bf(w), preferred_element_type=jnp.float32)
    h = jnp.maximum(mm(x, w1) + b1, 0.0)
    mu = mm(h, wmu) + bmu
    lv = mm(h, wlv) + blv
    z = mu + jnp.exp(0.5 * lv) * eps
    hd = jnp.maximum(mm(z, wd1) + bd1, 0.0)
    return mu, lv, z, mm(hd, wdmu) + bdmu, mm(hd, wdlv) + bdlv


if __name__ == "__main__":
    B, C, H, W = 2, 4, 16, 16
    Din = C * H * W        # 1024
    HID = 64
    LAT = 32
    K = 1

    key = jax.random.PRNGKey(0)
    k_x, k_eps, k_p = jax.random.split(key, 3)

    x = jax.random.normal(k_x, (B, C, H, W), jnp.float32)       # NCHW input
    eps = jax.random.normal(k_eps, (K * B, LAT), jnp.float32)   # rsample noise
    params = init_params(k_p, Din, HID, LAT)

    outs = jax.block_until_ready(base_vae_forward(x, eps, params))
    mu, logvar, zs, rec_mu, rec_lv = outs

    # zs corresponds to qz_x.rsample(K) -> [K, B, LAT] (K=1); decode input is
    # zs.reshape(1, -1, n_latents) as in the PyTorch forward.
    zs_K = zs.reshape(K, B, LAT)
    _ = zs_K

    ref = reference_forward(x, eps, params)
    names = ("mu", "logvar", "zs", "rec_mu", "rec_logvar")
    for name, got, want in zip(names, outs, ref):
        assert got.shape == want.shape, (name, got.shape, want.shape)
        tol = 2e-2 if got.dtype == jnp.bfloat16 else 1e-2
        ok = jnp.allclose(got.astype(jnp.float32), want.astype(jnp.float32),
                          atol=tol, rtol=tol)
        assert ok, f"mismatch vs reference in {name}"

    print("KERNEL_OK")
</pallas_src>

<mosaic_0001>
module attributes {stable_mosaic.version = 11 : i64} {
  func.func @_vae_kernel(%arg0: i32, %arg1: memref<2x1024xf32, #tpu.memory_space<vmem>>, %arg2: memref<2x128xf32, #tpu.memory_space<vmem>>, %arg3: memref<1024x128xbf16, #tpu.memory_space<vmem>>, %arg4: memref<1x128xf32, #tpu.memory_space<vmem>>, %arg5: memref<128x256xbf16, #tpu.memory_space<vmem>>, %arg6: memref<1x256xf32, #tpu.memory_space<vmem>>, %arg7: memref<128x128xbf16, #tpu.memory_space<vmem>>, %arg8: memref<1x128xf32, #tpu.memory_space<vmem>>, %arg9: memref<128x2048xbf16, #tpu.memory_space<vmem>>, %arg10: memref<1x2048xf32, #tpu.memory_space<vmem>>, %arg11: memref<2x128xf32, #tpu.memory_space<vmem>>, %arg12: memref<2x128xf32, #tpu.memory_space<vmem>>, %arg13: memref<2x128xf32, #tpu.memory_space<vmem>>, %arg14: memref<2x1024xbf16, #tpu.memory_space<vmem>>, %arg15: memref<2x1024xbf16, #tpu.memory_space<vmem>>) attributes {dimension_semantics = [#tpu.dimension_semantics<parallel>], iteration_bounds = array<i64: 1>, scalar_prefetch = 0 : i64, scratch_operands = 0 : i64, tpu.core_type = #tpu.core_type<tc>, window_params = [{transform_indices = @transform_0, window_bounds = array<i64: 2, 1024>}, {transform_indices = @transform_1, window_bounds = array<i64: 2, 128>}, {pipeline_mode = #tpu.pipeline_mode<synchronous>, transform_indices = @transform_2, window_bounds = array<i64: 1024, 128>}, {pipeline_mode = #tpu.pipeline_mode<synchronous>, transform_indices = @transform_3, window_bounds = array<i64: 1, 128>}, {pipeline_mode = #tpu.pipeline_mode<synchronous>, transform_indices = @transform_4, window_bounds = array<i64: 128, 256>}, {pipeline_mode = #tpu.pipeline_mode<synchronous>, transform_indices = @transform_5, window_bounds = array<i64: 1, 256>}, {pipeline_mode = #tpu.pipeline_mode<synchronous>, transform_indices = @transform_6, window_bounds = array<i64: 128, 128>}, {pipeline_mode = #tpu.pipeline_mode<synchronous>, transform_indices = @transform_7, window_bounds = array<i64: 1, 128>}, {pipeline_mode = #tpu.pipeline_mode<synchronous>, transform_indices = @transform_8, window_bounds = array<i64: 128, 2048>}, {pipeline_mode = #tpu.pipeline_mode<synchronous>, transform_indices = @transform_9, window_bounds = array<i64: 1, 2048>}, {transform_indices = @transform_10, window_bounds = array<i64: 2, 128>}, {transform_indices = @transform_11, window_bounds = array<i64: 2, 128>}, {transform_indices = @transform_12, window_bounds = array<i64: 2, 128>}, {transform_indices = @transform_13, window_bounds = array<i64: 2, 1024>}, {transform_indices = @transform_14, window_bounds = array<i64: 2, 1024>}]} {
    %c0 = arith.constant 0 : index
    %c0_0 = arith.constant 0 : index
    %0 = vector.load %arg1[%c0, %c0_0] : memref<2x1024xf32, #tpu.memory_space<vmem>>, vector<2x1024xf32>
    %1 = arith.truncf %0 : vector<2x1024xf32> to vector<2x1024xbf16>
    %c0_1 = arith.constant 0 : index
    %c0_2 = arith.constant 0 : index
    %2 = vector.load %arg3[%c0_1, %c0_2] : memref<1024x128xbf16, #tpu.memory_space<vmem>>, vector<1024x128xbf16>
    %cst = arith.constant dense<0.000000e+00> : vector<2x128xf32>
    %3 = tpu.matmul %1, %2, %cst {dimension_numbers = #tpu.dot_dimension_numbers<[1], [0], [0], [1], [0, 0, 1, 1], [], []>} : vector<2x1024xbf16>, vector<1024x128xbf16>, vector<2x128xf32> -> vector<2x128xf32>
    %c0_3 = arith.constant 0 : index
    %c0_4 = arith.constant 0 : index
    %4 = vector.load %arg4[%c0_3, %c0_4] : memref<1x128xf32, #tpu.memory_space<vmem>>, vector<1x128xf32>
    %5 = vector.broadcast %4 : vector<1x128xf32> to vector<2x128xf32>
    %6 = arith.addf %3, %5 : vector<2x128xf32>
    %cst_5 = arith.constant 0.000000e+00 : f32
    %7 = vector.broadcast %cst_5 : f32 to vector<2x128xf32>
    %8 = arith.maximumf %6, %7 : vector<2x128xf32>
    %9 = arith.truncf %8 : vector<2x128xf32> to vector<2x128xbf16>
    %c0_6 = arith.constant 0 : index
    %c0_7 = arith.constant 0 : index
    %10 = vector.load %arg5[%c0_6, %c0_7] : memref<128x256xbf16, #tpu.memory_space<vmem>>, vector<128x256xbf16>
    %cst_8 = arith.constant dense<0.000000e+00> : vector<2x256xf32>
    %11 = tpu.matmul %9, %10, %cst_8 {dimension_numbers = #tpu.dot_dimension_numbers<[1], [0], [0], [1], [0, 0, 1, 1], [], []>} : vector<2x128xbf16>, vector<128x256xbf16>, vector<2x256xf32> -> vector<2x256xf32>
    %c0_9 = arith.constant 0 : index
    %c0_10 = arith.constant 0 : index
    %12 = vector.load %arg6[%c0_9, %c0_10] : memref<1x256xf32, #tpu.memory_space<vmem>>, vector<1x256xf32>
    %13 = vector.broadcast %12 : vector<1x256xf32> to vector<2x256xf32>
    %14 = arith.addf %11, %13 : vector<2x256xf32>
    %15 = vector.extract_strided_slice %14 {offsets = [0, 0], sizes = [2, 128], strides = [1, 1]} : vector<2x256xf32> to vector<2x128xf32>
    %16 = vector.extract_strided_slice %14 {offsets = [0, 128], sizes = [2, 128], strides = [1, 1]} : vector<2x256xf32> to vector<2x128xf32>
    %cst_11 = arith.constant 5.000000e-01 : f32
    %17 = vector.broadcast %cst_11 : f32 to vector<2x128xf32>
    %18 = arith.mulf %17, %16 : vector<2x128xf32>
    %19 = math.exp %18 : vector<2x128xf32>
    %c0_12 = arith.constant 0 : index
    %c0_13 = arith.constant 0 : index
    %20 = vector.load %arg2[%c0_12, %c0_13] : memref<2x128xf32, #tpu.memory_space<vmem>>, vector<2x128xf32>
    %21 = arith.mulf %19, %20 : vector<2x128xf32>
    %22 = arith.addf %15, %21 : vector<2x128xf32>
    %c0_14 = arith.constant 0 : index
    %c0_15 = arith.constant 0 : index
    %23 = vector.load %arg11[%c0_14, %c0_15] : memref<2x128xf32, #tpu.memory_space<vmem>>, vector<2x128xf32>
    tpu.vector_store %arg11[%c0_14, %c0_15], %15 {strides = array<i32>} : memref<2x128xf32, #tpu.memory_space<vmem>>, vector<2x128xf32>,
    %c0_16 = arith.constant 0 : index
    %c0_17 = arith.constant 0 : index
    %24 = vector.load %arg12[%c0_16, %c0_17] : memref<2x128xf32, #tpu.memory_space<vmem>>, vector<2x128xf32>
    tpu.vector_store %arg12[%c0_16, %c0_17], %16 {strides = array<i32>} : memref<2x128xf32, #tpu.memory_space<vmem>>, vector<2x128xf32>,
    %c0_18 = arith.constant 0 : index
    %c0_19 = arith.constant 0 : index
    %25 = vector.load %arg13[%c0_18, %c0_19] : memref<2x128xf32, #tpu.memory_space<vmem>>, vector<2x128xf32>
    tpu.vector_store %arg13[%c0_18, %c0_19], %22 {strides = array<i32>} : memref<2x128xf32, #tpu.memory_space<vmem>>, vector<2x128xf32>,
    %26 = arith.truncf %22 : vector<2x128xf32> to vector<2x128xbf16>
    %c0_20 = arith.constant 0 : index
    %c0_21 = arith.constant 0 : index
    %27 = vector.load %arg7[%c0_20, %c0_21] : memref<128x128xbf16, #tpu.memory_space<vmem>>, vector<128x128xbf16>
    %cst_22 = arith.constant dense<0.000000e+00> : vector<2x128xf32>
    %28 = tpu.matmul %26, %27, %cst_22 {dimension_numbers = #tpu.dot_dimension_numbers<[1], [0], [0], [1], [0, 0, 1, 1], [], []>} : vector<2x128xbf16>, vector<128x128xbf16>, vector<2x128xf32> -> vector<2x128xf32>
    %c0_23 = arith.constant 0 : index
    %c0_24 = arith.constant 0 : index
    %29 = vector.load %arg8[%c0_23, %c0_24] : memref<1x128xf32, #tpu.memory_space<vmem>>, vector<1x128xf32>
    %30 = vector.broadcast %29 : vector<1x128xf32> to vector<2x128xf32>
    %31 = arith.addf %28, %30 : vector<2x128xf32>
    %cst_25 = arith.constant 0.000000e+00 : f32
    %32 = vector.broadcast %cst_25 : f32 to vector<2x128xf32>
    %33 = arith.maximumf %31, %32 : vector<2x128xf32>
    %34 = arith.truncf %33 : vector<2x128xf32> to vector<2x128xbf16>
    %c0_26 = arith.constant 0 : index
    %c0_27 = arith.constant 0 : index
    %35 = vector.load %arg9[%c0_26, %c0_27] : memref<128x2048xbf16, #tpu.memory_space<vmem>>, vector<128x2048xbf16>
    %cst_28 = arith.constant dense<0.000000e+00> : vector<2x2048xf32>
    %36 = tpu.matmul %34, %35, %cst_28 {dimension_numbers = #tpu.dot_dimension_numbers<[1], [0], [0], [1], [0, 0, 1, 1], [], []>} : vector<2x128xbf16>, vector<128x2048xbf16>, vector<2x2048xf32> -> vector<2x2048xf32>
    %c0_29 = arith.constant 0 : index
    %c0_30 = arith.constant 0 : index
    %37 = vector.load %arg10[%c0_29, %c0_30] : memref<1x2048xf32, #tpu.memory_space<vmem>>, vector<1x2048xf32>
    %38 = vector.broadcast %37 : vector<1x2048xf32> to vector<2x2048xf32>
    %39 = arith.addf %36, %38 : vector<2x2048xf32>
    %40 = vector.extract_strided_slice %39 {offsets = [0, 0], sizes = [2, 1024], strides = [1, 1]} : vector<2x2048xf32> to vector<2x1024xf32>
    %41 = arith.truncf %40 : vector<2x1024xf32> to vector<2x1024xbf16>
    %c0_31 = arith.constant 0 : index
    %c0_32 = arith.constant 0 : index
    %42 = vector.load %arg14[%c0_31, %c0_32] : memref<2x1024xbf16, #tpu.memory_space<vmem>>, vector<2x1024xbf16>
    tpu.vector_store %arg14[%c0_31, %c0_32], %41 {strides = array<i32>} : memref<2x1024xbf16, #tpu.memory_space<vmem>>, vector<2x1024xbf16>,
    %43 = vector.extract_strided_slice %39 {offsets = [0, 1024], sizes = [2, 1024], strides = [1, 1]} : vector<2x2048xf32> to vector<2x1024xf32>
    %44 = arith.truncf %43 : vector<2x1024xf32> to vector<2x1024xbf16>
    %c0_33 = arith.constant 0 : index
    %c0_34 = arith.constant 0 : index
    %45 = vector.load %arg15[%c0_33, %c0_34] : memref<2x1024xbf16, #tpu.memory_space<vmem>>, vector<2x1024xbf16>
    tpu.vector_store %arg15[%c0_33, %c0_34], %44 {strides = array<i32>} : memref<2x1024xbf16, #tpu.memory_space<vmem>>, vector<2x1024xbf16>,
    return
  }
  func.func @transform_0(%arg0: i32) -> (i32, i32) {
    %c0_i32 = arith.constant 0 : i32
    %c0_i32_0 = arith.constant 0 : i32
    return %arg0, %c0_i32 : i32, i32
  }
  func.func @transform_1(%arg0: i32) -> (i32, i32) {
    %c0_i32 = arith.constant 0 : i32
    %c0_i32_0 = arith.constant 0 : i32
    return %arg0, %c0_i32 : i32, i32
  }
  func.func @transform_2(%arg0: i32) -> (i32, i32) {
    %c0_i32 = arith.constant 0 : i32
    %c0_i32_0 = arith.constant 0 : i32
    %c0_i32_1 = arith.constant 0 : i32
    return %c0_i32, %c0_i32_0 : i32, i32
  }
  func.func @transform_3(%arg0: i32) -> (i32, i32) {
    %c0_i32 = arith.constant 0 : i32
    %c0_i32_0 = arith.constant 0 : i32
    %c0_i32_1 = arith.constant 0 : i32
    return %c0_i32, %c0_i32_0 : i32, i32
  }
  func.func @transform_4(%arg0: i32) -> (i32, i32) {
    %c0_i32 = arith.constant 0 : i32
    %c0_i32_0 = arith.constant 0 : i32
    %c0_i32_1 = arith.constant 0 : i32
    return %c0_i32, %c0_i32_0 : i32, i32
  }
  func.func @transform_5(%arg0: i32) -> (i32, i32) {
    %c0_i32 = arith.constant 0 : i32
    %c0_i32_0 = arith.constant 0 : i32
    %c0_i32_1 = arith.constant 0 : i32
    return %c0_i32, %c0_i32_0 : i32, i32
  }
  func.func @transform_6(%arg0: i32) -> (i32, i32) {
    %c0_i32 = arith.constant 0 : i32
    %c0_i32_0 = arith.constant 0 : i32
    %c0_i32_1 = arith.constant 0 : i32
    return %c0_i32, %c0_i32_0 : i32, i32
  }
  func.func @transform_7(%arg0: i32) -> (i32, i32) {
    %c0_i32 = arith.constant 0 : i32
    %c0_i32_0 = arith.constant 0 : i32
    %c0_i32_1 = arith.constant 0 : i32
    return %c0_i32, %c0_i32_0 : i32, i32
  }
  func.func @transform_8(%arg0: i32) -> (i32, i32) {
    %c0_i32 = arith.constant 0 : i32
    %c0_i32_0 = arith.constant 0 : i32
    %c0_i32_1 = arith.constant 0 : i32
    return %c0_i32, %c0_i32_0 : i32, i32
  }
  func.func @transform_9(%arg0: i32) -> (i32, i32) {
    %c0_i32 = arith.constant 0 : i32
    %c0_i32_0 = arith.constant 0 : i32
    %c0_i32_1 = arith.constant 0 : i32
    return %c0_i32, %c0_i32_0 : i32, i32
  }
  func.func @transform_10(%arg0: i32) -> (i32, i32) {
    %c0_i32 = arith.constant 0 : i32
    %c0_i32_0 = arith.constant 0 : i32
    return %arg0, %c0_i32 : i32, i32
  }
  func.func @transform_11(%arg0: i32) -> (i32, i32) {
    %c0_i32 = arith.constant 0 : i32
    %c0_i32_0 = arith.constant 0 : i32
    return %arg0, %c0_i32 : i32, i32
  }
  func.func @transform_12(%arg0: i32) -> (i32, i32) {
    %c0_i32 = arith.constant 0 : i32
    %c0_i32_0 = arith.constant 0 : i32
    return %arg0, %c0_i32 : i32, i32
  }
  func.func @transform_13(%arg0: i32) -> (i32, i32) {
    %c0_i32 = arith.constant 0 : i32
    %c0_i32_0 = arith.constant 0 : i32
    return %arg0, %c0_i32 : i32, i32
  }
  func.func @transform_14(%arg0: i32) -> (i32, i32) {
    %c0_i32 = arith.constant 0 : i32
    %c0_i32_0 = arith.constant 0 : i32
    return %arg0, %c0_i32 : i32, i32
  }
}

module attributes {stable_mosaic.version = 11 : i64} {
  func.func @_vae_kernel(%arg0: i32, %arg1: memref<2x1024xf32, #tpu.memory_space<vmem>>, %arg2: memref<2x128xf32, #tpu.memory_space<vmem>>, %arg3: memref<1024x128xbf16, #tpu.memory_space<vmem>>, %arg4: memref<1x128xf32, #tpu.memory_space<vmem>>, %arg5: memref<128x256xbf16, #tpu.memory_space<vmem>>, %arg6: memref<1x256xf32, #tpu.memory_space<vmem>>, %arg7: memref<128x128xbf16, #tpu.memory_space<vmem>>, %arg8: memref<1x128xf32, #tpu.memory_space<vmem>>, %arg9: memref<128x2048xbf16, #tpu.memory_space<vmem>>, %arg10: memref<1x2048xf32, #tpu.memory_space<vmem>>, %arg11: memref<2x128xf32, #tpu.memory_space<vmem>>, %arg12: memref<2x128xf32, #tpu.memory_space<vmem>>, %arg13: memref<2x128xf32, #tpu.memory_space<vmem>>, %arg14: memref<2x1024xbf16, #tpu.memory_space<vmem>>, %arg15: memref<2x1024xbf16, #tpu.memory_space<vmem>>) attributes {dimension_semantics = [#tpu.dimension_semantics<parallel>], iteration_bounds = array<i64: 1>, scalar_prefetch = 0 : i64, scratch_operands = 0 : i64, tpu.core_type = #tpu.core_type<tc>, window_params = [{transform_indices = @transform_0, window_bounds = array<i64: 2, 1024>}, {transform_indices = @transform_1, window_bounds = array<i64: 2, 128>}, {pipeline_mode = #tpu.pipeline_mode<synchronous>, transform_indices = @transform_2, window_bounds = array<i64: 1024, 128>}, {pipeline_mode = #tpu.pipeline_mode<synchronous>, transform_indices = @transform_3, window_bounds = array<i64: 1, 128>}, {pipeline_mode = #tpu.pipeline_mode<synchronous>, transform_indices = @transform_4, window_bounds = array<i64: 128, 256>}, {pipeline_mode = #tpu.pipeline_mode<synchronous>, transform_indices = @transform_5, window_bounds = array<i64: 1, 256>}, {pipeline_mode = #tpu.pipeline_mode<synchronous>, transform_indices = @transform_6, window_bounds = array<i64: 128, 128>}, {pipeline_mode = #tpu.pipeline_mode<synchronous>, transform_indices = @transform_7, window_bounds = array<i64: 1, 128>}, {pipeline_mode = #tpu.pipeline_mode<synchronous>, transform_indices = @transform_8, window_bounds = array<i64: 128, 2048>}, {pipeline_mode = #tpu.pipeline_mode<synchronous>, transform_indices = @transform_9, window_bounds = array<i64: 1, 2048>}, {transform_indices = @transform_10, window_bounds = array<i64: 2, 128>}, {transform_indices = @transform_11, window_bounds = array<i64: 2, 128>}, {transform_indices = @transform_12, window_bounds = array<i64: 2, 128>}, {transform_indices = @transform_13, window_bounds = array<i64: 2, 1024>}, {transform_indices = @transform_14, window_bounds = array<i64: 2, 1024>}]} {
    %c0 = arith.constant 0 : index
    %c0_0 = arith.constant 0 : index
    %0 = vector.load %arg1[%c0, %c0_0] : memref<2x1024xf32, #tpu.memory_space<vmem>>, vector<2x1024xf32>
    %1 = arith.truncf %0 : vector<2x1024xf32> to vector<2x1024xbf16>
    %c0_1 = arith.constant 0 : index
    %c0_2 = arith.constant 0 : index
    %2 = vector.load %arg3[%c0_1, %c0_2] : memref<1024x128xbf16, #tpu.memory_space<vmem>>, vector<1024x128xbf16>
    %cst = arith.constant dense<0.000000e+00> : vector<2x128xf32>
    %3 = tpu.matmul %1, %2, %cst {dimension_numbers = #tpu.dot_dimension_numbers<[1], [0], [0], [1], [0, 0, 1, 1], [], []>} : vector<2x1024xbf16>, vector<1024x128xbf16>, vector<2x128xf32> -> vector<2x128xf32>
    %c0_3 = arith.constant 0 : index
    %c0_4 = arith.constant 0 : index
    %4 = vector.load %arg4[%c0_3, %c0_4] : memref<1x128xf32, #tpu.memory_space<vmem>>, vector<1x128xf32>
    %5 = vector.broadcast %4 : vector<1x128xf32> to vector<2x128xf32>
    %6 = arith.addf %3, %5 : vector<2x128xf32>
    %cst_5 = arith.constant 0.000000e+00 : f32
    %7 = vector.broadcast %cst_5 : f32 to vector<2x128xf32>
    %8 = arith.maximumf %6, %7 : vector<2x128xf32>
    %9 = arith.truncf %8 : vector<2x128xf32> to vector<2x128xbf16>
    %c0_6 = arith.constant 0 : index
    %c0_7 = arith.constant 0 : index
    %10 = vector.load %arg5[%c0_6, %c0_7] : memref<128x256xbf16, #tpu.memory_space<vmem>>, vector<128x256xbf16>
    %cst_8 = arith.constant dense<0.000000e+00> : vector<2x256xf32>
    %11 = tpu.matmul %9, %10, %cst_8 {dimension_numbers = #tpu.dot_dimension_numbers<[1], [0], [0], [1], [0, 0, 1, 1], [], []>} : vector<2x128xbf16>, vector<128x256xbf16>, vector<2x256xf32> -> vector<2x256xf32>
    %c0_9 = arith.constant 0 : index
    %c0_10 = arith.constant 0 : index
    %12 = vector.load %arg6[%c0_9, %c0_10] : memref<1x256xf32, #tpu.memory_space<vmem>>, vector<1x256xf32>
    %13 = vector.broadcast %12 : vector<1x256xf32> to vector<2x256xf32>
    %14 = arith.addf %11, %13 : vector<2x256xf32>
    %15 = vector.extract_strided_slice %14 {offsets = [0, 0], sizes = [2, 128], strides = [1, 1]} : vector<2x256xf32> to vector<2x128xf32>
    %16 = vector.extract_strided_slice %14 {offsets = [0, 128], sizes = [2, 128], strides = [1, 1]} : vector<2x256xf32> to vector<2x128xf32>
    %cst_11 = arith.constant 5.000000e-01 : f32
    %17 = vector.broadcast %cst_11 : f32 to vector<2x128xf32>
    %18 = arith.mulf %17, %16 : vector<2x128xf32>
    %19 = math.exp %18 : vector<2x128xf32>
    %c0_12 = arith.constant 0 : index
    %c0_13 = arith.constant 0 : index
    %20 = vector.load %arg2[%c0_12, %c0_13] : memref<2x128xf32, #tpu.memory_space<vmem>>, vector<2x128xf32>
    %21 = arith.mulf %19, %20 : vector<2x128xf32>
    %22 = arith.addf %15, %21 : vector<2x128xf32>
    %c0_14 = arith.constant 0 : index
    %c0_15 = arith.constant 0 : index
    %23 = vector.load %arg11[%c0_14, %c0_15] : memref<2x128xf32, #tpu.memory_space<vmem>>, vector<2x128xf32>
    tpu.vector_store %arg11[%c0_14, %c0_15], %15 {strides = array<i32>} : memref<2x128xf32, #tpu.memory_space<vmem>>, vector<2x128xf32>,
    %c0_16 = arith.constant 0 : index
    %c0_17 = arith.constant 0 : index
    %24 = vector.load %arg12[%c0_16, %c0_17] : memref<2x128xf32, #tpu.memory_space<vmem>>, vector<2x128xf32>
    tpu.vector_store %arg12[%c0_16, %c0_17], %16 {strides = array<i32>} : memref<2x128xf32, #tpu.memory_space<vmem>>, vector<2x128xf32>,
    %c0_18 = arith.constant 0 : index
    %c0_19 = arith.constant 0 : index
    %25 = vector.load %arg13[%c0_18, %c0_19] : memref<2x128xf32, #tpu.memory_space<vmem>>, vector<2x128xf32>
    tpu.vector_store %arg13[%c0_18, %c0_19], %22 {strides = array<i32>} : memref<2x128xf32, #tpu.memory_space<vmem>>, vector<2x128xf32>,
    %26 = arith.truncf %22 : vector<2x128xf32> to vector<2x128xbf16>
    %c0_20 = arith.constant 0 : index
    %c0_21 = arith.constant 0 : index
    %27 = vector.load %arg7[%c0_20, %c0_21] : memref<128x128xbf16, #tpu.memory_space<vmem>>, vector<128x128xbf16>
    %cst_22 = arith.constant dense<0.000000e+00> : vector<2x128xf32>
    %28 = tpu.matmul %26, %27, %cst_22 {dimension_numbers = #tpu.dot_dimension_numbers<[1], [0], [0], [1], [0, 0, 1, 1], [], []>} : vector<2x128xbf16>, vector<128x128xbf16>, vector<2x128xf32> -> vector<2x128xf32>
    %c0_23 = arith.constant 0 : index
    %c0_24 = arith.constant 0 : index
    %29 = vector.load %arg8[%c0_23, %c0_24] : memref<1x128xf32, #tpu.memory_space<vmem>>, vector<1x128xf32>
    %30 = vector.broadcast %29 : vector<1x128xf32> to vector<2x128xf32>
    %31 = arith.addf %28, %30 : vector<2x128xf32>
    %cst_25 = arith.constant 0.000000e+00 : f32
    %32 = vector.broadcast %cst_25 : f32 to vector<2x128xf32>
    %33 = arith.maximumf %31, %32 : vector<2x128xf32>
    %34 = arith.truncf %33 : vector<2x128xf32> to vector<2x128xbf16>
    %c0_26 = arith.constant 0 : index
    %c0_27 = arith.constant 0 : index
    %35 = vector.load %arg9[%c0_26, %c0_27] : memref<128x2048xbf16, #tpu.memory_space<vmem>>, vector<128x2048xbf16>
    %cst_28 = arith.constant dense<0.000000e+00> : vector<2x2048xf32>
    %36 = tpu.matmul %34, %35, %cst_28 {dimension_numbers = #tpu.dot_dimension_numbers<[1], [0], [0], [1], [0, 0, 1, 1], [], []>} : vector<2x128xbf16>, vector<128x2048xbf16>, vector<2x2048xf32> -> vector<2x2048xf32>
    %c0_29 = arith.constant 0 : index
    %c0_30 = arith.constant 0 : index
    %37 = vector.load %arg10[%c0_29, %c0_30] : memref<1x2048xf32, #tpu.memory_space<vmem>>, vector<1x2048xf32>
    %38 = vector.broadcast %37 : vector<1x2048xf32> to vector<2x2048xf32>
    %39 = arith.addf %36, %38 : vector<2x2048xf32>
    %40 = vector.extract_strided_slice %39 {offsets = [0, 0], sizes = [2, 1024], strides = [1, 1]} : vector<2x2048xf32> to vector<2x1024xf32>
    %41 = arith.truncf %40 : vector<2x1024xf32> to vector<2x1024xbf16>
    %c0_31 = arith.constant 0 : index
    %c0_32 = arith.constant 0 : index
    %42 = vector.load %arg14[%c0_31, %c0_32] : memref<2x1024xbf16, #tpu.memory_space<vmem>>, vector<2x1024xbf16>
    tpu.vector_store %arg14[%c0_31, %c0_32], %41 {strides = array<i32>} : memref<2x1024xbf16, #tpu.memory_space<vmem>>, vector<2x1024xbf16>,
    %43 = vector.extract_strided_slice %39 {offsets = [0, 1024], sizes = [2, 1024], strides = [1, 1]} : vector<2x2048xf32> to vector<2x1024xf32>
    %44 = arith.truncf %43 : vector<2x1024xf32> to vector<2x1024xbf16>
    %c0_33 = arith.constant 0 : index
    %c0_34 = arith.constant 0 : index
    %45 = vector.load %arg15[%c0_33, %c0_34] : memref<2x1024xbf16, #tpu.memory_space<vmem>>, vector<2x1024xbf16>
    tpu.vector_store %arg15[%c0_33, %c0_34], %44 {strides = array<i32>} : memref<2x1024xbf16, #tpu.memory_space<vmem>>, vector<2x1024xbf16>,
    return
  }
  func.func @transform_0(%arg0: i32) -> (i32, i32) {
    %c0_i32 = arith.constant 0 : i32
    %c0_i32_0 = arith.constant 0 : i32
    return %arg0, %c0_i32 : i32, i32
  }
  func.func @transform_1(%arg0: i32) -> (i32, i32) {
    %c0_i32 = arith.constant 0 : i32
    %c0_i32_0 = arith.constant 0 : i32
    return %arg0, %c0_i32 : i32, i32
  }
  func.func @transform_2(%arg0: i32) -> (i32, i32) {
    %c0_i32 = arith.constant 0 : i32
    %c0_i32_0 = arith.constant 0 : i32
    %c0_i32_1 = arith.constant 0 : i32
    return %c0_i32, %c0_i32_0 : i32, i32
  }
  func.func @transform_3(%arg0: i32) -> (i32, i32) {
    %c0_i32 = arith.constant 0 : i32
    %c0_i32_0 = arith.constant 0 : i32
    %c0_i32_1 = arith.constant 0 : i32
    return %c0_i32, %c0_i32_0 : i32, i32
  }
  func.func @transform_4(%arg0: i32) -> (i32, i32) {
    %c0_i32 = arith.constant 0 : i32
    %c0_i32_0 = arith.constant 0 : i32
    %c0_i32_1 = arith.constant 0 : i32
    return %c0_i32, %c0_i32_0 : i32, i32
  }
  func.func @transform_5(%arg0: i32) -> (i32, i32) {
    %c0_i32 = arith.constant 0 : i32
    %c0_i32_0 = arith.constant 0 : i32
    %c0_i32_1 = arith.constant 0 : i32
    return %c0_i32, %c0_i32_0 : i32, i32
  }
  func.func @transform_6(%arg0: i32) -> (i32, i32) {
    %c0_i32 = arith.constant 0 : i32
    %c0_i32_0 = arith.constant 0 : i32
    %c0_i32_1 = arith.constant 0 : i32
    return %c0_i32, %c0_i32_0 : i32, i32
  }
  func.func @transform_7(%arg0: i32) -> (i32, i32) {
    %c0_i32 = arith.constant 0 : i32
    %c0_i32_0 = arith.constant 0 : i32
    %c0_i32_1 = arith.constant 0 : i32
    return %c0_i32, %c0_i32_0 : i32, i32
  }
  func.func @transform_8(%arg0: i32) -> (i32, i32) {
    %c0_i32 = arith.constant 0 : i32
    %c0_i32_0 = arith.constant 0 : i32
    %c0_i32_1 = arith.constant 0 : i32
    return %c0_i32, %c0_i32_0 : i32, i32
  }
  func.func @transform_9(%arg0: i32) -> (i32, i32) {
    %c0_i32 = arith.constant 0 : i32
    %c0_i32_0 = arith.constant 0 : i32
    %c0_i32_1 = arith.constant 0 : i32
    return %c0_i32, %c0_i32_0 : i32, i32
  }
  func.func @transform_10(%arg0: i32) -> (i32, i32) {
    %c0_i32 = arith.constant 0 : i32
    %c0_i32_0 = arith.constant 0 : i32
    return %arg0, %c0_i32 : i32, i32
  }
  func.func @transform_11(%arg0: i32) -> (i32, i32) {
    %c0_i32 = arith.constant 0 : i32
    %c0_i32_0 = arith.constant 0 : i32
    return %arg0, %c0_i32 : i32, i32
  }
  func.func @transform_12(%arg0: i32) -> (i32, i32) {
    %c0_i32 = arith.constant 0 : i32
    %c0_i32_0 = arith.constant 0 : i32
    return %arg0, %c0_i32 : i32, i32
  }
  func.func @transform_13(%arg0: i32) -> (i32, i32) {
    %c0_i32 = arith.constant 0 : i32
    %c0_i32_0 = arith.constant 0 : i32
    return %arg0, %c0_i32 : i32, i32
  }
  func.func @transform_14(%arg0: i32) -> (i32, i32) {
    %c0_i32 = arith.constant 0 : i32
    %c0_i32_0 = arith.constant 0 : i32
    return %arg0, %c0_i32 : i32, i32
  }
}

</mosaic_0001>

<llo_original>
// kernel: tpu_custom_call.1
$region0: #{tpu_custom_call.1}
  #allocation0 [shape = 'u32[]', space=smem, size = 0x4, offset = 0x4, fixed_abs, tag = 'smem constant byte address 0x4 - core index']
  #allocation1 [shape = 'u32[144,128]{1,0:T(1,128)}', space=vmem, size = 0x12000, scoped, tag = 'internal scratch']
  %s0 = inlined_call_operand.hbm [shape: f32[2,1024], index: 0, kind: input, shape index: {}]
  %s1 = inlined_call_operand.vmem [shape: f32[2,128], index: 1, kind: input, shape index: {}]
  %s2 = inlined_call_operand.hbm [shape: bf16[1024,128], index: 2, kind: input, shape index: {}]
  %s3 = inlined_call_operand.vmem [shape: f32[1,128], index: 3, kind: input, shape index: {}]
  %s4 = inlined_call_operand.hbm [shape: bf16[128,256], index: 4, kind: input, shape index: {}]
  %s5 = inlined_call_operand.vmem [shape: f32[1,256], index: 5, kind: input, shape index: {}]
  %s6 = inlined_call_operand.hbm [shape: bf16[128,128], index: 6, kind: input, shape index: {}]
  %s7 = inlined_call_operand.vmem [shape: f32[1,128], index: 7, kind: input, shape index: {}]
  %s8 = inlined_call_operand.hbm [shape: bf16[128,2048], index: 8, kind: input, shape index: {}]
  %s9 = inlined_call_operand.vmem [shape: f32[1,2048], index: 9, kind: input, shape index: {}]
  %s10 = inlined_call_operand.hbm [shape: f32[2,128], index: 10, kind: output, shape index: {0}]
  %s11 = inlined_call_operand.hbm [shape: f32[2,128], index: 11, kind: output, shape index: {1}]
  %s12 = inlined_call_operand.hbm [shape: f32[2,128], index: 12, kind: output, shape index: {2}]
  %s13 = inlined_call_operand.hbm [shape: bf16[2,1024], index: 13, kind: output, shape index: {3}]
  %s14 = inlined_call_operand.hbm [shape: bf16[2,1024], index: 14, kind: output, shape index: {4}]
  %15 = xla_tuple %s10, %s11, %s12, %s13, %s14
  %s16 = sld [smem:[#allocation0]]
  $region102: #{tpu_custom_call.1} parent=0
    _
  %s18 = ssub.s32 1, %s16
  %s19 = scalar_select 0, %s18, %s16
  $region1: #{tpu_custom_call.1} parent=0
    #allocation2 [shape = 'u8[8192]{0}', space=vmem, size = 0x2000, scoped, tag = 'input window, operand 0, single buffered']
    #allocation3 [shape = 's32[1]{0}', space=sflag, size = 0x4, scoped, tag = 'scoped memory for tpu_custom_call.1']
    #allocation4 [shape = 's32[1]{0}', space=sflag, size = 0x4, scoped, tag = 'scoped memory for tpu_custom_call.1']
    #allocation5 [shape = 'u8[262144]{0}', space=vmem, size = 0x40000, scoped, tag = 'input window, operand 2, single buffered']
    #allocation6 [shape = 's32[1]{0}', space=sflag, size = 0x4, scoped, tag = 'scoped memory for tpu_custom_call.1']
    #allocation7 [shape = 'u8[65536]{0}', space=vmem, size = 0x10000, scoped, tag = 'input window, operand 4, single buffered']
    #allocation8 [shape = 'u8[32768]{0}', space=vmem, size = 0x8000, scoped, tag = 'input window, operand 6, single buffered']
    #allocation9 [shape = 's32[1]{0}', space=sflag, size = 0x4, scoped, tag = 'scoped memory for tpu_custom_call.1']
    #allocation10 [shape = 'u8[524288]{0}', space=vmem, size = 0x80000, scoped, tag = 'input window, operand 8, single buffered']
    #allocation11 [shape = 'u8[1024]{0}', space=vmem, size = 0x400, scoped, tag = 'output window, operand 0, single buffered']
    #allocation12 [shape = 'u8[1024]{0}', space=vmem, size = 0x400, scoped, tag = 'output window, operand 1, single buffered']
    #allocation13 [shape = 's32[1]{0}', space=sflag, size = 0x4, scoped, tag = 'scoped memory for tpu_custom_call.1']
    #allocation14 [shape = 'u8[1024]{0}', space=vmem, size = 0x400, scoped, tag = 'output window, operand 2, single buffered']
    #allocation15 [shape = 'u8[4096]{0}', space=vmem, size = 0x1000, scoped, tag = 'output window, operand 3, single buffered']
    #allocation16 [shape = 's32[1]{0}', space=sflag, size = 0x4, scoped, tag = 'scoped memory for tpu_custom_call.1']
    #allocation17 [shape = 'u8[4096]{0}', space=vmem, size = 0x1000, scoped, tag = 'output window, operand 4, single buffered']
    %20 = vsyncpa [#allocation3], 0
    %21 = vsyncpa [#allocation6], 0
    %22 = vsyncpa [#allocation9], 0
    %23 = vsyncpa [#allocation4], 0
    %24 = vsyncpa [#allocation13], 0
    %25 = vsyncpa [#allocation16], 0
    // Predicated region
    $region2: #{tpu_custom_call.1} parent=1 // pred_check
      _
    $region3: #{tpu_custom_call.1} parent=1 // pred_check_branch
      %27 = sbr.rel (0) target = $region5
    $region4: #{tpu_custom_call.1} parent=1 // pred_region
      %s29 = ssub.s32 256, 256
      %30 = vsyncadd [#allocation3], %s29
      %s32 = sshll.u32 [#allocation2], 4
      %s33 = int_to_ptr.vmem [resolvable:$true] %s32
      %35 = dma.hbm_to_vmem [thread:$0]  %s0, 256, %s33, [#allocation3]
    $region5: #{tpu_custom_call.1} parent=1 // pred_fallthru
      _
    // Predicated region
    $region6: #{tpu_custom_call.1} parent=1 // pred_check
      _
    $region7: #{tpu_custom_call.1} parent=1 // pred_check_branch
      %37 = sbr.rel (0) target = $region9
    $region8: #{tpu_custom_call.1} parent=1 // pred_region
      _
    $region9: #{tpu_custom_call.1} parent=1 // pred_fallthru
      _
    // Predicated region
    $region10: #{tpu_custom_call.1} parent=1 // pred_check
      _
    $region11: #{tpu_custom_call.1} parent=1 // pred_check_branch
      %39 = sbr.rel (0) target = $region13
    $region12: #{tpu_custom_call.1} parent=1 // pred_region
      %s41 = ssub.s32 8192, 8192
      %42 = vsyncadd [#allocation6], %s41
      %s43 = sshll.u32 [#allocation5], 4
      %s44 = int_to_ptr.vmem [resolvable:$true] %s43
      %49 = dma.hbm_to_vmem [thread:$0]  %s2, 8192, %s44, [#allocation6], 64, 64, 4
    $region13: #{tpu_custom_call.1} parent=1 // pred_fallthru
      _
    // Predicated region
    $region14: #{tpu_custom_call.1} parent=1 // pred_check
      _
    $region15: #{tpu_custom_call.1} parent=1 // pred_check_branch
      %51 = sbr.rel (0) target = $region17
    $region16: #{tpu_custom_call.1} parent=1 // pred_region
      _
    $region17: #{tpu_custom_call.1} parent=1 // pred_fallthru
      _
    // Predicated region
    $region18: #{tpu_custom_call.1} parent=1 // pred_check
      _
    $region19: #{tpu_custom_call.1} parent=1 // pred_check_branch
      %53 = sbr.rel (0) target = $region21
    $region20: #{tpu_custom_call.1} parent=1 // pred_region
      %s55 = ssub.s32 2048, 2048
      %56 = vsyncadd [#allocation6], %s55
      %s57 = sshll.u32 [#allocation7], 4
      %s58 = int_to_ptr.vmem [resolvable:$true] %s57
      %63 = dma.hbm_to_vmem [thread:$0]  %s4, 2048, %s58, [#allocation6], 128, 128, 8
    $region21: #{tpu_custom_call.1} parent=1 // pred_fallthru
      _
    // Predicated region
    $region22: #{tpu_custom_call.1} parent=1 // pred_check
      _
    $region23: #{tpu_custom_call.1} parent=1 // pred_check_branch
      %65 = sbr.rel (0) target = $region25
    $region24: #{tpu_custom_call.1} parent=1 // pred_region
      _
    $region25: #{tpu_custom_call.1} parent=1 // pred_fallthru
      _
    // Predicated region
    $region26: #{tpu_custom_call.1} parent=1 // pred_check
      _
    $region27: #{tpu_custom_call.1} parent=1 // pred_check_branch
      %67 = sbr.rel (0) target = $region29
    $region28: #{tpu_custom_call.1} parent=1 // pred_region
      %s69 = ssub.s32 1024, 1024
      %70 = vsyncadd [#allocation9], %s69
      %s71 = sshll.u32 [#allocation8], 4
      %s72 = int_to_ptr.vmem [resolvable:$true] %s71
      %77 = dma.hbm_to_vmem [thread:$0]  %s6, 1024, %s72, [#allocation9], 64, 64, 4
    $region29: #{tpu_custom_call.1} parent=1 // pred_fallthru
      _
    // Predicated region
    $region30: #{tpu_custom_call.1} parent=1 // pred_check
      _
    $region31: #{tpu_custom_call.1} parent=1 // pred_check_branch
      %79 = sbr.rel (0) target = $region33
    $region32: #{tpu_custom_call.1} parent=1 // pred_region
      _
    $region33: #{tpu_custom_call.1} parent=1 // pred_fallthru
      _
    // Predicated region
    $region34: #{tpu_custom_call.1} parent=1 // pred_check
      _
    $region35: #{tpu_custom_call.1} parent=1 // pred_check_branch
      %81 = sbr.rel (0) target = $region37
    $region36: #{tpu_custom_call.1} parent=1 // pred_region
      %s83 = ssub.s32 16384, 16384
      %84 = vsyncadd [#allocation9], %s83
      %s85 = sshll.u32 [#allocation10], 4
      %s86 = int_to_ptr.vmem [resolvable:$true] %s85
      %91 = dma.hbm_to_vmem [thread:$0]  %s8, 16384, %s86, [#allocation9], 1024, 1024, 64
    $region37: #{tpu_custom_call.1} parent=1 // pred_fallthru
      _
    // Predicated region
    $region38: #{tpu_custom_call.1} parent=1 // pred_check
      _
    $region39: #{tpu_custom_call.1} parent=1 // pred_check_branch
      %93 = sbr.rel (0) target = $region41
    $region40: #{tpu_custom_call.1} parent=1 // pred_region
      _
    $region41: #{tpu_custom_call.1} parent=1 // pred_fallthru
      _
    // Predicated region
    $region42: #{tpu_custom_call.1} parent=1 // pred_check
      _
    $region43: #{tpu_custom_call.1} parent=1 // pred_check_branch
      %95 = sbr.rel (0) target = $region45
    $region44: #{tpu_custom_call.1} parent=1 // pred_region
      %96 = dma.done [#allocation3], 256
    $region45: #{tpu_custom_call.1} parent=1 // pred_fallthru
      _
    // Predicated region
    $region46: #{tpu_custom_call.1} parent=1 // pred_check
      _
    $region47: #{tpu_custom_call.1} parent=1 // pred_check_branch
      %98 = sbr.rel (0) target = $region49
    $region48: #{tpu_custom_call.1} parent=1 // pred_region
      %99 = dma.done [#allocation6], 8192
    $region49: #{tpu_custom_call.1} parent=1 // pred_fallthru
      _
    // Predicated region
    $region50: #{tpu_custom_call.1} parent=1 // pred_check
      _
    $region51: #{tpu_custom_call.1} parent=1 // pred_check_branch
      %101 = sbr.rel (0) target = $region53
    $region52: #{tpu_custom_call.1} parent=1 // pred_region
      %102 = dma.done [#allocation6], 2048
    $region53: #{tpu_custom_call.1} parent=1 // pred_fallthru
      _
    // Predicated region
    $region54: #{tpu_custom_call.1} parent=1 // pred_check
      _
    $region55: #{tpu_custom_call.1} parent=1 // pred_check_branch
      %104 = sbr.rel (0) target = $region57
    $region56: #{tpu_custom_call.1} parent=1 // pred_region
      %105 = dma.done [#allocation9], 1024
    $region57: #{tpu_custom_call.1} parent=1 // pred_fallthru
      _
    // Predicated region
    $region58: #{tpu_custom_call.1} parent=1 // pred_check
      _
    $region59: #{tpu_custom_call.1} parent=1 // pred_check_branch
      %107 = sbr.rel (0) target = $region61
    $region60: #{tpu_custom_call.1} parent=1 // pred_region
      %108 = dma.done [#allocation9], 16384
    $region61: #{tpu_custom_call.1} parent=1 // pred_fallthru
      _
    %v110 = vld [vmem:[#allocation2] sm:$0xff]
    %v111 = vld [vmem:[#allocation2 + $0x8] sm:$0xff]
    %v114 = vcombine.high %v110, %v110
    %v116 = vunpack.c.l.s4 1983009808
    %v117 = vunpack.c.0.s8 %v116
    %v118 = vlaneseq
    %v119 = vshrl.u32 %v118, 7
    %v120 = vsub.s32 %v117, %v119
    %v121 = vrot.slane %v110, %v120
    %v123 = vunpack.c.l.s4 1983009808
    %v124 = vunpack.c.0.s8 %v123
    %v125 = vlaneseq
    %v126 = vshrl.u32 %v125, 7
    %v127 = vsub.s32 %v124, %v126
    %v128 = vrot.slane %v114, %v127
    %v129 = vcombine.high %v121, %v121
    %v130 = vcombine.high %v128, %v128
    %v131 = vcombine.high %v111, %v111
    %v133 = vunpack.c.l.s4 1983009808
    %v134 = vunpack.c.0.s8 %v133
    %v135 = vlaneseq
    %v136 = vshrl.u32 %v135, 7
    %v137 = vsub.s32 %v134, %v136
    %v138 = vrot.slane %v111, %v137
    %v140 = vunpack.c.l.s4 1983009808
    %v141 = vunpack.c.0.s8 %v140
    %v142 = vlaneseq
    %v143 = vshrl.u32 %v142, 7
    %v144 = vsub.s32 %v141, %v143
    %v145 = vrot.slane %v131, %v144
    %v146 = vcombine.high %v138, %v138
    %v147 = vcombine.high %v145, %v145
    %v156 = vpack.c.bf16 %v121, %v121
    %v157 = vpack.c.bf16 %v129, %v129
    %v158 = vpack.c.bf16 %v128, %v128
    %v159 = vpack.c.bf16 %v130, %v130
    %v160 = vpack.c.bf16 %v138, %v138
    %v161 = vpack.c.bf16 %v146, %v146
    %v162 = vpack.c.bf16 %v145, %v145
    %v163 = vpack.c.bf16 %v147, %v147
    %v164 = vld [vmem:[#allocation5] sm:$0xf]
    %v165 = vld [vmem:[#allocation5 + $0x4] sm:$0xf]
    %v166 = vld [vmem:[#allocation5 + $0x8] sm:$0xf]
    %v167 = vld [vmem:[#allocation5 + $0xc] sm:$0xf]
    %v168 = vld [vmem:[#allocation5 + $0x10] sm:$0xf]
    %v169 = vld [vmem:[#allocation5 + $0x14] sm:$0xf]
    %v170 = vld [vmem:[#allocation5 + $0x18] sm:$0xf]
    %v171 = vld [vmem:[#allocation5 + $0x1c] sm:$0xf]
    %v172 = vld [vmem:[#allocation5 + $0x20] sm:$0xf]
    %v173 = vld [vmem:[#allocation5 + $0x24] sm:$0xf]
    %v174 = vld [vmem:[#allocation5 + $0x28] sm:$0xf]
    %v175 = vld [vmem:[#allocation5 + $0x2c] sm:$0xf]
    %v176 = vld [vmem:[#allocation5 + $0x30] sm:$0xf]
    %v177 = vld [vmem:[#allocation5 + $0x34] sm:$0xf]
    %v178 = vld [vmem:[#allocation5 + $0x38] sm:$0xf]
    %v179 = vld [vmem:[#allocation5 + $0x3c] sm:$0xf]
    %v180 = vld [vmem:[#allocation5 + $0x40] sm:$0xf]
    %v181 = vld [vmem:[#allocation5 + $0x44] sm:$0xf]
    %v182 = vld [vmem:[#allocation5 + $0x48] sm:$0xf]
    %v183 = vld [vmem:[#allocation5 + $0x4c] sm:$0xf]
    %v184 = vld [vmem:[#allocation5 + $0x50] sm:$0xf]
    %v185 = vld [vmem:[#allocation5 + $0x54] sm:$0xf]
    %v186 = vld [vmem:[#allocation5 + $0x58] sm:$0xf]
    %v187 = vld [vmem:[#allocation5 + $0x5c] sm:$0xf]
    %v188 = vld [vmem:[#allocation5 + $0x60] sm:$0xf]
    %v189 = vld [vmem:[#allocation5 + $0x64] sm:$0xf]
    %v190 = vld [vmem:[#allocation5 + $0x68] sm:$0xf]
    %v191 = vld [vmem:[#allocation5 + $0x6c] sm:$0xf]
    %v192 = vld [vmem:[#allocation5 + $0x70] sm:$0xf]
    %v193 = vld [vmem:[#allocation5 + $0x74] sm:$0xf]
    %v194 = vld [vmem:[#allocation5 + $0x78] sm:$0xf]
    %v195 = vld [vmem:[#allocation5 + $0x7c] sm:$0xf]
    %v196 = vld [vmem:[#allocation5 + $0x80] sm:$0xf]
    %v197 = vld [vmem:[#allocation5 + $0x84] sm:$0xf]
    %v198 = vld [vmem:[#allocation5 + $0x88] sm:$0xf]
    %v199 = vld [vmem:[#allocation5 + $0x8c] sm:$0xf]
    %v200 = vld [vmem:[#allocation5 + $0x90] sm:$0xf]
    %v201 = vld [vmem:[#allocation5 + $0x94] sm:$0xf]
    %v202 = vld [vmem:[#allocation5 + $0x98] sm:$0xf]
    %v203 = vld [vmem:[#allocation5 + $0x9c] sm:$0xf]
    %v204 = vld [vmem:[#allocation5 + $0xa0] sm:$0xf]
    %v205 = vld [vmem:[#allocation5 + $0xa4] sm:$0xf]
    %v206 = vld [vmem:[#allocation5 + $0xa8] sm:$0xf]
    %v207 = vld [vmem:[#allocation5 + $0xac] sm:$0xf]
    %v208 = vld [vmem:[#allocation5 + $0xb0] sm:$0xf]
    %v209 = vld [vmem:[#allocation5 + $0xb4] sm:$0xf]
    %v210 = vld [vmem:[#allocation5 + $0xb8] sm:$0xf]
    %v211 = vld [vmem:[#allocation5 + $0xbc] sm:$0xf]
    %v212 = vld [vmem:[#allocation5 + $0xc0] sm:$0xf]
    %v213 = vld [vmem:[#allocation5 + $0xc4] sm:$0xf]
    %v214 = vld [vmem:[#allocation5 + $0xc8] sm:$0xf]
    %v215 = vld [vmem:[#allocation5 + $0xcc] sm:$0xf]
    %v216 = vld [vmem:[#allocation5 + $0xd0] sm:$0xf]
    %v217 = vld [vmem:[#allocation5 + $0xd4] sm:$0xf]
    %v218 = vld [vmem:[#allocation5 + $0xd8] sm:$0xf]
    %v219 = vld [vmem:[#allocation5 + $0xdc] sm:$0xf]
    %v220 = vld [vmem:[#allocation5 + $0xe0] sm:$0xf]
    %v221 = vld [vmem:[#allocation5 + $0xe4] sm:$0xf]
    %v222 = vld [vmem:[#allocation5 + $0xe8] sm:$0xf]
    %v223 = vld [vmem:[#allocation5 + $0xec] sm:$0xf]
    %v224 = vld [vmem:[#allocation5 + $0xf0] sm:$0xf]
    %v225 = vld [vmem:[#allocation5 + $0xf4] sm:$0xf]
    %v226 = vld [vmem:[#allocation5 + $0xf8] sm:$0xf]
    %v227 = vld [vmem:[#allocation5 + $0xfc] sm:$0xf]
    %v228 = vld [vmem:[#allocation5 + $0x100] sm:$0xf]
    %v229 = vld [vmem:[#allocation5 + $0x104] sm:$0xf]
    %v230 = vld [vmem:[#allocation5 + $0x108] sm:$0xf]
    %v231 = vld [vmem:[#allocation5 + $0x10c] sm:$0xf]
    %v232 = vld [vmem:[#allocation5 + $0x110] sm:$0xf]
    %v233 = vld [vmem:[#allocation5 + $0x114] sm:$0xf]
    %v234 = vld [vmem:[#allocation5 + $0x118] sm:$0xf]
    %v235 = vld [vmem:[#allocation5 + $0x11c] sm:$0xf]
    %v236 = vld [vmem:[#allocation5 + $0x120] sm:$0xf]
    %v237 = vld [vmem:[#allocation5 + $0x124] sm:$0xf]
    %v238 = vld [vmem:[#allocation5 + $0x128] sm:$0xf]
    %v239 = vld [vmem:[#allocation5 + $0x12c] sm:$0xf]
    %v240 = vld [vmem:[#allocation5 + $0x130] sm:$0xf]
    %v241 = vld [vmem:[#allocation5 + $0x134] sm:$0xf]
    %v242 = vld [vmem:[#allocation5 + $0x138] sm:$0xf]
    %v243 = vld [vmem:[#allocation5 + $0x13c] sm:$0xf]
    %v244 = vld [vmem:[#allocation5 + $0x140] sm:$0xf]
    %v245 = vld [vmem:[#allocation5 + $0x144] sm:$0xf]
    %v246 = vld [vmem:[#allocation5 + $0x148] sm:$0xf]
    %v247 = vld [vmem:[#allocation5 + $0x14c] sm:$0xf]
    %v248 = vld [vmem:[#allocation5 + $0x150] sm:$0xf]
    %v249 = vld [vmem:[#allocation5 + $0x154] sm:$0xf]
    %v250 = vld [vmem:[#allocation5 + $0x158] sm:$0xf]
    %v251 = vld [vmem:[#allocation5 + $0x15c] sm:$0xf]
    %v252 = vld [vmem:[#allocation5 + $0x160] sm:$0xf]
    %v253 = vld [vmem:[#allocation5 + $0x164] sm:$0xf]
    %v254 = vld [vmem:[#allocation5 + $0x168] sm:$0xf]
    %v255 = vld [vmem:[#allocation5 + $0x16c] sm:$0xf]
    %v256 = vld [vmem:[#allocation5 + $0x170] sm:$0xf]
    %v257 = vld [vmem:[#allocation5 + $0x174] sm:$0xf]
    %v258 = vld [vmem:[#allocation5 + $0x178] sm:$0xf]
    %v259 = vld [vmem:[#allocation5 + $0x17c] sm:$0xf]
    %v260 = vld [vmem:[#allocation5 + $0x180] sm:$0xf]
    %v261 = vld [vmem:[#allocation5 + $0x184] sm:$0xf]
    %v262 = vld [vmem:[#allocation5 + $0x188] sm:$0xf]
    %v263 = vld [vmem:[#allocation5 + $0x18c] sm:$0xf]
    %v264 = vld [vmem:[#allocation5 + $0x190] sm:$0xf]
    %v265 = vld [vmem:[#allocation5 + $0x194] sm:$0xf]
    %v266 = vld [vmem:[#allocation5 + $0x198] sm:$0xf]
    %v267 = vld [vmem:[#allocation5 + $0x19c] sm:$0xf]
    %v268 = vld [vmem:[#allocation5 + $0x1a0] sm:$0xf]
    %v269 = vld [vmem:[#allocation5 + $0x1a4] sm:$0xf]
    %v270 = vld [vmem:[#allocation5 + $0x1a8] sm:$0xf]
    %v271 = vld [vmem:[#allocation5 + $0x1ac] sm:$0xf]
    %v272 = vld [vmem:[#allocation5 + $0x1b0] sm:$0xf]
    %v273 = vld [vmem:[#allocation5 + $0x1b4] sm:$0xf]
    %v274 = vld [vmem:[#allocation5 + $0x1b8] sm:$0xf]
    %v275 = vld [vmem:[#allocation5 + $0x1bc] sm:$0xf]
    %v276 = vld [vmem:[#allocation5 + $0x1c0] sm:$0xf]
    %v277 = vld [vmem:[#allocation5 + $0x1c4] sm:$0xf]
    %v278 = vld [vmem:[#allocation5 + $0x1c8] sm:$0xf]
    %v279 = vld [vmem:[#allocation5 + $0x1cc] sm:$0xf]
    %v280 = vld [vmem:[#allocation5 + $0x1d0] sm:$0xf]
    %v281 = vld [vmem:[#allocation5 + $0x1d4] sm:$0xf]
    %v282 = vld [vmem:[#allocation5 + $0x1d8] sm:$0xf]
    %v283 = vld [vmem:[#allocation5 + $0x1dc] sm:$0xf]
    %v284 = vld [vmem:[#allocation5 + $0x1e0] sm:$0xf]
    %v285 = vld [vmem:[#allocation5 + $0x1e4] sm:$0xf]
    %v286 = vld [vmem:[#allocation5 + $0x1e8] sm:$0xf]
    %v287 = vld [vmem:[#allocation5 + $0x1ec] sm:$0xf]
    %v288 = vld [vmem:[#allocation5 + $0x1f0] sm:$0xf]
    %v289 = vld [vmem:[#allocation5 + $0x1f4] sm:$0xf]
    %v290 = vld [vmem:[#allocation5 + $0x1f8] sm:$0xf]
    %v291 = vld [vmem:[#allocation5 + $0x1fc] sm:$0xf]
    %v292 = vld [vmem:[%s3] sm:$0x1]
    %v294 = vlaneseq
    %v295 = vshrl.u32 %v294, 7
    %v296 = vsub.s32 0, %v295
    %v297 = vrot.slane %v292, %v296
    %v427 = vunpack.c.l.b16 %v164
    %v428 = vunpack.c.l.b16 %v165
    %v429 = vunpack.c.l.b16 %v166
    %v430 = vunpack.c.l.b16 %v167
    %v431 = vunpack.c.l.b16 %v168
    %v432 = vunpack.c.l.b16 %v169
    %v433 = vunpack.c.l.b16 %v170
    %v434 = vunpack.c.l.b16 %v171
    %v435 = vunpack.c.l.b16 %v172
    %v436 = vunpack.c.l.b16 %v173
    %v437 = vunpack.c.l.b16 %v174
    %v438 = vunpack.c.l.b16 %v175
    %v439 = vunpack.c.l.b16 %v176
    %v440 = vunpack.c.l.b16 %v177
    %v441 = vunpack.c.l.b16 %v178
    %v442 = vunpack.c.l.b16 %v179
    %v443 = vunpack.c.l.b16 %v180
    %v444 = vunpack.c.l.b16 %v181
    %v445 = vunpack.c.l.b16 %v182
    %v446 = vunpack.c.l.b16 %v183
    %v447 = vunpack.c.l.b16 %v184
    %v448 = vunpack.c.l.b16 %v185
    %v449 = vunpack.c.l.b16 %v186
    %v450 = vunpack.c.l.b16 %v187
    %v451 = vunpack.c.l.b16 %v188
    %v452 = vunpack.c.l.b16 %v189
    %v453 = vunpack.c.l.b16 %v190
    %v454 = vunpack.c.l.b16 %v191
    %v455 = vunpack.c.l.b16 %v192
    %v456 = vunpack.c.l.b16 %v193
    %v457 = vunpack.c.l.b16 %v194
    %v458 = vunpack.c.l.b16 %v195
    %v459 = vunpack.c.l.b16 %v196
    %v460 = vunpack.c.l.b16 %v197
    %v461 = vunpack.c.l.b16 %v198
    %v462 = vunpack.c.l.b16 %v199
    %v463 = vunpack.c.l.b16 %v200
    %v464 = vunpack.c.l.b16 %v201
    %v465 = vunpack.c.l.b16 %v202
    %v466 = vunpack.c.l.b16 %v203
    %v467 = vunpack.c.l.b16 %v204
    %v468 = vunpack.c.l.b16 %v205
    %v469 = vunpack.c.l.b16 %v206
    %v470 = vunpack.c.l.b16 %v207
    %v471 = vunpack.c.l.b16 %v208
    %v472 = vunpack.c.l.b16 %v209
    %v473 = vunpack.c.l.b16 %v210
    %v474 = vunpack.c.l.b16 %v211
    %v475 = vunpack.c.l.b16 %v212
    %v476 = vunpack.c.l.b16 %v213
    %v477 = vunpack.c.l.b16 %v214
    %v478 = vunpack.c.l.b16 %v215
    %v479 = vunpack.c.l.b16 %v216
    %v480 = vunpack.c.l.b16 %v217
    %v481 = vunpack.c.l.b16 %v218
    %v482 = vunpack.c.l.b16 %v219
    %v483 = vunpack.c.l.b16 %v220
    %v484 = vunpack.c.l.b16 %v221
    %v485 = vunpack.c.l.b16 %v222
    %v486 = vunpack.c.l.b16 %v223
    %v487 = vunpack.c.l.b16 %v224
    %v488 = vunpack.c.l.b16 %v225
    %v489 = vunpack.c.l.b16 %v226
    %v490 = vunpack.c.l.b16 %v227
    %v491 = vunpack.c.l.b16 %v228
    %v492 = vunpack.c.l.b16 %v229
    %v493 = vunpack.c.l.b16 %v230
    %v494 = vunpack.c.l.b16 %v231
    %v495 = vunpack.c.l.b16 %v232
    %v496 = vunpack.c.l.b16 %v233
    %v497 = vunpack.c.l.b16 %v234
    %v498 = vunpack.c.l.b16 %v235
    %v499 = vunpack.c.l.b16 %v236
    %v500 = vunpack.c.l.b16 %v237
    %v501 = vunpack.c.l.b16 %v238
    %v502 = vunpack.c.l.b16 %v239
    %v503 = vunpack.c.l.b16 %v240
    %v504 = vunpack.c.l.b16 %v241
    %v505 = vunpack.c.l.b16 %v242
    %v506 = vunpack.c.l.b16 %v243
    %v507 = vunpack.c.l.b16 %v244
    %v508 = vunpack.c.l.b16 %v245
    %v509 = vunpack.c.l.b16 %v246
    %v510 = vunpack.c.l.b16 %v247
    %v511 = vunpack.c.l.b16 %v248
    %v512 = vunpack.c.l.b16 %v249
    %v513 = vunpack.c.l.b16 %v250
    %v514 = vunpack.c.l.b16 %v251
    %v515 = vunpack.c.l.b16 %v252
    %v516 = vunpack.c.l.b16 %v253
    %v517 = vunpack.c.l.b16 %v254
    %v518 = vunpack.c.l.b16 %v255
    %v519 = vunpack.c.l.b16 %v256
    %v520 = vunpack.c.l.b16 %v257
    %v521 = vunpack.c.l.b16 %v258
    %v522 = vunpack.c.l.b16 %v259
    %v523 = vunpack.c.l.b16 %v260
    %v524 = vunpack.c.l.b16 %v261
    %v525 = vunpack.c.l.b16 %v262
    %v526 = vunpack.c.l.b16 %v263
    %v527 = vunpack.c.l.b16 %v264
    %v528 = vunpack.c.l.b16 %v265
    %v529 = vunpack.c.l.b16 %v266
    %v530 = vunpack.c.l.b16 %v267
    %v531 = vunpack.c.l.b16 %v268
    %v532 = vunpack.c.l.b16 %v269
    %v533 = vunpack.c.l.b16 %v270
    %v534 = vunpack.c.l.b16 %v271
    %v535 = vunpack.c.l.b16 %v272
    %v536 = vunpack.c.l.b16 %v273
    %v537 = vunpack.c.l.b16 %v274
    %v538 = vunpack.c.l.b16 %v275
    %v539 = vunpack.c.l.b16 %v276
    %v540 = vunpack.c.l.b16 %v277
    %v541 = vunpack.c.l.b16 %v278
    %v542 = vunpack.c.l.b16 %v279
    %v543 = vunpack.c.l.b16 %v280
    %v544 = vunpack.c.l.b16 %v281
    %v545 = vunpack.c.l.b16 %v282
    %v546 = vunpack.c.l.b16 %v283
    %v547 = vunpack.c.l.b16 %v284
    %v548 = vunpack.c.l.b16 %v285
    %v549 = vunpack.c.l.b16 %v286
    %v550 = vunpack.c.l.b16 %v287
    %v551 = vunpack.c.l.b16 %v288
    %v552 = vunpack.c.l.b16 %v289
    %v553 = vunpack.c.l.b16 %v290
    %v554 = vunpack.c.l.b16 %v291
    %v555 = vpack.c.b16 %v428, %v427
    %v556 = vpack.c.b16 %v430, %v429
    %v557 = vpack.c.b16 %v432, %v431
    %v558 = vpack.c.b16 %v434, %v433
    %v559 = vpack.c.b16 %v436, %v435
    %v560 = vpack.c.b16 %v438, %v437
    %v561 = vpack.c.b16 %v440, %v439
    %v562 = vpack.c.b16 %v442, %v441
    %v563 = vpack.c.b16 %v444, %v443
    %v564 = vpack.c.b16 %v446, %v445
    %v565 = vpack.c.b16 %v448, %v447
    %v566 = vpack.c.b16 %v450, %v449
    %v567 = vpack.c.b16 %v452, %v451
    %v568 = vpack.c.b16 %v454, %v453
    %v569 = vpack.c.b16 %v456, %v455
    %v570 = vpack.c.b16 %v458, %v457
    %v571 = vpack.c.b16 %v460, %v459
    %v572 = vpack.c.b16 %v462, %v461
    %v573 = vpack.c.b16 %v464, %v463
    %v574 = vpack.c.b16 %v466, %v465
    %v575 = vpack.c.b16 %v468, %v467
    %v576 = vpack.c.b16 %v470, %v469
    %v577 = vpack.c.b16 %v472, %v471
    %v578 = vpack.c.b16 %v474, %v473
    %v579 = vpack.c.b16 %v476, %v475
    %v580 = vpack.c.b16 %v478, %v477
    %v581 = vpack.c.b16 %v480, %v479
    %v582 = vpack.c.b16 %v482, %v481
    %v583 = vpack.c.b16 %v484, %v483
    %v584 = vpack.c.b16 %v486, %v485
    %v585 = vpack.c.b16 %v488, %v487
    %v586 = vpack.c.b16 %v490, %v489
    %v587 = vpack.c.b16 %v492, %v491
    %v588 = vpack.c.b16 %v494, %v493
    %v589 = vpack.c.b16 %v496, %v495
    %v590 = vpack.c.b16 %v498, %v497
    %v591 = vpack.c.b16 %v500, %v499
    %v592 = vpack.c.b16 %v502, %v501
    %v593 = vpack.c.b16 %v504, %v503
    %v594 = vpack.c.b16 %v506, %v505
    %v595 = vpack.c.b16 %v508, %v507
    %v596 = vpack.c.b16 %v510, %v509
    %v597 = vpack.c.b16 %v512, %v511
    %v598 = vpack.c.b16 %v514, %v513
    %v599 = vpack.c.b16 %v516, %v515
    %v600 = vpack.c.b16 %v518, %v517
    %v601 = vpack.c.b16 %v520, %v519
    %v602 = vpack.c.b16 %v522, %v521
    %v603 = vpack.c.b16 %v524, %v523
    %v604 = vpack.c.b16 %v526, %v525
    %v605 = vpack.c.b16 %v528, %v527
    %v606 = vpack.c.b16 %v530, %v529
    %v607 = vpack.c.b16 %v532, %v531
    %v608 = vpack.c.b16 %v534, %v533
    %v609 = vpack.c.b16 %v536, %v535
    %v610 = vpack.c.b16 %v538, %v537
    %v611 = vpack.c.b16 %v540, %v539
    %v612 = vpack.c.b16 %v542, %v541
    %v613 = vpack.c.b16 %v544, %v543
    %v614 = vpack.c.b16 %v546, %v545
    %v615 = vpack.c.b16 %v548, %v547
    %v616 = vpack.c.b16 %v550, %v549
    %v617 = vpack.c.b16 %v552, %v551
    %v618 = vpack.c.b16 %v554, %v553
    %683 = vmatprep.subr.bf16.mxu0 0
    %684 = vmatpush1.bf16.msra.mxu0 %v555
    %685 = vmatprep.subr.bf16.mxu0 0
    %686 = vmatpush1.bf16.msra.mxu0 %v556
    %687 = vmatprep.subr.bf16.mxu0 0
    %688 = vmatpush1.bf16.msra.mxu0 %v557
    %689 = vmatprep.subr.bf16.mxu0 0
    %690 = vmatpush1.bf16.msra.mxu0 %v558
    %691 = vmatprep.subr.bf16.mxu0 0
    %692 = vmatpush1.bf16.msra.mxu0 %v559
    %693 = vmatprep.subr.bf16.mxu0 0
    %694 = vmatpush1.bf16.msra.mxu0 %v560
    %695 = vmatprep.subr.bf16.mxu0 0
    %696 = vmatpush1.bf16.msra.mxu0 %v561
    %697 = vmatprep.subr.bf16.mxu0 0
    %698 = vmatpush1.bf16.msra.mxu0 %v562
    %699 = vmatprep.subr.bf16.mxu0 0
    %700 = vmatpush1.bf16.msra.mxu0 %v563
    %701 = vmatprep.subr.bf16.mxu0 0
    %702 = vmatpush1.bf16.msra.mxu0 %v564
    %703 = vmatprep.subr.bf16.mxu0 0
    %704 = vmatpush1.bf16.msra.mxu0 %v565
    %705 = vmatprep.subr.bf16.mxu0 0
    %706 = vmatpush1.bf16.msra.mxu0 %v566
    %707 = vmatprep.subr.bf16.mxu0 0
    %708 = vmatpush1.bf16.msra.mxu0 %v567
    %709 = vmatprep.subr.bf16.mxu0 0
    %710 = vmatpush1.bf16.msra.mxu0 %v568
    %711 = vmatprep.subr.bf16.mxu0 0
    %712 = vmatpush1.bf16.msra.mxu0 %v569
    %713 = vmatprep.subr.bf16.mxu0 0
    %714 = vmatpush1.bf16.msra.mxu0 %v570
    %715 = vmatprep.mubr.bf16.mxu0 %v157
    %716 = vmatmul.mubr.bf16.gmra.mrb[0].mxu0 %v156
    %v717 = vpop.f32.mrb[0].mxu0
    %v718 = vadd.f32 %v297, %v717
    %v719 = vpop.f32.mrb[0].mxu0
    %v720 = vpop.f32.mrb[0].mxu0
    %v721 = vpop.f32.mrb[0].mxu0
    %722 = vdwg.mxu0
    %723 = vmatprep.subr.bf16.mxu0 0
    %724 = vmatpush1.bf16.msra.mxu0 %v571
    %725 = vmatprep.subr.bf16.mxu0 0
    %726 = vmatpush1.bf16.msra.mxu0 %v572
    %727 = vmatprep.subr.bf16.mxu0 0
    %728 = vmatpush1.bf16.msra.mxu0 %v573
    %729 = vmatprep.subr.bf16.mxu0 0
    %730 = vmatpush1.bf16.msra.mxu0 %v574
    %731 = vmatprep.subr.bf16.mxu0 0
    %732 = vmatpush1.bf16.msra.mxu0 %v575
    %733 = vmatprep.subr.bf16.mxu0 0
    %734 = vmatpush1.bf16.msra.mxu0 %v576
    %735 = vmatprep.subr.bf16.mxu0 0
    %736 = vmatpush1.bf16.msra.mxu0 %v577
    %737 = vmatprep.subr.bf16.mxu0 0
    %738 = vmatpush1.bf16.msra.mxu0 %v578
    %739 = vmatprep.subr.bf16.mxu0 0
    %740 = vmatpush1.bf16.msra.mxu0 %v579
    %741 = vmatprep.subr.bf16.mxu0 0
    %742 = vmatpush1.bf16.msra.mxu0 %v580
    %743 = vmatprep.subr.bf16.mxu0 0
    %744 = vmatpush1.bf16.msra.mxu0 %v581
    %745 = vmatprep.subr.bf16.mxu0 0
    %746 = vmatpush1.bf16.msra.mxu0 %v582
    %747 = vmatprep.subr.bf16.mxu0 0
    %748 = vmatpush1.bf16.msra.mxu0 %v583
    %749 = vmatprep.subr.bf16.mxu0 0
    %750 = vmatpush1.bf16.msra.mxu0 %v584
    %751 = vmatprep.subr.bf16.mxu0 0
    %752 = vmatpush1.bf16.msra.mxu0 %v585
    %753 = vmatprep.subr.bf16.mxu0 0
    %754 = vmatpush1.bf16.msra.mxu0 %v586
    %755 = vmatprep.mubr.bf16.mxu0 %v159
    %756 = vmatmul.mubr.bf16.gmra.mrb[0].mxu0 %v158
    %v757 = vpop.f32.mrb[0].mxu0
    %v758 = vadd.f32 %v718, %v757
    %v759 = vpop.f32.mrb[0].mxu0
    %v760 = vpop.f32.mrb[0].mxu0
    %v761 = vpop.f32.mrb[0].mxu0
    %762 = vdwg.mxu0
    %763 = vmatprep.subr.bf16.mxu0 0
    %764 = vmatpush1.bf16.msra.mxu0 %v587
    %765 = vmatprep.subr.bf16.mxu0 0
    %766 = vmatpush1.bf16.msra.mxu0 %v588
    %767 = vmatprep.subr.bf16.mxu0 0
    %768 = vmatpush1.bf16.msra.mxu0 %v589
    %769 = vmatprep.subr.bf16.mxu0 0
    %770 = vmatpush1.bf16.msra.mxu0 %v590
    %771 = vmatprep.subr.bf16.mxu0 0
    %772 = vmatpush1.bf16.msra.mxu0 %v591
    %773 = vmatprep.subr.bf16.mxu0 0
    %774 = vmatpush1.bf16.msra.mxu0 %v592
    %775 = vmatprep.subr.bf16.mxu0 0
    %776 = vmatpush1.bf16.msra.mxu0 %v593
    %777 = vmatprep.subr.bf16.mxu0 0
    %778 = vmatpush1.bf16.msra.mxu0 %v594
    %779 = vmatprep.subr.bf16.mxu0 0
    %780 = vmatpush1.bf16.msra.mxu0 %v595
    %781 = vmatprep.subr.bf16.mxu0 0
    %782 = vmatpush1.bf16.msra.mxu0 %v596
    %783 = vmatprep.subr.bf16.mxu0 0
    %784 = vmatpush1.bf16.msra.mxu0 %v597
    %785 = vmatprep.subr.bf16.mxu0 0
    %786 = vmatpush1.bf16.msra.mxu0 %v598
    %787 = vmatprep.subr.bf16.mxu0 0
    %788 = vmatpush1.bf16.msra.mxu0 %v599
    %789 = vmatprep.subr.bf16.mxu0 0
    %790 = vmatpush1.bf16.msra.mxu0 %v600
    %791 = vmatprep.subr.bf16.mxu0 0
    %792 = vmatpush1.bf16.msra.mxu0 %v601
    %793 = vmatprep.subr.bf16.mxu0 0
    %794 = vmatpush1.bf16.msra.mxu0 %v602
    %795 = vmatprep.mubr.bf16.mxu0 %v161
    %796 = vmatmul.mubr.bf16.gmra.mrb[0].mxu0 %v160
    %v797 = vpop.f32.mrb[0].mxu0
    %v798 = vadd.f32 %v758, %v797
    %v799 = vpop.f32.mrb[0].mxu0
    %v800 = vpop.f32.mrb[0].mxu0
    %v801 = vpop.f32.mrb[0].mxu0
    %802 = vdwg.mxu0
    %803 = vmatprep.subr.bf16.mxu0 0
    %804 = vmatpush1.bf16.msra.mxu0 %v603
    %805 = vmatprep.subr.bf16.mxu0 0
    %806 = vmatpush1.bf16.msra.mxu0 %v604
    %807 = vmatprep.subr.bf16.mxu0 0
    %808 = vmatpush1.bf16.msra.mxu0 %v605
    %809 = vmatprep.subr.bf16.mxu0 0
    %810 = vmatpush1.bf16.msra.mxu0 %v606
    %811 = vmatprep.subr.bf16.mxu0 0
    %812 = vmatpush1.bf16.msra.mxu0 %v607
    %813 = vmatprep.subr.bf16.mxu0 0
    %814 = vmatpush1.bf16.msra.mxu0 %v608
    %815 = vmatprep.subr.bf16.mxu0 0
    %816 = vmatpush1.bf16.msra.mxu0 %v609
    %817 = vmatprep.subr.bf16.mxu0 0
    %818 = vmatpush1.bf16.msra.mxu0 %v610
    %819 = vmatprep.subr.bf16.mxu0 0
    %820 = vmatpush1.bf16.msra.mxu0 %v611
    %821 = vmatprep.subr.bf16.mxu0 0
    %822 = vmatpush1.bf16.msra.mxu0 %v612
    %823 = vmatprep.subr.bf16.mxu0 0
    %824 = vmatpush1.bf16.msra.mxu0 %v613
    %825 = vmatprep.subr.bf16.mxu0 0
    %826 = vmatpush1.bf16.msra.mxu0 %v614
    %827 = vmatprep.subr.bf16.mxu0 0
    %828 = vmatpush1.bf16.msra.mxu0 %v615
    %829 = vmatprep.subr.bf16.mxu0 0
    %830 = vmatpush1.bf16.msra.mxu0 %v616
    %831 = vmatprep.subr.bf16.mxu0 0
    %832 = vmatpush1.bf16.msra.mxu0 %v617
    %833 = vmatprep.subr.bf16.mxu0 0
    %834 = vmatpush1.bf16.msra.mxu0 %v618
    %835 = vmatprep.mubr.bf16.mxu0 %v163
    %836 = vmatmul.mubr.bf16.gmra.mrb[0].mxu0 %v162
    %v837 = vpop.f32.mrb[0].mxu0
    %v838 = vadd.f32 %v798, %v837
    %v839 = vpop.f32.mrb[0].mxu0
    %v840 = vpop.f32.mrb[0].mxu0
    %v841 = vpop.f32.mrb[0].mxu0
    %842 = vdwg.mxu0
    %v843 = vmax.f32 %v838, 0.0
    %v844 = vpack.c.bf16 %v843, %v843
    %v845 = vld [vmem:[#allocation7] sm:$0xff]
    %v846 = vld [vmem:[#allocation7 + $0x8] sm:$0xff]
    %v847 = vld [vmem:[#allocation7 + $0x10] sm:$0xff]
    %v848 = vld [vmem:[#allocation7 + $0x18] sm:$0xff]
    %v849 = vld [vmem:[#allocation7 + $0x20] sm:$0xff]
    %v850 = vld [vmem:[#allocation7 + $0x28] sm:$0xff]
    %v851 = vld [vmem:[#allocation7 + $0x30] sm:$0xff]
    %v852 = vld [vmem:[#allocation7 + $0x38] sm:$0xff]
    %v853 = vld [vmem:[#allocation7 + $0x40] sm:$0xff]
    %v854 = vld [vmem:[#allocation7 + $0x48] sm:$0xff]
    %v855 = vld [vmem:[#allocation7 + $0x50] sm:$0xff]
    %v856 = vld [vmem:[#allocation7 + $0x58] sm:$0xff]
    %v857 = vld [vmem:[#allocation7 + $0x60] sm:$0xff]
    %v858 = vld [vmem:[#allocation7 + $0x68] sm:$0xff]
    %v859 = vld [vmem:[#allocation7 + $0x70] sm:$0xff]
    %v860 = vld [vmem:[#allocation7 + $0x78] sm:$0xff]
    %v861 = vld [vmem:[%s5] sm:$0x3]
    %v863 = vlaneseq
    %v864 = vshrl.u32 %v863, 7
    %v865 = vsub.s32 0, %v864
    %v866 = vrot.slane %v861, %v865
    %v867 = vlaneseq
    %v868 = vshrl.u32 %v867, 7
    %v869 = vsub.s32 1, %v868
    %v870 = vrot.slane %v861, %v869
    %v889 = vunpack.c.l.b16 %v845
    %v890 = vunpack.c.h.b16 %v845
    %v891 = vunpack.c.l.b16 %v846
    %v892 = vunpack.c.h.b16 %v846
    %v893 = vunpack.c.l.b16 %v847
    %v894 = vunpack.c.h.b16 %v847
    %v895 = vunpack.c.l.b16 %v848
    %v896 = vunpack.c.h.b16 %v848
    %v897 = vunpack.c.l.b16 %v849
    %v898 = vunpack.c.h.b16 %v849
    %v899 = vunpack.c.l.b16 %v850
    %v900 = vunpack.c.h.b16 %v850
    %v901 = vunpack.c.l.b16 %v851
    %v902 = vunpack.c.h.b16 %v851
    %v903 = vunpack.c.l.b16 %v852
    %v904 = vunpack.c.h.b16 %v852
    %v905 = vunpack.c.l.b16 %v853
    %v906 = vunpack.c.h.b16 %v853
    %v907 = vunpack.c.l.b16 %v854
    %v908 = vunpack.c.h.b16 %v854
    %v909 = vunpack.c.l.b16 %v855
    %v910 = vunpack.c.h.b16 %v855
    %v911 = vunpack.c.l.b16 %v856
    %v912 = vunpack.c.h.b16 %v856
    %v913 = vunpack.c.l.b16 %v857
    %v914 = vunpack.c.h.b16 %v857
    %v915 = vunpack.c.l.b16 %v858
    %v916 = vunpack.c.h.b16 %v858
    %v917 = vunpack.c.l.b16 %v859
    %v918 = vunpack.c.h.b16 %v859
    %v919 = vunpack.c.l.b16 %v860
    %v920 = vunpack.c.h.b16 %v860
    %v921 = vpack.c.b16 %v891, %v889
    %v922 = vpack.c.b16 %v892, %v890
    %v923 = vpack.c.b16 %v895, %v893
    %v924 = vpack.c.b16 %v896, %v894
    %v925 = vpack.c.b16 %v899, %v897
    %v926 = vpack.c.b16 %v900, %v898
    %v927 = vpack.c.b16 %v903, %v901
    %v928 = vpack.c.b16 %v904, %v902
    %v929 = vpack.c.b16 %v907, %v905
    %v930 = vpack.c.b16 %v908, %v906
    %v931 = vpack.c.b16 %v911, %v909
    %v932 = vpack.c.b16 %v912, %v910
    %v933 = vpack.c.b16 %v915, %v913
    %v934 = vpack.c.b16 %v916, %v914
    %v935 = vpack.c.b16 %v919, %v917
    %v936 = vpack.c.b16 %v920, %v918
    %953 = vmatprep.subr.bf16.mxu0 %v922
    %954 = vmatpush1.bf16.msra.mxu0 %v921
    %955 = vmatprep.subr.bf16.mxu0 %v924
    %956 = vmatpush1.bf16.msra.mxu0 %v923
    %957 = vmatprep.subr.bf16.mxu0 %v926
    %958 = vmatpush1.bf16.msra.mxu0 %v925
    %959 = vmatprep.subr.bf16.mxu0 %v928
    %960 = vmatpush1.bf16.msra.mxu0 %v927
    %961 = vmatprep.subr.bf16.mxu0 %v930
    %962 = vmatpush1.bf16.msra.mxu0 %v929
    %963 = vmatprep.subr.bf16.mxu0 %v932
    %964 = vmatpush1.bf16.msra.mxu0 %v931
    %965 = vmatprep.subr.bf16.mxu0 %v934
    %966 = vmatpush1.bf16.msra.mxu0 %v933
    %967 = vmatprep.subr.bf16.mxu0 %v936
    %968 = vmatpush1.bf16.msra.mxu0 %v935
    %969 = vmatprep.subr.bf16.mxu0 0
    %970 = vmatpush1.bf16.msra.mxu0 0
    %971 = vmatprep.subr.bf16.mxu0 0
    %972 = vmatpush1.bf16.msra.mxu0 0
    %973 = vmatprep.subr.bf16.mxu0 0
    %974 = vmatpush1.bf16.msra.mxu0 0
    %975 = vmatprep.subr.bf16.mxu0 0
    %976 = vmatpush1.bf16.msra.mxu0 0
    %977 = vmatprep.subr.bf16.mxu0 0
    %978 = vmatpush1.bf16.msra.mxu0 0
    %979 = vmatprep.subr.bf16.mxu0 0
    %980 = vmatpush1.bf16.msra.mxu0 0
    %981 = vmatprep.subr.bf16.mxu0 0
    %982 = vmatpush1.bf16.msra.mxu0 0
    %983 = vmatprep.subr.bf16.mxu0 0
    %984 = vmatpush1.bf16.msra.mxu0 0
    %985 = vmatprep.mubr.bf16.mxu0 0
    %986 = vmatmul.mubr.bf16.gmra.mrb[0].mxu0 %v844
    %v987 = vpop.f32.mrb[0].mxu0
    %v988 = vadd.f32 %v866, %v987
    %v989 = vpop.f32.mrb[0].mxu0
    %v990 = vadd.f32 %v870, %v989
    %v991 = vpop.f32.mrb[0].mxu0
    %v992 = vpop.f32.mrb[0].mxu0
    %993 = vdwg.mxu0
    %v994 = vmul.f32 %v990, 0.5
    %v995 = vmul.f32 %v994, 1.442695
    %v996 = vpow.pop %v995
    %v997 = vld [vmem:[%s1] sm:$0x3]
    %v998 = vmul.f32 %v996, %v997
    %v999 = vadd.f32 %v988, %v998
    %1000 = vst [vmem:[#allocation11] sm:$0x3] %v988
    %1001 = vst [vmem:[#allocation12] sm:$0x3] %v990
    %1002 = vst [vmem:[#allocation14] sm:$0x3] %v999
    %v1003 = vpack.c.bf16 %v999, %v999
    %v1004 = vld [vmem:[#allocation8] sm:$0xf]
    %v1005 = vld [vmem:[#allocation8 + $0x4] sm:$0xf]
    %v1006 = vld [vmem:[#allocation8 + $0x8] sm:$0xf]
    %v1007 = vld [vmem:[#allocation8 + $0xc] sm:$0xf]
    %v1008 = vld [vmem:[#allocation8 + $0x10] sm:$0xf]
    %v1009 = vld [vmem:[#allocation8 + $0x14] sm:$0xf]
    %v1010 = vld [vmem:[#allocation8 + $0x18] sm:$0xf]
    %v1011 = vld [vmem:[#allocation8 + $0x1c] sm:$0xf]
    %v1012 = vld [vmem:[#allocation8 + $0x20] sm:$0xf]
    %v1013 = vld [vmem:[#allocation8 + $0x24] sm:$0xf]
    %v1014 = vld [vmem:[#allocation8 + $0x28] sm:$0xf]
    %v1015 = vld [vmem:[#allocation8 + $0x2c] sm:$0xf]
    %v1016 = vld [vmem:[#allocation8 + $0x30] sm:$0xf]
    %v1017 = vld [vmem:[#allocation8 + $0x34] sm:$0xf]
    %v1018 = vld [vmem:[#allocation8 + $0x38] sm:$0xf]
    %v1019 = vld [vmem:[#allocation8 + $0x3c] sm:$0xf]
    %v1020 = vld [vmem:[%s7] sm:$0x1]
    %v1022 = vlaneseq
    %v1023 = vshrl.u32 %v1022, 7
    %v1024 = vsub.s32 0, %v1023
    %v1025 = vrot.slane %v1020, %v1024
    %v1043 = vunpack.c.l.b16 %v1004
    %v1044 = vunpack.c.l.b16 %v1005
    %v1045 = vunpack.c.l.b16 %v1006
    %v1046 = vunpack.c.l.b16 %v1007
    %v1047 = vunpack.c.l.b16 %v1008
    %v1048 = vunpack.c.l.b16 %v1009
    %v1049 = vunpack.c.l.b16 %v1010
    %v1050 = vunpack.c.l.b16 %v1011
    %v1051 = vunpack.c.l.b16 %v1012
    %v1052 = vunpack.c.l.b16 %v1013
    %v1053 = vunpack.c.l.b16 %v1014
    %v1054 = vunpack.c.l.b16 %v1015
    %v1055 = vunpack.c.l.b16 %v1016
    %v1056 = vunpack.c.l.b16 %v1017
    %v1057 = vunpack.c.l.b16 %v1018
    %v1058 = vunpack.c.l.b16 %v1019
    %v1059 = vpack.c.b16 %v1044, %v1043
    %v1060 = vpack.c.b16 %v1046, %v1045
    %v1061 = vpack.c.b16 %v1048, %v1047
    %v1062 = vpack.c.b16 %v1050, %v1049
    %v1063 = vpack.c.b16 %v1052, %v1051
    %v1064 = vpack.c.b16 %v1054, %v1053
    %v1065 = vpack.c.b16 %v1056, %v1055
    %v1066 = vpack.c.b16 %v1058, %v1057
    %1075 = vmatprep.subr.bf16.mxu0 0
    %1076 = vmatpush1.bf16.msra.mxu0 %v1059
    %1077 = vmatprep.subr.bf16.mxu0 0
    %1078 = vmatpush1.bf16.msra.mxu0 %v1060
    %1079 = vmatprep.subr.bf16.mxu0 0
    %1080 = vmatpush1.bf16.msra.mxu0 %v1061
    %1081 = vmatprep.subr.bf16.mxu0 0
    %1082 = vmatpush1.bf16.msra.mxu0 %v1062
    %1083 = vmatprep.subr.bf16.mxu0 0
    %1084 = vmatpush1.bf16.msra.mxu0 %v1063
    %1085 = vmatprep.subr.bf16.mxu0 0
    %1086 = vmatpush1.bf16.msra.mxu0 %v1064
    %1087 = vmatprep.subr.bf16.mxu0 0
    %1088 = vmatpush1.bf16.msra.mxu0 %v1065
    %1089 = vmatprep.subr.bf16.mxu0 0
    %1090 = vmatpush1.bf16.msra.mxu0 %v1066
    %1091 = vmatprep.subr.bf16.mxu0 0
    %1092 = vmatpush1.bf16.msra.mxu0 0
    %1093 = vmatprep.subr.bf16.mxu0 0
    %1094 = vmatpush1.bf16.msra.mxu0 0
    %1095 = vmatprep.subr.bf16.mxu0 0
    %1096 = vmatpush1.bf16.msra.mxu0 0
    %1097 = vmatprep.subr.bf16.mxu0 0
    %1098 = vmatpush1.bf16.msra.mxu0 0
    %1099 = vmatprep.subr.bf16.mxu0 0
    %1100 = vmatpush1.bf16.msra.mxu0 0
    %1101 = vmatprep.subr.bf16.mxu0 0
    %1102 = vmatpush1.bf16.msra.mxu0 0
    %1103 = vmatprep.subr.bf16.mxu0 0
    %1104 = vmatpush1.bf16.msra.mxu0 0
    %1105 = vmatprep.subr.bf16.mxu0 0
    %1106 = vmatpush1.bf16.msra.mxu0 0
    %1107 = vmatprep.mubr.bf16.mxu0 0
    %1108 = vmatmul.mubr.bf16.gmra.mrb[0].mxu0 %v1003
    %v1109 = vpop.f32.mrb[0].mxu0
    %v1110 = vadd.f32 %v1025, %v1109
    %v1111 = vpop.f32.mrb[0].mxu0
    %v1112 = vpop.f32.mrb[0].mxu0
    %v1113 = vpop.f32.mrb[0].mxu0
    %1114 = vdwg.mxu0
    %v1115 = vmax.f32 %v1110, 0.0
    %v1116 = vpack.c.bf16 %v1115, %v1115
    %v1117 = vld [vmem:[#allocation10] sm:$0xff]
    %v1118 = vld [vmem:[#allocation10 + $0x8] sm:$0xff]
    %v1119 = vld [vmem:[#allocation10 + $0x10] sm:$0xff]
    %v1120 = vld [vmem:[#allocation10 + $0x18] sm:$0xff]
    %v1121 = vld [vmem:[#allocation10 + $0x20] sm:$0xff]
    %v1122 = vld [vmem:[#allocation10 + $0x28] sm:$0xff]
    %v1123 = vld [vmem:[#allocation10 + $0x30] sm:$0xff]
    %v1124 = vld [vmem:[#allocation10 + $0x38] sm:$0xff]
    %v1125 = vld [vmem:[#allocation10 + $0x40] sm:$0xff]
    %v1126 = vld [vmem:[#allocation10 + $0x48] sm:$0xff]
    %v1127 = vld [vmem:[#allocation10 + $0x50] sm:$0xff]
    %v1128 = vld [vmem:[#allocation10 + $0x58] sm:$0xff]
    %v1129 = vld [vmem:[#allocation10 + $0x60] sm:$0xff]
    %v1130 = vld [vmem:[#allocation10 + $0x68] sm:$0xff]
    %v1131 = vld [vmem:[#allocation10 + $0x70] sm:$0xff]
    %v1132 = vld [vmem:[#allocation10 + $0x78] sm:$0xff]
    %v1133 = vld [vmem:[#allocation10 + $0x80] sm:$0xff]
    %v1134 = vld [vmem:[#allocation10 + $0x88] sm:$0xff]
    %v1135 = vld [vmem:[#allocation10 + $0x90] sm:$0xff]
    %v1136 = vld [vmem:[#allocation10 + $0x98] sm:$0xff]
    %v1137 = vld [vmem:[#allocation10 + $0xa0] sm:$0xff]
    %v1138 = vld [vmem:[#allocation10 + $0xa8] sm:$0xff]
    %v1139 = vld [vmem:[#allocation10 + $0xb0] sm:$0xff]
    %v1140 = vld [vmem:[#allocation10 + $0xb8] sm:$0xff]
    %v1141 = vld [vmem:[#allocation10 + $0xc0] sm:$0xff]
    %v1142 = vld [vmem:[#allocation10 + $0xc8] sm:$0xff]
    %v1143 = vld [vmem:[#allocation10 + $0xd0] sm:$0xff]
    %v1144 = vld [vmem:[#allocation10 + $0xd8] sm:$0xff]
    %v1145 = vld [vmem:[#allocation10 + $0xe0] sm:$0xff]
    %v1146 = vld [vmem:[#allocation10 + $0xe8] sm:$0xff]
    %v1147 = vld [vmem:[#allocation10 + $0xf0] sm:$0xff]
    %v1148 = vld [vmem:[#allocation10 + $0xf8] sm:$0xff]
    %v1149 = vld [vmem:[#allocation10 + $0x100] sm:$0xff]
    %v1150 = vld [vmem:[#allocation10 + $0x108] sm:$0xff]
    %v1151 = vld [vmem:[#allocation10 + $0x110] sm:$0xff]
    %v1152 = vld [vmem:[#allocation10 + $0x118] sm:$0xff]
    %v1153 = vld [vmem:[#allocation10 + $0x120] sm:$0xff]
    %v1154 = vld [vmem:[#allocation10 + $0x128] sm:$0xff]
    %v1155 = vld [vmem:[#allocation10 + $0x130] sm:$0xff]
    %v1156 = vld [vmem:[#allocation10 + $0x138] sm:$0xff]
    %v1157 = vld [vmem:[#allocation10 + $0x140] sm:$0xff]
    %v1158 = vld [vmem:[#allocation10 + $0x148] sm:$0xff]
    %v1159 = vld [vmem:[#allocation10 + $0x150] sm:$0xff]
    %v1160 = vld [vmem:[#allocation10 + $0x158] sm:$0xff]
    %v1161 = vld [vmem:[#allocation10 + $0x160] sm:$0xff]
    %v1162 = vld [vmem:[#allocation10 + $0x168] sm:$0xff]
    %v1163 = vld [vmem:[#allocation10 + $0x170] sm:$0xff]
    %v1164 = vld [vmem:[#allocation10 + $0x178] sm:$0xff]
    %v1165 = vld [vmem:[#allocation10 + $0x180] sm:$0xff]
    %v1166 = vld [vmem:[#allocation10 + $0x188] sm:$0xff]
    %v1167 = vld [vmem:[#allocation10 + $0x190] sm:$0xff]
    %v1168 = vld [vmem:[#allocation10 + $0x198] sm:$0xff]
    %v1169 = vld [vmem:[#allocation10 + $0x1a0] sm:$0xff]
    %v1170 = vld [vmem:[#allocation10 + $0x1a8] sm:$0xff]
    %v1171 = vld [vmem:[#allocation10 + $0x1b0] sm:$0xff]
    %v1172 = vld [vmem:[#allocation10 + $0x1b8] sm:$0xff]
    %v1173 = vld [vmem:[#allocation10 + $0x1c0] sm:$0xff]
    %v1174 = vld [vmem:[#allocation10 + $0x1c8] sm:$0xff]
    %v1175 = vld [vmem:[#allocation10 + $0x1d0] sm:$0xff]
    %v1176 = vld [vmem:[#allocation10 + $0x1d8] sm:$0xff]
    %v1177 = vld [vmem:[#allocation10 + $0x1e0] sm:$0xff]
    %v1178 = vld [vmem:[#allocation10 + $0x1e8] sm:$0xff]
    %v1179 = vld [vmem:[#allocation10 + $0x1f0] sm:$0xff]
    %v1180 = vld [vmem:[#allocation10 + $0x1f8] sm:$0xff]
    %v1181 = vld [vmem:[#allocation10 + $0x200] sm:$0xff]
    %v1182 = vld [vmem:[#allocation10 + $0x208] sm:$0xff]
    %v1183 = vld [vmem:[#allocation10 + $0x210] sm:$0xff]
    %v1184 = vld [vmem:[#allocation10 + $0x218] sm:$0xff]
    %v1185 = vld [vmem:[#allocation10 + $0x220] sm:$0xff]
    %v1186 = vld [vmem:[#allocation10 + $0x228] sm:$0xff]
    %v1187 = vld [vmem:[#allocation10 + $0x230] sm:$0xff]
    %v1188 = vld [vmem:[#allocation10 + $0x238] sm:$0xff]
    %v1189 = vld [vmem:[#allocation10 + $0x240] sm:$0xff]
    %v1190 = vld [vmem:[#allocation10 + $0x248] sm:$0xff]
    %v1191 = vld [vmem:[#allocation10 + $0x250] sm:$0xff]
    %v1192 = vld [vmem:[#allocation10 + $0x258] sm:$0xff]
    %v1193 = vld [vmem:[#allocation10 + $0x260] sm:$0xff]
    %v1194 = vld [vmem:[#allocation10 + $0x268] sm:$0xff]
    %v1195 = vld [vmem:[#allocation10 + $0x270] sm:$0xff]
    %v1196 = vld [vmem:[#allocation10 + $0x278] sm:$0xff]
    %v1197 = vld [vmem:[#allocation10 + $0x280] sm:$0xff]
    %v1198 = vld [vmem:[#allocation10 + $0x288] sm:$0xff]
    %v1199 = vld [vmem:[#allocation10 + $0x290] sm:$0xff]
    %v1200 = vld [vmem:[#allocation10 + $0x298] sm:$0xff]
    %v1201 = vld [vmem:[#allocation10 + $0x2a0] sm:$0xff]
    %v1202 = vld [vmem:[#allocation10 + $0x2a8] sm:$0xff]
    %v1203 = vld [vmem:[#allocation10 + $0x2b0] sm:$0xff]
    %v1204 = vld [vmem:[#allocation10 + $0x2b8] sm:$0xff]
    %v1205 = vld [vmem:[#allocation10 + $0x2c0] sm:$0xff]
    %v1206 = vld [vmem:[#allocation10 + $0x2c8] sm:$0xff]
    %v1207 = vld [vmem:[#allocation10 + $0x2d0] sm:$0xff]
    %v1208 = vld [vmem:[#allocation10 + $0x2d8] sm:$0xff]
    %v1209 = vld [vmem:[#allocation10 + $0x2e0] sm:$0xff]
    %v1210 = vld [vmem:[#allocation10 + $0x2e8] sm:$0xff]
    %v1211 = vld [vmem:[#allocation10 + $0x2f0] sm:$0xff]
    %v1212 = vld [vmem:[#allocation10 + $0x2f8] sm:$0xff]
    %v1213 = vld [vmem:[#allocation10 + $0x300] sm:$0xff]
    %v1214 = vld [vmem:[#allocation10 + $0x308] sm:$0xff]
    %v1215 = vld [vmem:[#allocation10 + $0x310] sm:$0xff]
    %v1216 = vld [vmem:[#allocation10 + $0x318] sm:$0xff]
    %v1217 = vld [vmem:[#allocation10 + $0x320] sm:$0xff]
    %v1218 = vld [vmem:[#allocation10 + $0x328] sm:$0xff]
    %v1219 = vld [vmem:[#allocation10 + $0x330] sm:$0xff]
    %v1220 = vld [vmem:[#allocation10 + $0x338] sm:$0xff]
    %v1221 = vld [vmem:[#allocation10 + $0x340] sm:$0xff]
    %v1222 = vld [vmem:[#allocation10 + $0x348] sm:$0xff]
    %v1223 = vld [vmem:[#allocation10 + $0x350] sm:$0xff]
    %v1224 = vld [vmem:[#allocation10 + $0x358] sm:$0xff]
    %v1225 = vld [vmem:[#allocation10 + $0x360] sm:$0xff]
    %v1226 = vld [vmem:[#allocation10 + $0x368] sm:$0xff]
    %v1227 = vld [vmem:[#allocation10 + $0x370] sm:$0xff]
    %v1228 = vld [vmem:[#allocation10 + $0x378] sm:$0xff]
    %v1229 = vld [vmem:[#allocation10 + $0x380] sm:$0xff]
    %v1230 = vld [vmem:[#allocation10 + $0x388] sm:$0xff]
    %v1231 = vld [vmem:[#allocation10 + $0x390] sm:$0xff]
    %v1232 = vld [vmem:[#allocation10 + $0x398] sm:$0xff]
    %v1233 = vld [vmem:[#allocation10 + $0x3a0] sm:$0xff]
    %v1234 = vld [vmem:[#allocation10 + $0x3a8] sm:$0xff]
    %v1235 = vld [vmem:[#allocation10 + $0x3b0] sm:$0xff]
    %v1236 = vld [vmem:[#allocation10 + $0x3b8] sm:$0xff]
    %v1237 = vld [vmem:[#allocation10 + $0x3c0] sm:$0xff]
    %v1238 = vld [vmem:[#allocation10 + $0x3c8] sm:$0xff]
    %v1239 = vld [vmem:[#allocation10 + $0x3d0] sm:$0xff]
    %v1240 = vld [vmem:[#allocation10 + $0x3d8] sm:$0xff]
    %v1241 = vld [vmem:[#allocation10 + $0x3e0] sm:$0xff]
    %v1242 = vld [vmem:[#allocation10 + $0x3e8] sm:$0xff]
    %v1243 = vld [vmem:[#allocation10 + $0x3f0] sm:$0xff]
    %v1244 = vld [vmem:[#allocation10 + $0x3f8] sm:$0xff]
    %v1245 = vld [vmem:[%s9] sm:$0xff]
    %v1246 = vld [vmem:[%s9 + $0x8] sm:$0xff]
    %v1249 = vlaneseq
    %v1250 = vshrl.u32 %v1249, 7
    %v1251 = vsub.s32 0, %v1250
    %v1252 = vrot.slane %v1245, %v1251
    %v1253 = vlaneseq
    %v1254 = vshrl.u32 %v1253, 7
    %v1255 = vsub.s32 1, %v1254
    %v1256 = vrot.slane %v1245, %v1255
    %v1257 = vlaneseq
    %v1258 = vshrl.u32 %v1257, 7
    %v1259 = vsub.s32 2, %v1258
    %v1260 = vrot.slane %v1245, %v1259
    %v1261 = vlaneseq
    %v1262 = vshrl.u32 %v1261, 7
    %v1263 = vsub.s32 3, %v1262
    %v1264 = vrot.slane %v1245, %v1263
    %v1265 = vlaneseq
    %v1266 = vshrl.u32 %v1265, 7
    %v1267 = vsub.s32 4, %v1266
    %v1268 = vrot.slane %v1245, %v1267
    %v1269 = vlaneseq
    %v1270 = vshrl.u32 %v1269, 7
    %v1271 = vsub.s32 5, %v1270
    %v1272 = vrot.slane %v1245, %v1271
    %v1273 = vlaneseq
    %v1274 = vshrl.u32 %v1273, 7
    %v1275 = vsub.s32 6, %v1274
    %v1276 = vrot.slane %v1245, %v1275
    %v1277 = vlaneseq
    %v1278 = vshrl.u32 %v1277, 7
    %v1279 = vsub.s32 7, %v1278
    %v1280 = vrot.slane %v1245, %v1279
    %v1281 = vlaneseq
    %v1282 = vshrl.u32 %v1281, 7
    %v1283 = vsub.s32 0, %v1282
    %v1284 = vrot.slane %v1246, %v1283
    %v1285 = vlaneseq
    %v1286 = vshrl.u32 %v1285, 7
    %v1287 = vsub.s32 1, %v1286
    %v1288 = vrot.slane %v1246, %v1287
    %v1289 = vlaneseq
    %v1290 = vshrl.u32 %v1289, 7
    %v1291 = vsub.s32 2, %v1290
    %v1292 = vrot.slane %v1246, %v1291
    %v1293 = vlaneseq
    %v1294 = vshrl.u32 %v1293, 7
    %v1295 = vsub.s32 3, %v1294
    %v1296 = vrot.slane %v1246, %v1295
    %v1297 = vlaneseq
    %v1298 = vshrl.u32 %v1297, 7
    %v1299 = vsub.s32 4, %v1298
    %v1300 = vrot.slane %v1246, %v1299
    %v1301 = vlaneseq
    %v1302 = vshrl.u32 %v1301, 7
    %v1303 = vsub.s32 5, %v1302
    %v1304 = vrot.slane %v1246, %v1303
    %v1305 = vlaneseq
    %v1306 = vshrl.u32 %v1305, 7
    %v1307 = vsub.s32 6, %v1306
    %v1308 = vrot.slane %v1246, %v1307
    %v1309 = vlaneseq
    %v1310 = vshrl.u32 %v1309, 7
    %v1311 = vsub.s32 7, %v1310
    %v1312 = vrot.slane %v1246, %v1311
    %v1457 = vunpack.c.l.b16 %v1117
    %v1458 = vunpack.c.h.b16 %v1117
    %v1459 = vunpack.c.l.b16 %v1118
    %v1460 = vunpack.c.h.b16 %v1118
    %v1461 = vunpack.c.l.b16 %v1119
    %v1462 = vunpack.c.h.b16 %v1119
    %v1463 = vunpack.c.l.b16 %v1120
    %v1464 = vunpack.c.h.b16 %v1120
    %v1465 = vunpack.c.l.b16 %v1121
    %v1466 = vunpack.c.h.b16 %v1121
    %v1467 = vunpack.c.l.b16 %v1122
    %v1468 = vunpack.c.h.b16 %v1122
    %v1469 = vunpack.c.l.b16 %v1123
    %v1470 = vunpack.c.h.b16 %v1123
    %v1471 = vunpack.c.l.b16 %v1124
    %v1472 = vunpack.c.h.b16 %v1124
    %v1473 = vunpack.c.l.b16 %v1125
    %v1474 = vunpack.c.h.b16 %v1125
    %v1475 = vunpack.c.l.b16 %v1126
    %v1476 = vunpack.c.h.b16 %v1126
    %v1477 = vunpack.c.l.b16 %v1127
    %v1478 = vunpack.c.h.b16 %v1127
    %v1479 = vunpack.c.l.b16 %v1128
    %v1480 = vunpack.c.h.b16 %v1128
    %v1481 = vunpack.c.l.b16 %v1129
    %v1482 = vunpack.c.h.b16 %v1129
    %v1483 = vunpack.c.l.b16 %v1130
    %v1484 = vunpack.c.h.b16 %v1130
    %v1485 = vunpack.c.l.b16 %v1131
    %v1486 = vunpack.c.h.b16 %v1131
    %v1487 = vunpack.c.l.b16 %v1132
    %v1488 = vunpack.c.h.b16 %v1132
    %v1489 = vunpack.c.l.b16 %v1133
    %v1490 = vunpack.c.h.b16 %v1133
    %v1491 = vunpack.c.l.b16 %v1134
    %v1492 = vunpack.c.h.b16 %v1134
    %v1493 = vunpack.c.l.b16 %v1135
    %v1494 = vunpack.c.h.b16 %v1135
    %v1495 = vunpack.c.l.b16 %v1136
    %v1496 = vunpack.c.h.b16 %v1136
    %v1497 = vunpack.c.l.b16 %v1137
    %v1498 = vunpack.c.h.b16 %v1137
    %v1499 = vunpack.c.l.b16 %v1138
    %v1500 = vunpack.c.h.b16 %v1138
    %v1501 = vunpack.c.l.b16 %v1139
    %v1502 = vunpack.c.h.b16 %v1139
    %v1503 = vunpack.c.l.b16 %v1140
    %v1504 = vunpack.c.h.b16 %v1140
    %v1505 = vunpack.c.l.b16 %v1141
    %v1506 = vunpack.c.h.b16 %v1141
    %v1507 = vunpack.c.l.b16 %v1142
    %v1508 = vunpack.c.h.b16 %v1142
    %v1509 = vunpack.c.l.b16 %v1143
    %v1510 = vunpack.c.h.b16 %v1143
    %v1511 = vunpack.c.l.b16 %v1144
    %v1512 = vunpack.c.h.b16 %v1144
    %v1513 = vunpack.c.l.b16 %v1145
    %v1514 = vunpack.c.h.b16 %v1145
    %v1515 = vunpack.c.l.b16 %v1146
    %v1516 = vunpack.c.h.b16 %v1146
    %v1517 = vunpack.c.l.b16 %v1147
    %v1518 = vunpack.c.h.b16 %v1147
    %v1519 = vunpack.c.l.b16 %v1148
    %v1520 = vunpack.c.h.b16 %v1148
    %v1521 = vunpack.c.l.b16 %v1149
    %v1522 = vunpack.c.h.b16 %v1149
    %v1523 = vunpack.c.l.b16 %v1150
    %v1524 = vunpack.c.h.b16 %v1150
    %v1525 = vunpack.c.l.b16 %v1151
    %v1526 = vunpack.c.h.b16 %v1151
    %v1527 = vunpack.c.l.b16 %v1152
    %v1528 = vunpack.c.h.b16 %v1152
    %v1529 = vunpack.c.l.b16 %v1153
    %v1530 = vunpack.c.h.b16 %v1153
    %v1531 = vunpack.c.l.b16 %v1154
    %v1532 = vunpack.c.h.b16 %v1154
    %v1533 = vunpack.c.l.b16 %v1155
    %v1534 = vunpack.c.h.b16 %v1155
    %v1535 = vunpack.c.l.b16 %v1156
    %v1536 = vunpack.c.h.b16 %v1156
    %v1537 = vunpack.c.l.b16 %v1157
    %v1538 = vunpack.c.h.b16 %v1157
    %v1539 = vunpack.c.l.b16 %v1158
    %v1540 = vunpack.c.h.b16 %v1158
    %v1541 = vunpack.c.l.b16 %v1159
    %v1542 = vunpack.c.h.b16 %v1159
    %v1543 = vunpack.c.l.b16 %v1160
    %v1544 = vunpack.c.h.b16 %v1160
    %v1545 = vunpack.c.l.b16 %v1161
    %v1546 = vunpack.c.h.b16 %v1161
    %v1547 = vunpack.c.l.b16 %v1162
    %v1548 = vunpack.c.h.b16 %v1162
    %v1549 = vunpack.c.l.b16 %v1163
    %v1550 = vunpack.c.h.b16 %v1163
    %v1551 = vunpack.c.l.b16 %v1164
    %v1552 = vunpack.c.h.b16 %v1164
    %v1553 = vunpack.c.l.b16 %v1165
    %v1554 = vunpack.c.h.b16 %v1165
    %v1555 = vunpack.c.l.b16 %v1166
    %v1556 = vunpack.c.h.b16 %v1166
    %v1557 = vunpack.c.l.b16 %v1167
    %v1558 = vunpack.c.h.b16 %v1167
    %v1559 = vunpack.c.l.b16 %v1168
    %v1560 = vunpack.c.h.b16 %v1168
    %v1561 = vunpack.c.l.b16 %v1169
    %v1562 = vunpack.c.h.b16 %v1169
    %v1563 = vunpack.c.l.b16 %v1170
    %v1564 = vunpack.c.h.b16 %v1170
    %v1565 = vunpack.c.l.b16 %v1171
    %v1566 = vunpack.c.h.b16 %v1171
    %v1567 = vunpack.c.l.b16 %v1172
    %v1568 = vunpack.c.h.b16 %v1172
    %v1569 = vunpack.c.l.b16 %v1173
    %v1570 = vunpack.c.h.b16 %v1173
    %v1571 = vunpack.c.l.b16 %v1174
    %v1572 = vunpack.c.h.b16 %v1174
    %v1573 = vunpack.c.l.b16 %v1175
    %v1574 = vunpack.c.h.b16 %v1175
    %v1575 = vunpack.c.l.b16 %v1176
    %v1576 = vunpack.c.h.b16 %v1176
    %v1577 = vunpack.c.l.b16 %v1177
    %v1578 = vunpack.c.h.b16 %v1177
    %v1579 = vunpack.c.l.b16 %v1178
    %v1580 = vunpack.c.h.b16 %v1178
    %v1581 = vunpack.c.l.b16 %v1179
    %v1582 = vunpack.c.h.b16 %v1179
    %v1583 = vunpack.c.l.b16 %v1180
    %v1584 = vunpack.c.h.b16 %v1180
    %v1585 = vunpack.c.l.b16 %v1181
    %v1586 = vunpack.c.h.b16 %v1181
    %v1587 = vunpack.c.l.b16 %v1182
    %v1588 = vunpack.c.h.b16 %v1182
    %v1589 = vunpack.c.l.b16 %v1183
    %v1590 = vunpack.c.h.b16 %v1183
    %v1591 = vunpack.c.l.b16 %v1184
    %v1592 = vunpack.c.h.b16 %v1184
    %v1593 = vunpack.c.l.b16 %v1185
    %v1594 = vunpack.c.h.b16 %v1185
    %v1595 = vunpack.c.l.b16 %v1186
    %v1596 = vunpack.c.h.b16 %v1186
    %v1597 = vunpack.c.l.b16 %v1187
    %v1598 = vunpack.c.h.b16 %v1187
    %v1599 = vunpack.c.l.b16 %v1188
    %v1600 = vunpack.c.h.b16 %v1188
    %v1601 = vunpack.c.l.b16 %v1189
    %v1602 = vunpack.c.h.b16 %v1189
    %v1603 = vunpack.c.l.b16 %v1190
    %v1604 = vunpack.c.h.b16 %v1190
    %v1605 = vunpack.c.l.b16 %v1191
    %v1606 = vunpack.c.h.b16 %v1191
    %v1607 = vunpack.c.l.b16 %v1192
    %v1608 = vunpack.c.h.b16 %v1192
    %v1609 = vunpack.c.l.b16 %v1193
    %v1610 = vunpack.c.h.b16 %v1193
    %v1611 = vunpack.c.l.b16 %v1194
    %v1612 = vunpack.c.h.b16 %v1194
    %v1613 = vunpack.c.l.b16 %v1195
    %v1614 = vunpack.c.h.b16 %v1195
    %v1615 = vunpack.c.l.b16 %v1196
    %v1616 = vunpack.c.h.b16 %v1196
    %v1617 = vunpack.c.l.b16 %v1197
    %v1618 = vunpack.c.h.b16 %v1197
    %v1619 = vunpack.c.l.b16 %v1198
    %v1620 = vunpack.c.h.b16 %v1198
    %v1621 = vunpack.c.l.b16 %v1199
    %v1622 = vunpack.c.h.b16 %v1199
    %v1623 = vunpack.c.l.b16 %v1200
    %v1624 = vunpack.c.h.b16 %v1200
    %v1625 = vunpack.c.l.b16 %v1201
    %v1626 = vunpack.c.h.b16 %v1201
    %v1627 = vunpack.c.l.b16 %v1202
    %v1628 = vunpack.c.h.b16 %v1202
    %v1629 = vunpack.c.l.b16 %v1203
    %v1630 = vunpack.c.h.b16 %v1203
    %v1631 = vunpack.c.l.b16 %v1204
    %v1632 = vunpack.c.h.b16 %v1204
    %v1633 = vunpack.c.l.b16 %v1205
    %v1634 = vunpack.c.h.b16 %v1205
    %v1635 = vunpack.c.l.b16 %v1206
    %v1636 = vunpack.c.h.b16 %v1206
    %v1637 = vunpack.c.l.b16 %v1207
    %v1638 = vunpack.c.h.b16 %v1207
    %v1639 = vunpack.c.l.b16 %v1208
    %v1640 = vunpack.c.h.b16 %v1208
    %v1641 = vunpack.c.l.b16 %v1209
    %v1642 = vunpack.c.h.b16 %v1209
    %v1643 = vunpack.c.l.b16 %v1210
    %v1644 = vunpack.c.h.b16 %v1210
    %v1645 = vunpack.c.l.b16 %v1211
    %v1646 = vunpack.c.h.b16 %v1211
    %v1647 = vunpack.c.l.b16 %v1212
    %v1648 = vunpack.c.h.b16 %v1212
    %v1649 = vunpack.c.l.b16 %v1213
    %v1650 = vunpack.c.h.b16 %v1213
    %v1651 = vunpack.c.l.b16 %v1214
    %v1652 = vunpack.c.h.b16 %v1214
    %v1653 = vunpack.c.l.b16 %v1215
    %v1654 = vunpack.c.h.b16 %v1215
    %v1655 = vunpack.c.l.b16 %v1216
    %v1656 = vunpack.c.h.b16 %v1216
    %v1657 = vunpack.c.l.b16 %v1217
    %v1658 = vunpack.c.h.b16 %v1217
    %v1659 = vunpack.c.l.b16 %v1218
    %v1660 = vunpack.c.h.b16 %v1218
    %v1661 = vunpack.c.l.b16 %v1219
    %v1662 = vunpack.c.h.b16 %v1219
    %v1663 = vunpack.c.l.b16 %v1220
    %v1664 = vunpack.c.h.b16 %v1220
    %v1665 = vunpack.c.l.b16 %v1221
    %v1666 = vunpack.c.h.b16 %v1221
    %v1667 = vunpack.c.l.b16 %v1222
    %v1668 = vunpack.c.h.b16 %v1222
    %v1669 = vunpack.c.l.b16 %v1223
    %v1670 = vunpack.c.h.b16 %v1223
    %v1671 = vunpack.c.l.b16 %v1224
    %v1672 = vunpack.c.h.b16 %v1224
    %v1673 = vunpack.c.l.b16 %v1225
    %v1674 = vunpack.c.h.b16 %v1225
    %v1675 = vunpack.c.l.b16 %v1226
    %v1676 = vunpack.c.h.b16 %v1226
    %v1677 = vunpack.c.l.b16 %v1227
    %v1678 = vunpack.c.h.b16 %v1227
    %v1679 = vunpack.c.l.b16 %v1228
    %v1680 = vunpack.c.h.b16 %v1228
    %v1681 = vunpack.c.l.b16 %v1229
    %v1682 = vunpack.c.h.b16 %v1229
    %v1683 = vunpack.c.l.b16 %v1230
    %v1684 = vunpack.c.h.b16 %v1230
    %v1685 = vunpack.c.l.b16 %v1231
    %v1686 = vunpack.c.h.b16 %v1231
    %v1687 = vunpack.c.l.b16 %v1232
    %v1688 = vunpack.c.h.b16 %v1232
    %v1689 = vunpack.c.l.b16 %v1233
    %v1690 = vunpack.c.h.b16 %v1233
    %v1691 = vunpack.c.l.b16 %v1234
    %v1692 = vunpack.c.h.b16 %v1234
    %v1693 = vunpack.c.l.b16 %v1235
    %v1694 = vunpack.c.h.b16 %v1235
    %v1695 = vunpack.c.l.b16 %v1236
    %v1696 = vunpack.c.h.b16 %v1236
    %v1697 = vunpack.c.l.b16 %v1237
    %v1698 = vunpack.c.h.b16 %v1237
    %v1699 = vunpack.c.l.b16 %v1238
    %v1700 = vunpack.c.h.b16 %v1238
    %v1701 = vunpack.c.l.b16 %v1239
    %v1702 = vunpack.c.h.b16 %v1239
    %v1703 = vunpack.c.l.b16 %v1240
    %v1704 = vunpack.c.h.b16 %v1240
    %v1705 = vunpack.c.l.b16 %v1241
    %v1706 = vunpack.c.h.b16 %v1241
    %v1707 = vunpack.c.l.b16 %v1242
    %v1708 = vunpack.c.h.b16 %v1242
    %v1709 = vunpack.c.l.b16 %v1243
    %v1710 = vunpack.c.h.b16 %v1243
    %v1711 = vunpack.c.l.b16 %v1244
    %v1712 = vunpack.c.h.b16 %v1244
    %v1713 = vpack.c.b16 %v1473, %v1457
    %v1714 = vpack.c.b16 %v1474, %v1458
    %v1715 = vpack.c.b16 %v1475, %v1459
    %v1716 = vpack.c.b16 %v1476, %v1460
    %v1717 = vpack.c.b16 %v1477, %v1461
    %v1718 = vpack.c.b16 %v1478, %v1462
    %v1719 = vpack.c.b16 %v1479, %v1463
    %v1720 = vpack.c.b16 %v1480, %v1464
    %v1721 = vpack.c.b16 %v1481, %v1465
    %v1722 = vpack.c.b16 %v1482, %v1466
    %v1723 = vpack.c.b16 %v1483, %v1467
    %v1724 = vpack.c.b16 %v1484, %v1468
    %v1725 = vpack.c.b16 %v1485, %v1469
    %v1726 = vpack.c.b16 %v1486, %v1470
    %v1727 = vpack.c.b16 %v1487, %v1471
    %v1728 = vpack.c.b16 %v1488, %v1472
    %v1729 = vpack.c.b16 %v1505, %v1489
    %v1730 = vpack.c.b16 %v1506, %v1490
    %v1731 = vpack.c.b16 %v1507, %v1491
    %v1732 = vpack.c.b16 %v1508, %v1492
    %v1733 = vpack.c.b16 %v1509, %v1493
    %v1734 = vpack.c.b16 %v1510, %v1494
    %v1735 = vpack.c.b16 %v1511, %v1495
    %v1736 = vpack.c.b16 %v1512, %v1496
    %v1737 = vpack.c.b16 %v1513, %v1497
    %v1738 = vpack.c.b16 %v1514, %v1498
    %v1739 = vpack.c.b16 %v1515, %v1499
    %v1740 = vpack.c.b16 %v1516, %v1500
    %v1741 = vpack.c.b16 %v1517, %v1501
    %v1742 = vpack.c.b16 %v1518, %v1502
    %v1743 = vpack.c.b16 %v1519, %v1503
    %v1744 = vpack.c.b16 %v1520, %v1504
    %v1745 = vpack.c.b16 %v1537, %v1521
    %v1746 = vpack.c.b16 %v1538, %v1522
    %v1747 = vpack.c.b16 %v1539, %v1523
    %v1748 = vpack.c.b16 %v1540, %v1524
    %v1749 = vpack.c.b16 %v1541, %v1525
    %v1750 = vpack.c.b16 %v1542, %v1526
    %v1751 = vpack.c.b16 %v1543, %v1527
    %v1752 = vpack.c.b16 %v1544, %v1528
    %v1753 = vpack.c.b16 %v1545, %v1529
    %v1754 = vpack.c.b16 %v1546, %v1530
    %v1755 = vpack.c.b16 %v1547, %v1531
    %v1756 = vpack.c.b16 %v1548, %v1532
    %v1757 = vpack.c.b16 %v1549, %v1533
    %v1758 = vpack.c.b16 %v1550, %v1534
    %v1759 = vpack.c.b16 %v1551, %v1535
    %v1760 = vpack.c.b16 %v1552, %v1536
    %v1761 = vpack.c.b16 %v1569, %v1553
    %v1762 = vpack.c.b16 %v1570, %v1554
    %v1763 = vpack.c.b16 %v1571, %v1555
    %v1764 = vpack.c.b16 %v1572, %v1556
    %v1765 = vpack.c.b16 %v1573, %v1557
    %v1766 = vpack.c.b16 %v1574, %v1558
    %v1767 = vpack.c.b16 %v1575, %v1559
    %v1768 = vpack.c.b16 %v1576, %v1560
    %v1769 = vpack.c.b16 %v1577, %v1561
    %v1770 = vpack.c.b16 %v1578, %v1562
    %v1771 = vpack.c.b16 %v1579, %v1563
    %v1772 = vpack.c.b16 %v1580, %v1564
    %v1773 = vpack.c.b16 %v1581, %v1565
    %v1774 = vpack.c.b16 %v1582, %v1566
    %v1775 = vpack.c.b16 %v1583, %v1567
    %v1776 = vpack.c.b16 %v1584, %v1568
    %v1777 = vpack.c.b16 %v1601, %v1585
    %v1778 = vpack.c.b16 %v1602, %v1586
    %v1779 = vpack.c.b16 %v1603, %v1587
    %v1780 = vpack.c.b16 %v1604, %v1588
    %v1781 = vpack.c.b16 %v1605, %v1589
    %v1782 = vpack.c.b16 %v1606, %v1590
    %v1783 = vpack.c.b16 %v1607, %v1591
    %v1784 = vpack.c.b16 %v1608, %v1592
    %v1785 = vpack.c.b16 %v1609, %v1593
    %v1786 = vpack.c.b16 %v1610, %v1594
    %v1787 = vpack.c.b16 %v1611, %v1595
    %v1788 = vpack.c.b16 %v1612, %v1596
    %v1789 = vpack.c.b16 %v1613, %v1597
    %v1790 = vpack.c.b16 %v1614, %v1598
    %v1791 = vpack.c.b16 %v1615, %v1599
    %v1792 = vpack.c.b16 %v1616, %v1600
    %v1793 = vpack.c.b16 %v1633, %v1617
    %v1794 = vpack.c.b16 %v1634, %v1618
    %v1795 = vpack.c.b16 %v1635, %v1619
    %v1796 = vpack.c.b16 %v1636, %v1620
    %v1797 = vpack.c.b16 %v1637, %v1621
    %v1798 = vpack.c.b16 %v1638, %v1622
    %v1799 = vpack.c.b16 %v1639, %v1623
    %v1800 = vpack.c.b16 %v1640, %v1624
    %v1801 = vpack.c.b16 %v1641, %v1625
    %v1802 = vpack.c.b16 %v1642, %v1626
    %v1803 = vpack.c.b16 %v1643, %v1627
    %v1804 = vpack.c.b16 %v1644, %v1628
    %v1805 = vpack.c.b16 %v1645, %v1629
    %v1806 = vpack.c.b16 %v1646, %v1630
    %v1807 = vpack.c.b16 %v1647, %v1631
    %v1808 = vpack.c.b16 %v1648, %v1632
    %v1809 = vpack.c.b16 %v1665, %v1649
    %v1810 = vpack.c.b16 %v1666, %v1650
    %v1811 = vpack.c.b16 %v1667, %v1651
    %v1812 = vpack.c.b16 %v1668, %v1652
    %v1813 = vpack.c.b16 %v1669, %v1653
    %v1814 = vpack.c.b16 %v1670, %v1654
    %v1815 = vpack.c.b16 %v1671, %v1655
    %v1816 = vpack.c.b16 %v1672, %v1656
    %v1817 = vpack.c.b16 %v1673, %v1657
    %v1818 = vpack.c.b16 %v1674, %v1658
    %v1819 = vpack.c.b16 %v1675, %v1659
    %v1820 = vpack.c.b16 %v1676, %v1660
    %v1821 = vpack.c.b16 %v1677, %v1661
    %v1822 = vpack.c.b16 %v1678, %v1662
    %v1823 = vpack.c.b16 %v1679, %v1663
    %v1824 = vpack.c.b16 %v1680, %v1664
    %v1825 = vpack.c.b16 %v1697, %v1681
    %v1826 = vpack.c.b16 %v1698, %v1682
    %v1827 = vpack.c.b16 %v1699, %v1683
    %v1828 = vpack.c.b16 %v1700, %v1684
    %v1829 = vpack.c.b16 %v1701, %v1685
    %v1830 = vpack.c.b16 %v1702, %v1686
    %v1831 = vpack.c.b16 %v1703, %v1687
    %v1832 = vpack.c.b16 %v1704, %v1688
    %v1833 = vpack.c.b16 %v1705, %v1689
    %v1834 = vpack.c.b16 %v1706, %v1690
    %v1835 = vpack.c.b16 %v1707, %v1691
    %v1836 = vpack.c.b16 %v1708, %v1692
    %v1837 = vpack.c.b16 %v1709, %v1693
    %v1838 = vpack.c.b16 %v1710, %v1694
    %v1839 = vpack.c.b16 %v1711, %v1695
    %v1840 = vpack.c.b16 %v1712, %v1696
    %1969 = vmatprep.subr.bf16.mxu0 %v1714
    %1970 = vmatpush1.bf16.msra.mxu0 %v1713
    %1971 = vmatprep.subr.bf16.mxu0 %v1730
    %1972 = vmatpush1.bf16.msra.mxu0 %v1729
    %1973 = vmatprep.subr.bf16.mxu0 %v1746
    %1974 = vmatpush1.bf16.msra.mxu0 %v1745
    %1975 = vmatprep.subr.bf16.mxu0 %v1762
    %1976 = vmatpush1.bf16.msra.mxu0 %v1761
    %1977 = vmatprep.subr.bf16.mxu0 %v1778
    %1978 = vmatpush1.bf16.msra.mxu0 %v1777
    %1979 = vmatprep.subr.bf16.mxu0 %v1794
    %1980 = vmatpush1.bf16.msra.mxu0 %v1793
    %1981 = vmatprep.subr.bf16.mxu0 %v1810
    %1982 = vmatpush1.bf16.msra.mxu0 %v1809
    %1983 = vmatprep.subr.bf16.mxu0 %v1826
    %1984 = vmatpush1.bf16.msra.mxu0 %v1825
    %1985 = vmatprep.subr.bf16.mxu0 0
    %1986 = vmatpush1.bf16.msra.mxu0 0
    %1987 = vmatprep.subr.bf16.mxu0 0
    %1988 = vmatpush1.bf16.msra.mxu0 0
    %1989 = vmatprep.subr.bf16.mxu0 0
    %1990 = vmatpush1.bf16.msra.mxu0 0
    %1991 = vmatprep.subr.bf16.mxu0 0
    %1992 = vmatpush1.bf16.msra.mxu0 0
    %1993 = vmatprep.subr.bf16.mxu0 0
    %1994 = vmatpush1.bf16.msra.mxu0 0
    %1995 = vmatprep.subr.bf16.mxu0 0
    %1996 = vmatpush1.bf16.msra.mxu0 0
    %1997 = vmatprep.subr.bf16.mxu0 0
    %1998 = vmatpush1.bf16.msra.mxu0 0
    %1999 = vmatprep.subr.bf16.mxu0 0
    %2000 = vmatpush1.bf16.msra.mxu0 0
    %2001 = vmatprep.mubr.bf16.mxu0 0
    %2002 = vmatmul.mubr.bf16.gmra.mrb[0].mxu0 %v1116
    %v2003 = vpop.f32.mrb[0].mxu0
    %v2004 = vadd.f32 %v1252, %v2003
    %v2005 = vpop.f32.mrb[0].mxu0
    %v2006 = vadd.f32 %v1256, %v2005
    %v2007 = vpop.f32.mrb[0].mxu0
    %v2008 = vpop.f32.mrb[0].mxu0
    %2009 = vdwg.mxu0
    %2010 = vmatprep.subr.bf16.mxu0 %v1716
    %2011 = vmatpush1.bf16.msra.mxu0 %v1715
    %2012 = vmatprep.subr.bf16.mxu0 %v1732
    %2013 = vmatpush1.bf16.msra.mxu0 %v1731
    %2014 = vmatprep.subr.bf16.mxu0 %v1748
    %2015 = vmatpush1.bf16.msra.mxu0 %v1747
    %2016 = vmatprep.subr.bf16.mxu0 %v1764
    %2017 = vmatpush1.bf16.msra.mxu0 %v1763
    %2018 = vmatprep.subr.bf16.mxu0 %v1780
    %2019 = vmatpush1.bf16.msra.mxu0 %v1779
    %2020 = vmatprep.subr.bf16.mxu0 %v1796
    %2021 = vmatpush1.bf16.msra.mxu0 %v1795
    %2022 = vmatprep.subr.bf16.mxu0 %v1812
    %2023 = vmatpush1.bf16.msra.mxu0 %v1811
    %2024 = vmatprep.subr.bf16.mxu0 %v1828
    %2025 = vmatpush1.bf16.msra.mxu0 %v1827
    %2026 = vmatprep.subr.bf16.mxu0 0
    %2027 = vmatpush1.bf16.msra.mxu0 0
    %2028 = vmatprep.subr.bf16.mxu0 0
    %2029 = vmatpush1.bf16.msra.mxu0 0
    %2030 = vmatprep.subr.bf16.mxu0 0
    %2031 = vmatpush1.bf16.msra.mxu0 0
    %2032 = vmatprep.subr.bf16.mxu0 0
    %2033 = vmatpush1.bf16.msra.mxu0 0
    %2034 = vmatprep.subr.bf16.mxu0 0
    %2035 = vmatpush1.bf16.msra.mxu0 0
    %2036 = vmatprep.subr.bf16.mxu0 0
    %2037 = vmatpush1.bf16.msra.mxu0 0
    %2038 = vmatprep.subr.bf16.mxu0 0
    %2039 = vmatpush1.bf16.msra.mxu0 0
    %2040 = vmatprep.subr.bf16.mxu0 0
    %2041 = vmatpush1.bf16.msra.mxu0 0
    %2042 = vmatprep.mubr.bf16.mxu0 0
    %2043 = vmatmul.mubr.bf16.gmra.mrb[0].mxu0 %v1116
    %v2044 = vpop.f32.mrb[0].mxu0
    %v2045 = vadd.f32 %v1260, %v2044
    %v2046 = vpop.f32.mrb[0].mxu0
    %v2047 = vadd.f32 %v1264, %v2046
    %v2048 = vpop.f32.mrb[0].mxu0
    %v2049 = vpop.f32.mrb[0].mxu0
    %2050 = vdwg.mxu0
    %2051 = vmatprep.subr.bf16.mxu0 %v1718
    %2052 = vmatpush1.bf16.msra.mxu0 %v1717
    %2053 = vmatprep.subr.bf16.mxu0 %v1734
    %2054 = vmatpush1.bf16.msra.mxu0 %v1733
    %2055 = vmatprep.subr.bf16.mxu0 %v1750
    %2056 = vmatpush1.bf16.msra.mxu0 %v1749
    %2057 = vmatprep.subr.bf16.mxu0 %v1766
    %2058 = vmatpush1.bf16.msra.mxu0 %v1765
    %2059 = vmatprep.subr.bf16.mxu0 %v1782
    %2060 = vmatpush1.bf16.msra.mxu0 %v1781
    %2061 = vmatprep.subr.bf16.mxu0 %v1798
    %2062 = vmatpush1.bf16.msra.mxu0 %v1797
    %2063 = vmatprep.subr.bf16.mxu0 %v1814
    %2064 = vmatpush1.bf16.msra.mxu0 %v1813
    %2065 = vmatprep.subr.bf16.mxu0 %v1830
    %2066 = vmatpush1.bf16.msra.mxu0 %v1829
    %2067 = vmatprep.subr.bf16.mxu0 0
    %2068 = vmatpush1.bf16.msra.mxu0 0
    %2069 = vmatprep.subr.bf16.mxu0 0
    %2070 = vmatpush1.bf16.msra.mxu0 0
    %2071 = vmatprep.subr.bf16.mxu0 0
    %2072 = vmatpush1.bf16.msra.mxu0 0
    %2073 = vmatprep.subr.bf16.mxu0 0
    %2074 = vmatpush1.bf16.msra.mxu0 0
    %2075 = vmatprep.subr.bf16.mxu0 0
    %2076 = vmatpush1.bf16.msra.mxu0 0
    %2077 = vmatprep.subr.bf16.mxu0 0
    %2078 = vmatpush1.bf16.msra.mxu0 0
    %2079 = vmatprep.subr.bf16.mxu0 0
    %2080 = vmatpush1.bf16.msra.mxu0 0
    %2081 = vmatprep.subr.bf16.mxu0 0
    %2082 = vmatpush1.bf16.msra.mxu0 0
    %2083 = vmatprep.mubr.bf16.mxu0 0
    %2084 = vmatmul.mubr.bf16.gmra.mrb[0].mxu0 %v1116
    %v2085 = vpop.f32.mrb[0].mxu0
    %v2086 = vadd.f32 %v1268, %v2085
    %v2087 = vpop.f32.mrb[0].mxu0
    %v2088 = vadd.f32 %v1272, %v2087
    %v2089 = vpop.f32.mrb[0].mxu0
    %v2090 = vpop.f32.mrb[0].mxu0
    %2091 = vdwg.mxu0
    %2092 = vmatprep.subr.bf16.mxu0 %v1720
    %2093 = vmatpush1.bf16.msra.mxu0 %v1719
    %2094 = vmatprep.subr.bf16.mxu0 %v1736
    %2095 = vmatpush1.bf16.msra.mxu0 %v1735
    %2096 = vmatprep.subr.bf16.mxu0 %v1752
    %2097 = vmatpush1.bf16.msra.mxu0 %v1751
    %2098 = vmatprep.subr.bf16.mxu0 %v1768
    %2099 = vmatpush1.bf16.msra.mxu0 %v1767
    %2100 = vmatprep.subr.bf16.mxu0 %v1784
    %2101 = vmatpush1.bf16.msra.mxu0 %v1783
    %2102 = vmatprep.subr.bf16.mxu0 %v1800
    %2103 = vmatpush1.bf16.msra.mxu0 %v1799
    %2104 = vmatprep.subr.bf16.mxu0 %v1816
    %2105 = vmatpush1.bf16.msra.mxu0 %v1815
    %2106 = vmatprep.subr.bf16.mxu0 %v1832
    %2107 = vmatpush1.bf16.msra.mxu0 %v1831
    %2108 = vmatprep.subr.bf16.mxu0 0
    %2109 = vmatpush1.bf16.msra.mxu0 0
    %2110 = vmatprep.subr.bf16.mxu0 0
    %2111 = vmatpush1.bf16.msra.mxu0 0
    %2112 = vmatprep.subr.bf16.mxu0 0
    %2113 = vmatpush1.bf16.msra.mxu0 0
    %2114 = vmatprep.subr.bf16.mxu0 0
    %2115 = vmatpush1.bf16.msra.mxu0 0
    %2116 = vmatprep.subr.bf16.mxu0 0
    %2117 = vmatpush1.bf16.msra.mxu0 0
    %2118 = vmatprep.subr.bf16.mxu0 0
    %2119 = vmatpush1.bf16.msra.mxu0 0
    %2120 = vmatprep.subr.bf16.mxu0 0
    %2121 = vmatpush1.bf16.msra.mxu0 0
    %2122 = vmatprep.subr.bf16.mxu0 0
    %2123 = vmatpush1.bf16.msra.mxu0 0
    %2124 = vmatprep.mubr.bf16.mxu0 0
    %2125 = vmatmul.mubr.bf16.gmra.mrb[0].mxu0 %v1116
    %v2126 = vpop.f32.mrb[0].mxu0
    %v2127 = vadd.f32 %v1276, %v2126
    %v2128 = vpop.f32.mrb[0].mxu0
    %v2129 = vadd.f32 %v1280, %v2128
    %v2130 = vpop.f32.mrb[0].mxu0
    %v2131 = vpop.f32.mrb[0].mxu0
    %2132 = vdwg.mxu0
    %2133 = vmatprep.subr.bf16.mxu0 %v1722
    %2134 = vmatpush1.bf16.msra.mxu0 %v1721
    %2135 = vmatprep.subr.bf16.mxu0 %v1738
    %2136 = vmatpush1.bf16.msra.mxu0 %v1737
    %2137 = vmatprep.subr.bf16.mxu0 %v1754
    %2138 = vmatpush1.bf16.msra.mxu0 %v1753
    %2139 = vmatprep.subr.bf16.mxu0 %v1770
    %2140 = vmatpush1.bf16.msra.mxu0 %v1769
    %2141 = vmatprep.subr.bf16.mxu0 %v1786
    %2142 = vmatpush1.bf16.msra.mxu0 %v1785
    %2143 = vmatprep.subr.bf16.mxu0 %v1802
    %2144 = vmatpush1.bf16.msra.mxu0 %v1801
    %2145 = vmatprep.subr.bf16.mxu0 %v1818
    %2146 = vmatpush1.bf16.msra.mxu0 %v1817
    %2147 = vmatprep.subr.bf16.mxu0 %v1834
    %2148 = vmatpush1.bf16.msra.mxu0 %v1833
    %2149 = vmatprep.subr.bf16.mxu0 0
    %2150 = vmatpush1.bf16.msra.mxu0 0
    %2151 = vmatprep.subr.bf16.mxu0 0
    %2152 = vmatpush1.bf16.msra.mxu0 0
    %2153 = vmatprep.subr.bf16.mxu0 0
    %2154 = vmatpush1.bf16.msra.mxu0 0
    %2155 = vmatprep.subr.bf16.mxu0 0
    %2156 = vmatpush1.bf16.msra.mxu0 0
    %2157 = vmatprep.subr.bf16.mxu0 0
    %2158 = vmatpush1.bf16.msra.mxu0 0
    %2159 = vmatprep.subr.bf16.mxu0 0
    %2160 = vmatpush1.bf16.msra.mxu0 0
    %2161 = vmatprep.subr.bf16.mxu0 0
    %2162 = vmatpush1.bf16.msra.mxu0 0
    %2163 = vmatprep.subr.bf16.mxu0 0
    %2164 = vmatpush1.bf16.msra.mxu0 0
    %2165 = vmatprep.mubr.bf16.mxu0 0
    %2166 = vmatmul.mubr.bf16.gmra.mrb[0].mxu0 %v1116
    %v2167 = vpop.f32.mrb[0].mxu0
    %v2168 = vadd.f32 %v1284, %v2167
    %v2169 = vpop.f32.mrb[0].mxu0
    %v2170 = vadd.f32 %v1288, %v2169
    %v2171 = vpop.f32.mrb[0].mxu0
    %v2172 = vpop.f32.mrb[0].mxu0
    %2173 = vdwg.mxu0
    %2174 = vmatprep.subr.bf16.mxu0 %v1724
    %2175 = vmatpush1.bf16.msra.mxu0 %v1723
    %2176 = vmatprep.subr.bf16.mxu0 %v1740
    %2177 = vmatpush1.bf16.msra.mxu0 %v1739
    %2178 = vmatprep.subr.bf16.mxu0 %v1756
    %2179 = vmatpush1.bf16.msra.mxu0 %v1755
    %2180 = vmatprep.subr.bf16.mxu0 %v1772
    %2181 = vmatpush1.bf16.msra.mxu0 %v1771
    %2182 = vmatprep.subr.bf16.mxu0 %v1788
    %2183 = vmatpush1.bf16.msra.mxu0 %v1787
    %2184 = vmatprep.subr.bf16.mxu0 %v1804
    %2185 = vmatpush1.bf16.msra.mxu0 %v1803
    %2186 = vmatprep.subr.bf16.mxu0 %v1820
    %2187 = vmatpush1.bf16.msra.mxu0 %v1819
    %2188 = vmatprep.subr.bf16.mxu0 %v1836
    %2189 = vmatpush1.bf16.msra.mxu0 %v1835
    %2190 = vmatprep.subr.bf16.mxu0 0
    %2191 = vmatpush1.bf16.msra.mxu0 0
    %2192 = vmatprep.subr.bf16.mxu0 0
    %2193 = vmatpush1.bf16.msra.mxu0 0
    %2194 = vmatprep.subr.bf16.mxu0 0
    %2195 = vmatpush1.bf16.msra.mxu0 0
    %2196 = vmatprep.subr.bf16.mxu0 0
    %2197 = vmatpush1.bf16.msra.mxu0 0
    %2198 = vmatprep.subr.bf16.mxu0 0
    %2199 = vmatpush1.bf16.msra.mxu0 0
    %2200 = vmatprep.subr.bf16.mxu0 0
    %2201 = vmatpush1.bf16.msra.mxu0 0
    %2202 = vmatprep.subr.bf16.mxu0 0
    %2203 = vmatpush1.bf16.msra.mxu0 0
    %2204 = vmatprep.subr.bf16.mxu0 0
    %2205 = vmatpush1.bf16.msra.mxu0 0
    %2206 = vmatprep.mubr.bf16.mxu0 0
    %2207 = vmatmul.mubr.bf16.gmra.mrb[0].mxu0 %v1116
    %v2208 = vpop.f32.mrb[0].mxu0
    %v2209 = vadd.f32 %v1292, %v2208
    %v2210 = vpop.f32.mrb[0].mxu0
    %v2211 = vadd.f32 %v1296, %v2210
    %v2212 = vpop.f32.mrb[0].mxu0
    %v2213 = vpop.f32.mrb[0].mxu0
    %2214 = vdwg.mxu0
    %2215 = vmatprep.subr.bf16.mxu0 %v1726
    %2216 = vmatpush1.bf16.msra.mxu0 %v1725
    %2217 = vmatprep.subr.bf16.mxu0 %v1742
    %2218 = vmatpush1.bf16.msra.mxu0 %v1741
    %2219 = vmatprep.subr.bf16.mxu0 %v1758
    %2220 = vmatpush1.bf16.msra.mxu0 %v1757
    %2221 = vmatprep.subr.bf16.mxu0 %v1774
    %2222 = vmatpush1.bf16.msra.mxu0 %v1773
    %2223 = vmatprep.subr.bf16.mxu0 %v1790
    %2224 = vmatpush1.bf16.msra.mxu0 %v1789
    %2225 = vmatprep.subr.bf16.mxu0 %v1806
    %2226 = vmatpush1.bf16.msra.mxu0 %v1805
    %2227 = vmatprep.subr.bf16.mxu0 %v1822
    %2228 = vmatpush1.bf16.msra.mxu0 %v1821
    %2229 = vmatprep.subr.bf16.mxu0 %v1838
    %2230 = vmatpush1.bf16.msra.mxu0 %v1837
    %2231 = vmatprep.subr.bf16.mxu0 0
    %2232 = vmatpush1.bf16.msra.mxu0 0
    %2233 = vmatprep.subr.bf16.mxu0 0
    %2234 = vmatpush1.bf16.msra.mxu0 0
    %2235 = vmatprep.subr.bf16.mxu0 0
    %2236 = vmatpush1.bf16.msra.mxu0 0
    %2237 = vmatprep.subr.bf16.mxu0 0
    %2238 = vmatpush1.bf16.msra.mxu0 0
    %2239 = vmatprep.subr.bf16.mxu0 0
    %2240 = vmatpush1.bf16.msra.mxu0 0
    %2241 = vmatprep.subr.bf16.mxu0 0
    %2242 = vmatpush1.bf16.msra.mxu0 0
    %2243 = vmatprep.subr.bf16.mxu0 0
    %2244 = vmatpush1.bf16.msra.mxu0 0
    %2245 = vmatprep.subr.bf16.mxu0 0
    %2246 = vmatpush1.bf16.msra.mxu0 0
    %2247 = vmatprep.mubr.bf16.mxu0 0
    %2248 = vmatmul.mubr.bf16.gmra.mrb[0].mxu0 %v1116
    %v2249 = vpop.f32.mrb[0].mxu0
    %v2250 = vadd.f32 %v1300, %v2249
    %v2251 = vpop.f32.mrb[0].mxu0
    %v2252 = vadd.f32 %v1304, %v2251
    %v2253 = vpop.f32.mrb[0].mxu0
    %v2254 = vpop.f32.mrb[0].mxu0
    %2255 = vdwg.mxu0
    %2256 = vmatprep.subr.bf16.mxu0 %v1728
    %2257 = vmatpush1.bf16.msra.mxu0 %v1727
    %2258 = vmatprep.subr.bf16.mxu0 %v1744
    %2259 = vmatpush1.bf16.msra.mxu0 %v1743
    %2260 = vmatprep.subr.bf16.mxu0 %v1760
    %2261 = vmatpush1.bf16.msra.mxu0 %v1759
    %2262 = vmatprep.subr.bf16.mxu0 %v1776
    %2263 = vmatpush1.bf16.msra.mxu0 %v1775
    %2264 = vmatprep.subr.bf16.mxu0 %v1792
    %2265 = vmatpush1.bf16.msra.mxu0 %v1791
    %2266 = vmatprep.subr.bf16.mxu0 %v1808
    %2267 = vmatpush1.bf16.msra.mxu0 %v1807
    %2268 = vmatprep.subr.bf16.mxu0 %v1824
    %2269 = vmatpush1.bf16.msra.mxu0 %v1823
    %2270 = vmatprep.subr.bf16.mxu0 %v1840
    %2271 = vmatpush1.bf16.msra.mxu0 %v1839
    %2272 = vmatprep.subr.bf16.mxu0 0
    %2273 = vmatpush1.bf16.msra.mxu0 0
    %2274 = vmatprep.subr.bf16.mxu0 0
    %2275 = vmatpush1.bf16.msra.mxu0 0
    %2276 = vmatprep.subr.bf16.mxu0 0
    %2277 = vmatpush1.bf16.msra.mxu0 0
    %2278 = vmatprep.subr.bf16.mxu0 0
    %2279 = vmatpush1.bf16.msra.mxu0 0
    %2280 = vmatprep.subr.bf16.mxu0 0
    %2281 = vmatpush1.bf16.msra.mxu0 0
    %2282 = vmatprep.subr.bf16.mxu0 0
    %2283 = vmatpush1.bf16.msra.mxu0 0
    %2284 = vmatprep.subr.bf16.mxu0 0
    %2285 = vmatpush1.bf16.msra.mxu0 0
    %2286 = vmatprep.subr.bf16.mxu0 0
    %2287 = vmatpush1.bf16.msra.mxu0 0
    %2288 = vmatprep.mubr.bf16.mxu0 0
    %2289 = vmatmul.mubr.bf16.gmra.mrb[0].mxu0 %v1116
    %v2290 = vpop.f32.mrb[0].mxu0
    %v2291 = vadd.f32 %v1308, %v2290
    %v2292 = vpop.f32.mrb[0].mxu0
    %v2293 = vadd.f32 %v1312, %v2292
    %v2294 = vpop.f32.mrb[0].mxu0
    %v2295 = vpop.f32.mrb[0].mxu0
    %2296 = vdwg.mxu0
    %v2297 = vpack.c.bf16 %v2004, %v2004
    %v2298 = vpack.c.bf16 %v2006, %v2006
    %v2299 = vpack.c.bf16 %v2045, %v2045
    %v2300 = vpack.c.bf16 %v2047, %v2047
    %v2301 = vpack.c.bf16 %v2086, %v2086
    %v2302 = vpack.c.bf16 %v2088, %v2088
    %v2303 = vpack.c.bf16 %v2127, %v2127
    %v2304 = vpack.c.bf16 %v2129, %v2129
    %v2313 = vcombine.low %v2297, %v2298
    %v2314 = vcombine.low %v2299, %v2300
    %v2315 = vcombine.low %v2301, %v2302
    %v2316 = vcombine.low %v2303, %v2304
    %v2318 = vunpack.c.l.s4 1966171168
    %v2319 = vunpack.c.0.s8 %v2318
    %v2320 = vlaneseq
    %v2321 = vshrl.u32 %v2320, 7
    %v2322 = vsub.s32 %v2319, %v2321
    %v2323 = vrot.slane %v2313, %v2322
    %v2325 = vunpack.c.l.s4 1966171168
    %v2326 = vunpack.c.0.s8 %v2325
    %v2327 = vlaneseq
    %v2328 = vshrl.u32 %v2327, 7
    %v2329 = vsub.s32 %v2326, %v2328
    %v2330 = vrot.slane %v2314, %v2329
    %v2332 = vunpack.c.l.s4 1966171168
    %v2333 = vunpack.c.0.s8 %v2332
    %v2334 = vlaneseq
    %v2335 = vshrl.u32 %v2334, 7
    %v2336 = vsub.s32 %v2333, %v2335
    %v2337 = vrot.slane %v2315, %v2336
    %v2339 = vunpack.c.l.s4 1966171168
    %v2340 = vunpack.c.0.s8 %v2339
    %v2341 = vlaneseq
    %v2342 = vshrl.u32 %v2341, 7
    %v2343 = vsub.s32 %v2340, %v2342
    %v2344 = vrot.slane %v2316, %v2343
    %v2345 = vcombine.low %v2323, %v2330
    %v2346 = vcombine.low %v2337, %v2344
    %v2348 = vunpack.c.l.s4 1966171168
    %v2349 = vunpack.c.0.s8 %v2348
    %v2350 = vlaneseq
    %v2351 = vshrl.u32 %v2350, 7
    %v2352 = vsub.s32 %v2349, %v2351
    %v2353 = vrot.slane %v2345, %v2352
    %v2355 = vunpack.c.l.s4 1966171168
    %v2356 = vunpack.c.0.s8 %v2355
    %v2357 = vlaneseq
    %v2358 = vshrl.u32 %v2357, 7
    %v2359 = vsub.s32 %v2356, %v2358
    %v2360 = vrot.slane %v2346, %v2359
    %v2361 = vcombine.low %v2353, %v2360
    %2363 = vst [vmem:[#allocation15] sm:$0xff] %v2361
    %v2364 = vpack.c.bf16 %v2168, %v2168
    %v2365 = vpack.c.bf16 %v2170, %v2170
    %v2366 = vpack.c.bf16 %v2209, %v2209
    %v2367 = vpack.c.bf16 %v2211, %v2211
    %v2368 = vpack.c.bf16 %v2250, %v2250
    %v2369 = vpack.c.bf16 %v2252, %v2252
    %v2370 = vpack.c.bf16 %v2291, %v2291
    %v2371 = vpack.c.bf16 %v2293, %v2293
    %v2380 = vcombine.low %v2364, %v2365
    %v2381 = vcombine.low %v2366, %v2367
    %v2382 = vcombine.low %v2368, %v2369
    %v2383 = vcombine.low %v2370, %v2371
    %v2385 = vunpack.c.l.s4 1966171168
    %v2386 = vunpack.c.0.s8 %v2385
    %v2387 = vlaneseq
    %v2388 = vshrl.u32 %v2387, 7
    %v2389 = vsub.s32 %v2386, %v2388
    %v2390 = vrot.slane %v2380, %v2389
    %v2392 = vunpack.c.l.s4 1966171168
    %v2393 = vunpack.c.0.s8 %v2392
    %v2394 = vlaneseq
    %v2395 = vshrl.u32 %v2394, 7
    %v2396 = vsub.s32 %v2393, %v2395
    %v2397 = vrot.slane %v2381, %v2396
    %v2399 = vunpack.c.l.s4 1966171168
    %v2400 = vunpack.c.0.s8 %v2399
    %v2401 = vlaneseq
    %v2402 = vshrl.u32 %v2401, 7
    %v2403 = vsub.s32 %v2400, %v2402
    %v2404 = vrot.slane %v2382, %v2403
    %v2406 = vunpack.c.l.s4 1966171168
    %v2407 = vunpack.c.0.s8 %v2406
    %v2408 = vlaneseq
    %v2409 = vshrl.u32 %v2408, 7
    %v2410 = vsub.s32 %v2407, %v2409
    %v2411 = vrot.slane %v2383, %v2410
    %v2412 = vcombine.low %v2390, %v2397
    %v2413 = vcombine.low %v2404, %v2411
    %v2415 = vunpack.c.l.s4 1966171168
    %v2416 = vunpack.c.0.s8 %v2415
    %v2417 = vlaneseq
    %v2418 = vshrl.u32 %v2417, 7
    %v2419 = vsub.s32 %v2416, %v2418
    %v2420 = vrot.slane %v2412, %v2419
    %v2422 = vunpack.c.l.s4 1966171168
    %v2423 = vunpack.c.0.s8 %v2422
    %v2424 = vlaneseq
    %v2425 = vshrl.u32 %v2424, 7
    %v2426 = vsub.s32 %v2423, %v2425
    %v2427 = vrot.slane %v2413, %v2426
    %v2428 = vcombine.low %v2420, %v2427
    %2430 = vst [vmem:[#allocation17] sm:$0xff] %v2428
    // Predicated region
    $region62: #{tpu_custom_call.1} parent=1 // pred_check
      _
    $region63: #{tpu_custom_call.1} parent=1 // pred_check_branch
      %2432 = sbr.rel (0) target = $region65
    $region64: #{tpu_custom_call.1} parent=1 // pred_region
      %s2434 = ssub.s32 32, 32
      %2435 = vsyncadd [#allocation4], %s2434
      %s2437 = sshll.u32 [#allocation11], 4
      %s2438 = int_to_ptr.vmem [resolvable:$true] %s2437
      %2440 = dma.vmem_to_hbm [thread:$0]  %s2438, 32, %s10, [#allocation4]
    $region65: #{tpu_custom_call.1} parent=1 // pred_fallthru
      _
    // Predicated region
    $region66: #{tpu_custom_call.1} parent=1 // pred_check
      _
    $region67: #{tpu_custom_call.1} parent=1 // pred_check_branch
      %2442 = sbr.rel (0) target = $region69
    $region68: #{tpu_custom_call.1} parent=1 // pred_region
      %s2444 = ssub.s32 32, 32
      %2445 = vsyncadd [#allocation13], %s2444
      %s2447 = sshll.u32 [#allocation12], 4
      %s2448 = int_to_ptr.vmem [resolvable:$true] %s2447
      %2450 = dma.vmem_to_hbm [thread:$0]  %s2448, 32, %s11, [#allocation13]
    $region69: #{tpu_custom_call.1} parent=1 // pred_fallthru
      _
    // Predicated region
    $region70: #{tpu_custom_call.1} parent=1 // pred_check
      _
    $region71: #{tpu_custom_call.1} parent=1 // pred_check_branch
      %2452 = sbr.rel (0) target = $region73
    $region72: #{tpu_custom_call.1} parent=1 // pred_region
      %s2454 = ssub.s32 32, 32
      %2455 = vsyncadd [#allocation13], %s2454
      %s2457 = sshll.u32 [#allocation14], 4
      %s2458 = int_to_ptr.vmem [resolvable:$true] %s2457
      %2460 = dma.vmem_to_hbm [thread:$0]  %s2458, 32, %s12, [#allocation13]
    $region73: #{tpu_custom_call.1} parent=1 // pred_fallthru
      _
    // Predicated region
    $region74: #{tpu_custom_call.1} parent=1 // pred_check
      _
    $region75: #{tpu_custom_call.1} parent=1 // pred_check_branch
      %2462 = sbr.rel (0) target = $region77
    $region76: #{tpu_custom_call.1} parent=1 // pred_region
      %s2464 = ssub.s32 128, 128
      %2465 = vsyncadd [#allocation16], %s2464
      %s2467 = sshll.u32 [#allocation15], 4
      %s2468 = int_to_ptr.vmem [resolvable:$true] %s2467
      %2470 = dma.vmem_to_hbm [thread:$0]  %s2468, 128, %s13, [#allocation16]
    $region77: #{tpu_custom_call.1} parent=1 // pred_fallthru
      _
    // Predicated region
    $region78: #{tpu_custom_call.1} parent=1 // pred_check
      _
    $region79: #{tpu_custom_call.1} parent=1 // pred_check_branch
      %2472 = sbr.rel (0) target = $region81
    $region80: #{tpu_custom_call.1} parent=1 // pred_region
      %s2474 = ssub.s32 128, 128
      %2475 = vsyncadd [#allocation16], %s2474
      %s2477 = sshll.u32 [#allocation17], 4
      %s2478 = int_to_ptr.vmem [resolvable:$true] %s2477
      %2480 = dma.vmem_to_hbm [thread:$0]  %s2478, 128, %s14, [#allocation16]
    $region81: #{tpu_custom_call.1} parent=1 // pred_fallthru
      _
    // Predicated region
    $region82: #{tpu_custom_call.1} parent=1 // pred_check
      _
    $region83: #{tpu_custom_call.1} parent=1 // pred_check_branch
      %2482 = sbr.rel (0) target = $region85
    $region84: #{tpu_custom_call.1} parent=1 // pred_region
      %2483 = dma.done [#allocation4], 32
    $region85: #{tpu_custom_call.1} parent=1 // pred_fallthru
      _
    // Predicated region
    $region86: #{tpu_custom_call.1} parent=1 // pred_check
      _
    $region87: #{tpu_custom_call.1} parent=1 // pred_check_branch
      %2485 = sbr.rel (0) target = $region89
    $region88: #{tpu_custom_call.1} parent=1 // pred_region
      %2486 = dma.done [#allocation13], 32
    $region89: #{tpu_custom_call.1} parent=1 // pred_fallthru
      _
    // Predicated region
    $region90: #{tpu_custom_call.1} parent=1 // pred_check
      _
    $region91: #{tpu_custom_call.1} parent=1 // pred_check_branch
      %2488 = sbr.rel (0) target = $region93
    $region92: #{tpu_custom_call.1} parent=1 // pred_region
      %2489 = dma.done [#allocation13], 32
    $region93: #{tpu_custom_call.1} parent=1 // pred_fallthru
      _
    // Predicated region
    $region94: #{tpu_custom_call.1} parent=1 // pred_check
      _
    $region95: #{tpu_custom_call.1} parent=1 // pred_check_branch
      %2491 = sbr.rel (0) target = $region97
    $region96: #{tpu_custom_call.1} parent=1 // pred_region
      %2492 = dma.done [#allocation16], 128
    $region97: #{tpu_custom_call.1} parent=1 // pred_fallthru
      _
    // Predicated region
    $region98: #{tpu_custom_call.1} parent=1 // pred_check
      _
    $region99: #{tpu_custom_call.1} parent=1 // pred_check_branch
      %2494 = sbr.rel (0) target = $region101
    $region100: #{tpu_custom_call.1} parent=1 // pred_region
      %2495 = dma.done [#allocation16], 128
    $region101: #{tpu_custom_call.1} parent=1 // pred_fallthru
      _
    %2496 = vsyncpa [#allocation3], 1
    %2497 = vsyncpa [#allocation6], 1
    %2498 = vsyncpa [#allocation9], 1
    %2499 = vsyncpa [#allocation4], 1
    %2500 = vsyncpa [#allocation13], 1
    %2501 = vsyncpa [#allocation16], 1

// kernel: tpu_custom_call.1
$region0: #{tpu_custom_call.1}
  #allocation0 [shape = 'u32[]', space=smem, size = 0x4, offset = 0x4, fixed_abs, tag = 'smem constant byte address 0x4 - core index']
  #allocation1 [shape = 'u32[144,128]{1,0:T(1,128)}', space=vmem, size = 0x12000, scoped, tag = 'internal scratch']
  %s0 = inlined_call_operand.hbm [shape: f32[2,1024], index: 0, kind: input, shape index: {}]
  %s1 = inlined_call_operand.vmem [shape: f32[2,128], index: 1, kind: input, shape index: {}]
  %s2 = inlined_call_operand.hbm [shape: bf16[1024,128], index: 2, kind: input, shape index: {}]
  %s3 = inlined_call_operand.vmem [shape: f32[1,128], index: 3, kind: input, shape index: {}]
  %s4 = inlined_call_operand.hbm [shape: bf16[128,256], index: 4, kind: input, shape index: {}]
  %s5 = inlined_call_operand.vmem [shape: f32[1,256], index: 5, kind: input, shape index: {}]
  %s6 = inlined_call_operand.hbm [shape: bf16[128,128], index: 6, kind: input, shape index: {}]
  %s7 = inlined_call_operand.vmem [shape: f32[1,128], index: 7, kind: input, shape index: {}]
  %s8 = inlined_call_operand.hbm [shape: bf16[128,2048], index: 8, kind: input, shape index: {}]
  %s9 = inlined_call_operand.vmem [shape: f32[1,2048], index: 9, kind: input, shape index: {}]
  %s10 = inlined_call_operand.hbm [shape: f32[2,128], index: 10, kind: output, shape index: {0}]
  %s11 = inlined_call_operand.hbm [shape: f32[2,128], index: 11, kind: output, shape index: {1}]
  %s12 = inlined_call_operand.hbm [shape: f32[2,128], index: 12, kind: output, shape index: {2}]
  %s13 = inlined_call_operand.hbm [shape: bf16[2,1024], index: 13, kind: output, shape index: {3}]
  %s14 = inlined_call_operand.hbm [shape: bf16[2,1024], index: 14, kind: output, shape index: {4}]
  %15 = xla_tuple %s10, %s11, %s12, %s13, %s14
  %s16 = sld [smem:[#allocation0]]
  $region102: #{tpu_custom_call.1} parent=0
    _
  %s18 = ssub.s32 1, %s16
  %s19 = scalar_select 0, %s18, %s16
  $region1: #{tpu_custom_call.1} parent=0
    #allocation2 [shape = 'u8[8192]{0}', space=vmem, size = 0x2000, scoped, tag = 'input window, operand 0, single buffered']
    #allocation3 [shape = 's32[1]{0}', space=sflag, size = 0x4, scoped, tag = 'scoped memory for tpu_custom_call.1']
    #allocation4 [shape = 's32[1]{0}', space=sflag, size = 0x4, scoped, tag = 'scoped memory for tpu_custom_call.1']
    #allocation5 [shape = 'u8[262144]{0}', space=vmem, size = 0x40000, scoped, tag = 'input window, operand 2, single buffered']
    #allocation6 [shape = 's32[1]{0}', space=sflag, size = 0x4, scoped, tag = 'scoped memory for tpu_custom_call.1']
    #allocation7 [shape = 'u8[65536]{0}', space=vmem, size = 0x10000, scoped, tag = 'input window, operand 4, single buffered']
    #allocation8 [shape = 'u8[32768]{0}', space=vmem, size = 0x8000, scoped, tag = 'input window, operand 6, single buffered']
    #allocation9 [shape = 's32[1]{0}', space=sflag, size = 0x4, scoped, tag = 'scoped memory for tpu_custom_call.1']
    #allocation10 [shape = 'u8[524288]{0}', space=vmem, size = 0x80000, scoped, tag = 'input window, operand 8, single buffered']
    #allocation11 [shape = 'u8[1024]{0}', space=vmem, size = 0x400, scoped, tag = 'output window, operand 0, single buffered']
    #allocation12 [shape = 'u8[1024]{0}', space=vmem, size = 0x400, scoped, tag = 'output window, operand 1, single buffered']
    #allocation13 [shape = 's32[1]{0}', space=sflag, size = 0x4, scoped, tag = 'scoped memory for tpu_custom_call.1']
    #allocation14 [shape = 'u8[1024]{0}', space=vmem, size = 0x400, scoped, tag = 'output window, operand 2, single buffered']
    #allocation15 [shape = 'u8[4096]{0}', space=vmem, size = 0x1000, scoped, tag = 'output window, operand 3, single buffered']
    #allocation16 [shape = 's32[1]{0}', space=sflag, size = 0x4, scoped, tag = 'scoped memory for tpu_custom_call.1']
    #allocation17 [shape = 'u8[4096]{0}', space=vmem, size = 0x1000, scoped, tag = 'output window, operand 4, single buffered']
    %20 = vsyncpa [#allocation3], 0
    %21 = vsyncpa [#allocation6], 0
    %22 = vsyncpa [#allocation9], 0
    %23 = vsyncpa [#allocation4], 0
    %24 = vsyncpa [#allocation13], 0
    %25 = vsyncpa [#allocation16], 0
    // Predicated region
    $region2: #{tpu_custom_call.1} parent=1 // pred_check
      _
    $region3: #{tpu_custom_call.1} parent=1 // pred_check_branch
      %27 = sbr.rel (0) target = $region5
    $region4: #{tpu_custom_call.1} parent=1 // pred_region
      %s29 = ssub.s32 256, 256
      %30 = vsyncadd [#allocation3], %s29
      %s32 = sshll.u32 [#allocation2], 4
      %s33 = int_to_ptr.vmem [resolvable:$true] %s32
      %35 = dma.hbm_to_vmem [thread:$0]  %s0, 256, %s33, [#allocation3]
    $region5: #{tpu_custom_call.1} parent=1 // pred_fallthru
      _
    // Predicated region
    $region6: #{tpu_custom_call.1} parent=1 // pred_check
      _
    $region7: #{tpu_custom_call.1} parent=1 // pred_check_branch
      %37 = sbr.rel (0) target = $region9
    $region8: #{tpu_custom_call.1} parent=1 // pred_region
      _
    $region9: #{tpu_custom_call.1} parent=1 // pred_fallthru
      _
    // Predicated region
    $region10: #{tpu_custom_call.1} parent=1 // pred_check
      _
    $region11: #{tpu_custom_call.1} parent=1 // pred_check_branch
      %39 = sbr.rel (0) target = $region13
    $region12: #{tpu_custom_call.1} parent=1 // pred_region
      %s41 = ssub.s32 8192, 8192
      %42 = vsyncadd [#allocation6], %s41
      %s43 = sshll.u32 [#allocation5], 4
      %s44 = int_to_ptr.vmem [resolvable:$true] %s43
      %49 = dma.hbm_to_vmem [thread:$0]  %s2, 8192, %s44, [#allocation6], 64, 64, 4
    $region13: #{tpu_custom_call.1} parent=1 // pred_fallthru
      _
    // Predicated region
    $region14: #{tpu_custom_call.1} parent=1 // pred_check
      _
    $region15: #{tpu_custom_call.1} parent=1 // pred_check_branch
      %51 = sbr.rel (0) target = $region17
    $region16: #{tpu_custom_call.1} parent=1 // pred_region
      _
    $region17: #{tpu_custom_call.1} parent=1 // pred_fallthru
      _
    // Predicated region
    $region18: #{tpu_custom_call.1} parent=1 // pred_check
      _
    $region19: #{tpu_custom_call.1} parent=1 // pred_check_branch
      %53 = sbr.rel (0) target = $region21
    $region20: #{tpu_custom_call.1} parent=1 // pred_region
      %s55 = ssub.s32 2048, 2048
      %56 = vsyncadd [#allocation6], %s55
      %s57 = sshll.u32 [#allocation7], 4
      %s58 = int_to_ptr.vmem [resolvable:$true] %s57
      %63 = dma.hbm_to_vmem [thread:$0]  %s4, 2048, %s58, [#allocation6], 128, 128, 8
    $region21: #{tpu_custom_call.1} parent=1 // pred_fallthru
      _
    // Predicated region
    $region22: #{tpu_custom_call.1} parent=1 // pred_check
      _
    $region23: #{tpu_custom_call.1} parent=1 // pred_check_branch
      %65 = sbr.rel (0) target = $region25
    $region24: #{tpu_custom_call.1} parent=1 // pred_region
      _
    $region25: #{tpu_custom_call.1} parent=1 // pred_fallthru
      _
    // Predicated region
    $region26: #{tpu_custom_call.1} parent=1 // pred_check
      _
    $region27: #{tpu_custom_call.1} parent=1 // pred_check_branch
      %67 = sbr.rel (0) target = $region29
    $region28: #{tpu_custom_call.1} parent=1 // pred_region
      %s69 = ssub.s32 1024, 1024
      %70 = vsyncadd [#allocation9], %s69
      %s71 = sshll.u32 [#allocation8], 4
      %s72 = int_to_ptr.vmem [resolvable:$true] %s71
      %77 = dma.hbm_to_vmem [thread:$0]  %s6, 1024, %s72, [#allocation9], 64, 64, 4
    $region29: #{tpu_custom_call.1} parent=1 // pred_fallthru
      _
    // Predicated region
    $region30: #{tpu_custom_call.1} parent=1 // pred_check
      _
    $region31: #{tpu_custom_call.1} parent=1 // pred_check_branch
      %79 = sbr.rel (0) target = $region33
    $region32: #{tpu_custom_call.1} parent=1 // pred_region
      _
    $region33: #{tpu_custom_call.1} parent=1 // pred_fallthru
      _
    // Predicated region
    $region34: #{tpu_custom_call.1} parent=1 // pred_check
      _
    $region35: #{tpu_custom_call.1} parent=1 // pred_check_branch
      %81 = sbr.rel (0) target = $region37
    $region36: #{tpu_custom_call.1} parent=1 // pred_region
      %s83 = ssub.s32 16384, 16384
      %84 = vsyncadd [#allocation9], %s83
      %s85 = sshll.u32 [#allocation10], 4
      %s86 = int_to_ptr.vmem [resolvable:$true] %s85
      %91 = dma.hbm_to_vmem [thread:$0]  %s8, 16384, %s86, [#allocation9], 1024, 1024, 64
    $region37: #{tpu_custom_call.1} parent=1 // pred_fallthru
      _
    // Predicated region
    $region38: #{tpu_custom_call.1} parent=1 // pred_check
      _
    $region39: #{tpu_custom_call.1} parent=1 // pred_check_branch
      %93 = sbr.rel (0) target = $region41
    $region40: #{tpu_custom_call.1} parent=1 // pred_region
      _
    $region41: #{tpu_custom_call.1} parent=1 // pred_fallthru
      _
    // Predicated region
    $region42: #{tpu_custom_call.1} parent=1 // pred_check
      _
    $region43: #{tpu_custom_call.1} parent=1 // pred_check_branch
      %95 = sbr.rel (0) target = $region45
    $region44: #{tpu_custom_call.1} parent=1 // pred_region
      %96 = dma.done [#allocation3], 256
    $region45: #{tpu_custom_call.1} parent=1 // pred_fallthru
      _
    // Predicated region
    $region46: #{tpu_custom_call.1} parent=1 // pred_check
      _
    $region47: #{tpu_custom_call.1} parent=1 // pred_check_branch
      %98 = sbr.rel (0) target = $region49
    $region48: #{tpu_custom_call.1} parent=1 // pred_region
      %99 = dma.done [#allocation6], 8192
    $region49: #{tpu_custom_call.1} parent=1 // pred_fallthru
      _
    // Predicated region
    $region50: #{tpu_custom_call.1} parent=1 // pred_check
      _
    $region51: #{tpu_custom_call.1} parent=1 // pred_check_branch
      %101 = sbr.rel (0) target = $region53
    $region52: #{tpu_custom_call.1} parent=1 // pred_region
      %102 = dma.done [#allocation6], 2048
    $region53: #{tpu_custom_call.1} parent=1 // pred_fallthru
      _
    // Predicated region
    $region54: #{tpu_custom_call.1} parent=1 // pred_check
      _
    $region55: #{tpu_custom_call.1} parent=1 // pred_check_branch
      %104 = sbr.rel (0) target = $region57
    $region56: #{tpu_custom_call.1} parent=1 // pred_region
      %105 = dma.done [#allocation9], 1024
    $region57: #{tpu_custom_call.1} parent=1 // pred_fallthru
      _
    // Predicated region
    $region58: #{tpu_custom_call.1} parent=1 // pred_check
      _
    $region59: #{tpu_custom_call.1} parent=1 // pred_check_branch
      %107 = sbr.rel (0) target = $region61
    $region60: #{tpu_custom_call.1} parent=1 // pred_region
      %108 = dma.done [#allocation9], 16384
    $region61: #{tpu_custom_call.1} parent=1 // pred_fallthru
      _
    %v110 = vld [vmem:[#allocation2] sm:$0xff]
    %v111 = vld [vmem:[#allocation2 + $0x8] sm:$0xff]
    %v114 = vcombine.high %v110, %v110
    %v116 = vunpack.c.l.s4 1983009808
    %v117 = vunpack.c.0.s8 %v116
    %v118 = vlaneseq
    %v119 = vshrl.u32 %v118, 7
    %v120 = vsub.s32 %v117, %v119
    %v121 = vrot.slane %v110, %v120
    %v123 = vunpack.c.l.s4 1983009808
    %v124 = vunpack.c.0.s8 %v123
    %v125 = vlaneseq
    %v126 = vshrl.u32 %v125, 7
    %v127 = vsub.s32 %v124, %v126
    %v128 = vrot.slane %v114, %v127
    %v129 = vcombine.high %v121, %v121
    %v130 = vcombine.high %v128, %v128
    %v131 = vcombine.high %v111, %v111
    %v133 = vunpack.c.l.s4 1983009808
    %v134 = vunpack.c.0.s8 %v133
    %v135 = vlaneseq
    %v136 = vshrl.u32 %v135, 7
    %v137 = vsub.s32 %v134, %v136
    %v138 = vrot.slane %v111, %v137
    %v140 = vunpack.c.l.s4 1983009808
    %v141 = vunpack.c.0.s8 %v140
    %v142 = vlaneseq
    %v143 = vshrl.u32 %v142, 7
    %v144 = vsub.s32 %v141, %v143
    %v145 = vrot.slane %v131, %v144
    %v146 = vcombine.high %v138, %v138
    %v147 = vcombine.high %v145, %v145
    %v156 = vpack.c.bf16 %v121, %v121
    %v157 = vpack.c.bf16 %v129, %v129
    %v158 = vpack.c.bf16 %v128, %v128
    %v159 = vpack.c.bf16 %v130, %v130
    %v160 = vpack.c.bf16 %v138, %v138
    %v161 = vpack.c.bf16 %v146, %v146
    %v162 = vpack.c.bf16 %v145, %v145
    %v163 = vpack.c.bf16 %v147, %v147
    %v164 = vld [vmem:[#allocation5] sm:$0xf]
    %v165 = vld [vmem:[#allocation5 + $0x4] sm:$0xf]
    %v166 = vld [vmem:[#allocation5 + $0x8] sm:$0xf]
    %v167 = vld [vmem:[#allocation5 + $0xc] sm:$0xf]
    %v168 = vld [vmem:[#allocation5 + $0x10] sm:$0xf]
    %v169 = vld [vmem:[#allocation5 + $0x14] sm:$0xf]
    %v170 = vld [vmem:[#allocation5 + $0x18] sm:$0xf]
    %v171 = vld [vmem:[#allocation5 + $0x1c] sm:$0xf]
    %v172 = vld [vmem:[#allocation5 + $0x20] sm:$0xf]
    %v173 = vld [vmem:[#allocation5 + $0x24] sm:$0xf]
    %v174 = vld [vmem:[#allocation5 + $0x28] sm:$0xf]
    %v175 = vld [vmem:[#allocation5 + $0x2c] sm:$0xf]
    %v176 = vld [vmem:[#allocation5 + $0x30] sm:$0xf]
    %v177 = vld [vmem:[#allocation5 + $0x34] sm:$0xf]
    %v178 = vld [vmem:[#allocation5 + $0x38] sm:$0xf]
    %v179 = vld [vmem:[#allocation5 + $0x3c] sm:$0xf]
    %v180 = vld [vmem:[#allocation5 + $0x40] sm:$0xf]
    %v181 = vld [vmem:[#allocation5 + $0x44] sm:$0xf]
    %v182 = vld [vmem:[#allocation5 + $0x48] sm:$0xf]
    %v183 = vld [vmem:[#allocation5 + $0x4c] sm:$0xf]
    %v184 = vld [vmem:[#allocation5 + $0x50] sm:$0xf]
    %v185 = vld [vmem:[#allocation5 + $0x54] sm:$0xf]
    %v186 = vld [vmem:[#allocation5 + $0x58] sm:$0xf]
    %v187 = vld [vmem:[#allocation5 + $0x5c] sm:$0xf]
    %v188 = vld [vmem:[#allocation5 + $0x60] sm:$0xf]
    %v189 = vld [vmem:[#allocation5 + $0x64] sm:$0xf]
    %v190 = vld [vmem:[#allocation5 + $0x68] sm:$0xf]
    %v191 = vld [vmem:[#allocation5 + $0x6c] sm:$0xf]
    %v192 = vld [vmem:[#allocation5 + $0x70] sm:$0xf]
    %v193 = vld [vmem:[#allocation5 + $0x74] sm:$0xf]
    %v194 = vld [vmem:[#allocation5 + $0x78] sm:$0xf]
    %v195 = vld [vmem:[#allocation5 + $0x7c] sm:$0xf]
    %v196 = vld [vmem:[#allocation5 + $0x80] sm:$0xf]
    %v197 = vld [vmem:[#allocation5 + $0x84] sm:$0xf]
    %v198 = vld [vmem:[#allocation5 + $0x88] sm:$0xf]
    %v199 = vld [vmem:[#allocation5 + $0x8c] sm:$0xf]
    %v200 = vld [vmem:[#allocation5 + $0x90] sm:$0xf]
    %v201 = vld [vmem:[#allocation5 + $0x94] sm:$0xf]
    %v202 = vld [vmem:[#allocation5 + $0x98] sm:$0xf]
    %v203 = vld [vmem:[#allocation5 + $0x9c] sm:$0xf]
    %v204 = vld [vmem:[#allocation5 + $0xa0] sm:$0xf]
    %v205 = vld [vmem:[#allocation5 + $0xa4] sm:$0xf]
    %v206 = vld [vmem:[#allocation5 + $0xa8] sm:$0xf]
    %v207 = vld [vmem:[#allocation5 + $0xac] sm:$0xf]
    %v208 = vld [vmem:[#allocation5 + $0xb0] sm:$0xf]
    %v209 = vld [vmem:[#allocation5 + $0xb4] sm:$0xf]
    %v210 = vld [vmem:[#allocation5 + $0xb8] sm:$0xf]
    %v211 = vld [vmem:[#allocation5 + $0xbc] sm:$0xf]
    %v212 = vld [vmem:[#allocation5 + $0xc0] sm:$0xf]
    %v213 = vld [vmem:[#allocation5 + $0xc4] sm:$0xf]
    %v214 = vld [vmem:[#allocation5 + $0xc8] sm:$0xf]
    %v215 = vld [vmem:[#allocation5 + $0xcc] sm:$0xf]
    %v216 = vld [vmem:[#allocation5 + $0xd0] sm:$0xf]
    %v217 = vld [vmem:[#allocation5 + $0xd4] sm:$0xf]
    %v218 = vld [vmem:[#allocation5 + $0xd8] sm:$0xf]
    %v219 = vld [vmem:[#allocation5 + $0xdc] sm:$0xf]
    %v220 = vld [vmem:[#allocation5 + $0xe0] sm:$0xf]
    %v221 = vld [vmem:[#allocation5 + $0xe4] sm:$0xf]
    %v222 = vld [vmem:[#allocation5 + $0xe8] sm:$0xf]
    %v223 = vld [vmem:[#allocation5 + $0xec] sm:$0xf]
    %v224 = vld [vmem:[#allocation5 + $0xf0] sm:$0xf]
    %v225 = vld [vmem:[#allocation5 + $0xf4] sm:$0xf]
    %v226 = vld [vmem:[#allocation5 + $0xf8] sm:$0xf]
    %v227 = vld [vmem:[#allocation5 + $0xfc] sm:$0xf]
    %v228 = vld [vmem:[#allocation5 + $0x100] sm:$0xf]
    %v229 = vld [vmem:[#allocation5 + $0x104] sm:$0xf]
    %v230 = vld [vmem:[#allocation5 + $0x108] sm:$0xf]
    %v231 = vld [vmem:[#allocation5 + $0x10c] sm:$0xf]
    %v232 = vld [vmem:[#allocation5 + $0x110] sm:$0xf]
    %v233 = vld [vmem:[#allocation5 + $0x114] sm:$0xf]
    %v234 = vld [vmem:[#allocation5 + $0x118] sm:$0xf]
    %v235 = vld [vmem:[#allocation5 + $0x11c] sm:$0xf]
    %v236 = vld [vmem:[#allocation5 + $0x120] sm:$0xf]
    %v237 = vld [vmem:[#allocation5 + $0x124] sm:$0xf]
    %v238 = vld [vmem:[#allocation5 + $0x128] sm:$0xf]
    %v239 = vld [vmem:[#allocation5 + $0x12c] sm:$0xf]
    %v240 = vld [vmem:[#allocation5 + $0x130] sm:$0xf]
    %v241 = vld [vmem:[#allocation5 + $0x134] sm:$0xf]
    %v242 = vld [vmem:[#allocation5 + $0x138] sm:$0xf]
    %v243 = vld [vmem:[#allocation5 + $0x13c] sm:$0xf]
    %v244 = vld [vmem:[#allocation5 + $0x140] sm:$0xf]
    %v245 = vld [vmem:[#allocation5 + $0x144] sm:$0xf]
    %v246 = vld [vmem:[#allocation5 + $0x148] sm:$0xf]
    %v247 = vld [vmem:[#allocation5 + $0x14c] sm:$0xf]
    %v248 = vld [vmem:[#allocation5 + $0x150] sm:$0xf]
    %v249 = vld [vmem:[#allocation5 + $0x154] sm:$0xf]
    %v250 = vld [vmem:[#allocation5 + $0x158] sm:$0xf]
    %v251 = vld [vmem:[#allocation5 + $0x15c] sm:$0xf]
    %v252 = vld [vmem:[#allocation5 + $0x160] sm:$0xf]
    %v253 = vld [vmem:[#allocation5 + $0x164] sm:$0xf]
    %v254 = vld [vmem:[#allocation5 + $0x168] sm:$0xf]
    %v255 = vld [vmem:[#allocation5 + $0x16c] sm:$0xf]
    %v256 = vld [vmem:[#allocation5 + $0x170] sm:$0xf]
    %v257 = vld [vmem:[#allocation5 + $0x174] sm:$0xf]
    %v258 = vld [vmem:[#allocation5 + $0x178] sm:$0xf]
    %v259 = vld [vmem:[#allocation5 + $0x17c] sm:$0xf]
    %v260 = vld [vmem:[#allocation5 + $0x180] sm:$0xf]
    %v261 = vld [vmem:[#allocation5 + $0x184] sm:$0xf]
    %v262 = vld [vmem:[#allocation5 + $0x188] sm:$0xf]
    %v263 = vld [vmem:[#allocation5 + $0x18c] sm:$0xf]
    %v264 = vld [vmem:[#allocation5 + $0x190] sm:$0xf]
    %v265 = vld [vmem:[#allocation5 + $0x194] sm:$0xf]
    %v266 = vld [vmem:[#allocation5 + $0x198] sm:$0xf]
    %v267 = vld [vmem:[#allocation5 + $0x19c] sm:$0xf]
    %v268 = vld [vmem:[#allocation5 + $0x1a0] sm:$0xf]
    %v269 = vld [vmem:[#allocation5 + $0x1a4] sm:$0xf]
    %v270 = vld [vmem:[#allocation5 + $0x1a8] sm:$0xf]
    %v271 = vld [vmem:[#allocation5 + $0x1ac] sm:$0xf]
    %v272 = vld [vmem:[#allocation5 + $0x1b0] sm:$0xf]
    %v273 = vld [vmem:[#allocation5 + $0x1b4] sm:$0xf]
    %v274 = vld [vmem:[#allocation5 + $0x1b8] sm:$0xf]
    %v275 = vld [vmem:[#allocation5 + $0x1bc] sm:$0xf]
    %v276 = vld [vmem:[#allocation5 + $0x1c0] sm:$0xf]
    %v277 = vld [vmem:[#allocation5 + $0x1c4] sm:$0xf]
    %v278 = vld [vmem:[#allocation5 + $0x1c8] sm:$0xf]
    %v279 = vld [vmem:[#allocation5 + $0x1cc] sm:$0xf]
    %v280 = vld [vmem:[#allocation5 + $0x1d0] sm:$0xf]
    %v281 = vld [vmem:[#allocation5 + $0x1d4] sm:$0xf]
    %v282 = vld [vmem:[#allocation5 + $0x1d8] sm:$0xf]
    %v283 = vld [vmem:[#allocation5 + $0x1dc] sm:$0xf]
    %v284 = vld [vmem:[#allocation5 + $0x1e0] sm:$0xf]
    %v285 = vld [vmem:[#allocation5 + $0x1e4] sm:$0xf]
    %v286 = vld [vmem:[#allocation5 + $0x1e8] sm:$0xf]
    %v287 = vld [vmem:[#allocation5 + $0x1ec] sm:$0xf]
    %v288 = vld [vmem:[#allocation5 + $0x1f0] sm:$0xf]
    %v289 = vld [vmem:[#allocation5 + $0x1f4] sm:$0xf]
    %v290 = vld [vmem:[#allocation5 + $0x1f8] sm:$0xf]
    %v291 = vld [vmem:[#allocation5 + $0x1fc] sm:$0xf]
    %v292 = vld [vmem:[%s3] sm:$0x1]
    %v294 = vlaneseq
    %v295 = vshrl.u32 %v294, 7
    %v296 = vsub.s32 0, %v295
    %v297 = vrot.slane %v292, %v296
    %v427 = vunpack.c.l.b16 %v164
    %v428 = vunpack.c.l.b16 %v165
    %v429 = vunpack.c.l.b16 %v166
    %v430 = vunpack.c.l.b16 %v167
    %v431 = vunpack.c.l.b16 %v168
    %v432 = vunpack.c.l.b16 %v169
    %v433 = vunpack.c.l.b16 %v170
    %v434 = vunpack.c.l.b16 %v171
    %v435 = vunpack.c.l.b16 %v172
    %v436 = vunpack.c.l.b16 %v173
    %v437 = vunpack.c.l.b16 %v174
    %v438 = vunpack.c.l.b16 %v175
    %v439 = vunpack.c.l.b16 %v176
    %v440 = vunpack.c.l.b16 %v177
    %v441 = vunpack.c.l.b16 %v178
    %v442 = vunpack.c.l.b16 %v179
    %v443 = vunpack.c.l.b16 %v180
    %v444 = vunpack.c.l.b16 %v181
    %v445 = vunpack.c.l.b16 %v182
    %v446 = vunpack.c.l.b16 %v183
    %v447 = vunpack.c.l.b16 %v184
    %v448 = vunpack.c.l.b16 %v185
    %v449 = vunpack.c.l.b16 %v186
    %v450 = vunpack.c.l.b16 %v187
    %v451 = vunpack.c.l.b16 %v188
    %v452 = vunpack.c.l.b16 %v189
    %v453 = vunpack.c.l.b16 %v190
    %v454 = vunpack.c.l.b16 %v191
    %v455 = vunpack.c.l.b16 %v192
    %v456 = vunpack.c.l.b16 %v193
    %v457 = vunpack.c.l.b16 %v194
    %v458 = vunpack.c.l.b16 %v195
    %v459 = vunpack.c.l.b16 %v196
    %v460 = vunpack.c.l.b16 %v197
    %v461 = vunpack.c.l.b16 %v198
    %v462 = vunpack.c.l.b16 %v199
    %v463 = vunpack.c.l.b16 %v200
    %v464 = vunpack.c.l.b16 %v201
    %v465 = vunpack.c.l.b16 %v202
    %v466 = vunpack.c.l.b16 %v203
    %v467 = vunpack.c.l.b16 %v204
    %v468 = vunpack.c.l.b16 %v205
    %v469 = vunpack.c.l.b16 %v206
    %v470 = vunpack.c.l.b16 %v207
    %v471 = vunpack.c.l.b16 %v208
    %v472 = vunpack.c.l.b16 %v209
    %v473 = vunpack.c.l.b16 %v210
    %v474 = vunpack.c.l.b16 %v211
    %v475 = vunpack.c.l.b16 %v212
    %v476 = vunpack.c.l.b16 %v213
    %v477 = vunpack.c.l.b16 %v214
    %v478 = vunpack.c.l.b16 %v215
    %v479 = vunpack.c.l.b16 %v216
    %v480 = vunpack.c.l.b16 %v217
    %v481 = vunpack.c.l.b16 %v218
    %v482 = vunpack.c.l.b16 %v219
    %v483 = vunpack.c.l.b16 %v220
    %v484 = vunpack.c.l.b16 %v221
    %v485 = vunpack.c.l.b16 %v222
    %v486 = vunpack.c.l.b16 %v223
    %v487 = vunpack.c.l.b16 %v224
    %v488 = vunpack.c.l.b16 %v225
    %v489 = vunpack.c.l.b16 %v226
    %v490 = vunpack.c.l.b16 %v227
    %v491 = vunpack.c.l.b16 %v228
    %v492 = vunpack.c.l.b16 %v229
    %v493 = vunpack.c.l.b16 %v230
    %v494 = vunpack.c.l.b16 %v231
    %v495 = vunpack.c.l.b16 %v232
    %v496 = vunpack.c.l.b16 %v233
    %v497 = vunpack.c.l.b16 %v234
    %v498 = vunpack.c.l.b16 %v235
    %v499 = vunpack.c.l.b16 %v236
    %v500 = vunpack.c.l.b16 %v237
    %v501 = vunpack.c.l.b16 %v238
    %v502 = vunpack.c.l.b16 %v239
    %v503 = vunpack.c.l.b16 %v240
    %v504 = vunpack.c.l.b16 %v241
    %v505 = vunpack.c.l.b16 %v242
    %v506 = vunpack.c.l.b16 %v243
    %v507 = vunpack.c.l.b16 %v244
    %v508 = vunpack.c.l.b16 %v245
    %v509 = vunpack.c.l.b16 %v246
    %v510 = vunpack.c.l.b16 %v247
    %v511 = vunpack.c.l.b16 %v248
    %v512 = vunpack.c.l.b16 %v249
    %v513 = vunpack.c.l.b16 %v250
    %v514 = vunpack.c.l.b16 %v251
    %v515 = vunpack.c.l.b16 %v252
    %v516 = vunpack.c.l.b16 %v253
    %v517 = vunpack.c.l.b16 %v254
    %v518 = vunpack.c.l.b16 %v255
    %v519 = vunpack.c.l.b16 %v256
    %v520 = vunpack.c.l.b16 %v257
    %v521 = vunpack.c.l.b16 %v258
    %v522 = vunpack.c.l.b16 %v259
    %v523 = vunpack.c.l.b16 %v260
    %v524 = vunpack.c.l.b16 %v261
    %v525 = vunpack.c.l.b16 %v262
    %v526 = vunpack.c.l.b16 %v263
    %v527 = vunpack.c.l.b16 %v264
    %v528 = vunpack.c.l.b16 %v265
    %v529 = vunpack.c.l.b16 %v266
    %v530 = vunpack.c.l.b16 %v267
    %v531 = vunpack.c.l.b16 %v268
    %v532 = vunpack.c.l.b16 %v269
    %v533 = vunpack.c.l.b16 %v270
    %v534 = vunpack.c.l.b16 %v271
    %v535 = vunpack.c.l.b16 %v272
    %v536 = vunpack.c.l.b16 %v273
    %v537 = vunpack.c.l.b16 %v274
    %v538 = vunpack.c.l.b16 %v275
    %v539 = vunpack.c.l.b16 %v276
    %v540 = vunpack.c.l.b16 %v277
    %v541 = vunpack.c.l.b16 %v278
    %v542 = vunpack.c.l.b16 %v279
    %v543 = vunpack.c.l.b16 %v280
    %v544 = vunpack.c.l.b16 %v281
    %v545 = vunpack.c.l.b16 %v282
    %v546 = vunpack.c.l.b16 %v283
    %v547 = vunpack.c.l.b16 %v284
    %v548 = vunpack.c.l.b16 %v285
    %v549 = vunpack.c.l.b16 %v286
    %v550 = vunpack.c.l.b16 %v287
    %v551 = vunpack.c.l.b16 %v288
    %v552 = vunpack.c.l.b16 %v289
    %v553 = vunpack.c.l.b16 %v290
    %v554 = vunpack.c.l.b16 %v291
    %v555 = vpack.c.b16 %v428, %v427
    %v556 = vpack.c.b16 %v430, %v429
    %v557 = vpack.c.b16 %v432, %v431
    %v558 = vpack.c.b16 %v434, %v433
    %v559 = vpack.c.b16 %v436, %v435
    %v560 = vpack.c.b16 %v438, %v437
    %v561 = vpack.c.b16 %v440, %v439
    %v562 = vpack.c.b16 %v442, %v441
    %v563 = vpack.c.b16 %v444, %v443
    %v564 = vpack.c.b16 %v446, %v445
    %v565 = vpack.c.b16 %v448, %v447
    %v566 = vpack.c.b16 %v450, %v449
    %v567 = vpack.c.b16 %v452, %v451
    %v568 = vpack.c.b16 %v454, %v453
    %v569 = vpack.c.b16 %v456, %v455
    %v570 = vpack.c.b16 %v458, %v457
    %v571 = vpack.c.b16 %v460, %v459
    %v572 = vpack.c.b16 %v462, %v461
    %v573 = vpack.c.b16 %v464, %v463
    %v574 = vpack.c.b16 %v466, %v465
    %v575 = vpack.c.b16 %v468, %v467
    %v576 = vpack.c.b16 %v470, %v469
    %v577 = vpack.c.b16 %v472, %v471
    %v578 = vpack.c.b16 %v474, %v473
    %v579 = vpack.c.b16 %v476, %v475
    %v580 = vpack.c.b16 %v478, %v477
    %v581 = vpack.c.b16 %v480, %v479
    %v582 = vpack.c.b16 %v482, %v481
    %v583 = vpack.c.b16 %v484, %v483
    %v584 = vpack.c.b16 %v486, %v485
    %v585 = vpack.c.b16 %v488, %v487
    %v586 = vpack.c.b16 %v490, %v489
    %v587 = vpack.c.b16 %v492, %v491
    %v588 = vpack.c.b16 %v494, %v493
    %v589 = vpack.c.b16 %v496, %v495
    %v590 = vpack.c.b16 %v498, %v497
    %v591 = vpack.c.b16 %v500, %v499
    %v592 = vpack.c.b16 %v502, %v501
    %v593 = vpack.c.b16 %v504, %v503
    %v594 = vpack.c.b16 %v506, %v505
    %v595 = vpack.c.b16 %v508, %v507
    %v596 = vpack.c.b16 %v510, %v509
    %v597 = vpack.c.b16 %v512, %v511
    %v598 = vpack.c.b16 %v514, %v513
    %v599 = vpack.c.b16 %v516, %v515
    %v600 = vpack.c.b16 %v518, %v517
    %v601 = vpack.c.b16 %v520, %v519
    %v602 = vpack.c.b16 %v522, %v521
    %v603 = vpack.c.b16 %v524, %v523
    %v604 = vpack.c.b16 %v526, %v525
    %v605 = vpack.c.b16 %v528, %v527
    %v606 = vpack.c.b16 %v530, %v529
    %v607 = vpack.c.b16 %v532, %v531
    %v608 = vpack.c.b16 %v534, %v533
    %v609 = vpack.c.b16 %v536, %v535
    %v610 = vpack.c.b16 %v538, %v537
    %v611 = vpack.c.b16 %v540, %v539
    %v612 = vpack.c.b16 %v542, %v541
    %v613 = vpack.c.b16 %v544, %v543
    %v614 = vpack.c.b16 %v546, %v545
    %v615 = vpack.c.b16 %v548, %v547
    %v616 = vpack.c.b16 %v550, %v549
    %v617 = vpack.c.b16 %v552, %v551
    %v618 = vpack.c.b16 %v554, %v553
    %683 = vmatprep.subr.bf16.mxu0 0
    %684 = vmatpush1.bf16.msra.mxu0 %v555
    %685 = vmatprep.subr.bf16.mxu0 0
    %686 = vmatpush1.bf16.msra.mxu0 %v556
    %687 = vmatprep.subr.bf16.mxu0 0
    %688 = vmatpush1.bf16.msra.mxu0 %v557
    %689 = vmatprep.subr.bf16.mxu0 0
    %690 = vmatpush1.bf16.msra.mxu0 %v558
    %691 = vmatprep.subr.bf16.mxu0 0
    %692 = vmatpush1.bf16.msra.mxu0 %v559
    %693 = vmatprep.subr.bf16.mxu0 0
    %694 = vmatpush1.bf16.msra.mxu0 %v560
    %695 = vmatprep.subr.bf16.mxu0 0
    %696 = vmatpush1.bf16.msra.mxu0 %v561
    %697 = vmatprep.subr.bf16.mxu0 0
    %698 = vmatpush1.bf16.msra.mxu0 %v562
    %699 = vmatprep.subr.bf16.mxu0 0
    %700 = vmatpush1.bf16.msra.mxu0 %v563
    %701 = vmatprep.subr.bf16.mxu0 0
    %702 = vmatpush1.bf16.msra.mxu0 %v564
    %703 = vmatprep.subr.bf16.mxu0 0
    %704 = vmatpush1.bf16.msra.mxu0 %v565
    %705 = vmatprep.subr.bf16.mxu0 0
    %706 = vmatpush1.bf16.msra.mxu0 %v566
    %707 = vmatprep.subr.bf16.mxu0 0
    %708 = vmatpush1.bf16.msra.mxu0 %v567
    %709 = vmatprep.subr.bf16.mxu0 0
    %710 = vmatpush1.bf16.msra.mxu0 %v568
    %711 = vmatprep.subr.bf16.mxu0 0
    %712 = vmatpush1.bf16.msra.mxu0 %v569
    %713 = vmatprep.subr.bf16.mxu0 0
    %714 = vmatpush1.bf16.msra.mxu0 %v570
    %715 = vmatprep.mubr.bf16.mxu0 %v157
    %716 = vmatmul.mubr.bf16.gmra.mrb[0].mxu0 %v156
    %v717 = vpop.f32.mrb[0].mxu0
    %v718 = vadd.f32 %v297, %v717
    %v719 = vpop.f32.mrb[0].mxu0
    %v720 = vpop.f32.mrb[0].mxu0
    %v721 = vpop.f32.mrb[0].mxu0
    %722 = vdwg.mxu0
    %723 = vmatprep.subr.bf16.mxu0 0
    %724 = vmatpush1.bf16.msra.mxu0 %v571
    %725 = vmatprep.subr.bf16.mxu0 0
    %726 = vmatpush1.bf16.msra.mxu0 %v572
    %727 = vmatprep.subr.bf16.mxu0 0
    %728 = vmatpush1.bf16.msra.mxu0 %v573
    %729 = vmatprep.subr.bf16.mxu0 0
    %730 = vmatpush1.bf16.msra.mxu0 %v574
    %731 = vmatprep.subr.bf16.mxu0 0
    %732 = vmatpush1.bf16.msra.mxu0 %v575
    %733 = vmatprep.subr.bf16.mxu0 0
    %734 = vmatpush1.bf16.msra.mxu0 %v576
    %735 = vmatprep.subr.bf16.mxu0 0
    %736 = vmatpush1.bf16.msra.mxu0 %v577
    %737 = vmatprep.subr.bf16.mxu0 0
    %738 = vmatpush1.bf16.msra.mxu0 %v578
    %739 = vmatprep.subr.bf16.mxu0 0
    %740 = vmatpush1.bf16.msra.mxu0 %v579
    %741 = vmatprep.subr.bf16.mxu0 0
    %742 = vmatpush1.bf16.msra.mxu0 %v580
    %743 = vmatprep.subr.bf16.mxu0 0
    %744 = vmatpush1.bf16.msra.mxu0 %v581
    %745 = vmatprep.subr.bf16.mxu0 0
    %746 = vmatpush1.bf16.msra.mxu0 %v582
    %747 = vmatprep.subr.bf16.mxu0 0
    %748 = vmatpush1.bf16.msra.mxu0 %v583
    %749 = vmatprep.subr.bf16.mxu0 0
    %750 = vmatpush1.bf16.msra.mxu0 %v584
    %751 = vmatprep.subr.bf16.mxu0 0
    %752 = vmatpush1.bf16.msra.mxu0 %v585
    %753 = vmatprep.subr.bf16.mxu0 0
    %754 = vmatpush1.bf16.msra.mxu0 %v586
    %755 = vmatprep.mubr.bf16.mxu0 %v159
    %756 = vmatmul.mubr.bf16.gmra.mrb[0].mxu0 %v158
    %v757 = vpop.f32.mrb[0].mxu0
    %v758 = vadd.f32 %v718, %v757
    %v759 = vpop.f32.mrb[0].mxu0
    %v760 = vpop.f32.mrb[0].mxu0
    %v761 = vpop.f32.mrb[0].mxu0
    %762 = vdwg.mxu0
    %763 = vmatprep.subr.bf16.mxu0 0
    %764 = vmatpush1.bf16.msra.mxu0 %v587
    %765 = vmatprep.subr.bf16.mxu0 0
    %766 = vmatpush1.bf16.msra.mxu0 %v588
    %767 = vmatprep.subr.bf16.mxu0 0
    %768 = vmatpush1.bf16.msra.mxu0 %v589
    %769 = vmatprep.subr.bf16.mxu0 0
    %770 = vmatpush1.bf16.msra.mxu0 %v590
    %771 = vmatprep.subr.bf16.mxu0 0
    %772 = vmatpush1.bf16.msra.mxu0 %v591
    %773 = vmatprep.subr.bf16.mxu0 0
    %774 = vmatpush1.bf16.msra.mxu0 %v592
    %775 = vmatprep.subr.bf16.mxu0 0
    %776 = vmatpush1.bf16.msra.mxu0 %v593
    %777 = vmatprep.subr.bf16.mxu0 0
    %778 = vmatpush1.bf16.msra.mxu0 %v594
    %779 = vmatprep.subr.bf16.mxu0 0
    %780 = vmatpush1.bf16.msra.mxu0 %v595
    %781 = vmatprep.subr.bf16.mxu0 0
    %782 = vmatpush1.bf16.msra.mxu0 %v596
    %783 = vmatprep.subr.bf16.mxu0 0
    %784 = vmatpush1.bf16.msra.mxu0 %v597
    %785 = vmatprep.subr.bf16.mxu0 0
    %786 = vmatpush1.bf16.msra.mxu0 %v598
    %787 = vmatprep.subr.bf16.mxu0 0
    %788 = vmatpush1.bf16.msra.mxu0 %v599
    %789 = vmatprep.subr.bf16.mxu0 0
    %790 = vmatpush1.bf16.msra.mxu0 %v600
    %791 = vmatprep.subr.bf16.mxu0 0
    %792 = vmatpush1.bf16.msra.mxu0 %v601
    %793 = vmatprep.subr.bf16.mxu0 0
    %794 = vmatpush1.bf16.msra.mxu0 %v602
    %795 = vmatprep.mubr.bf16.mxu0 %v161
    %796 = vmatmul.mubr.bf16.gmra.mrb[0].mxu0 %v160
    %v797 = vpop.f32.mrb[0].mxu0
    %v798 = vadd.f32 %v758, %v797
    %v799 = vpop.f32.mrb[0].mxu0
    %v800 = vpop.f32.mrb[0].mxu0
    %v801 = vpop.f32.mrb[0].mxu0
    %802 = vdwg.mxu0
    %803 = vmatprep.subr.bf16.mxu0 0
    %804 = vmatpush1.bf16.msra.mxu0 %v603
    %805 = vmatprep.subr.bf16.mxu0 0
    %806 = vmatpush1.bf16.msra.mxu0 %v604
    %807 = vmatprep.subr.bf16.mxu0 0
    %808 = vmatpush1.bf16.msra.mxu0 %v605
    %809 = vmatprep.subr.bf16.mxu0 0
    %810 = vmatpush1.bf16.msra.mxu0 %v606
    %811 = vmatprep.subr.bf16.mxu0 0
    %812 = vmatpush1.bf16.msra.mxu0 %v607
    %813 = vmatprep.subr.bf16.mxu0 0
    %814 = vmatpush1.bf16.msra.mxu0 %v608
    %815 = vmatprep.subr.bf16.mxu0 0
    %816 = vmatpush1.bf16.msra.mxu0 %v609
    %817 = vmatprep.subr.bf16.mxu0 0
    %818 = vmatpush1.bf16.msra.mxu0 %v610
    %819 = vmatprep.subr.bf16.mxu0 0
    %820 = vmatpush1.bf16.msra.mxu0 %v611
    %821 = vmatprep.subr.bf16.mxu0 0
    %822 = vmatpush1.bf16.msra.mxu0 %v612
    %823 = vmatprep.subr.bf16.mxu0 0
    %824 = vmatpush1.bf16.msra.mxu0 %v613
    %825 = vmatprep.subr.bf16.mxu0 0
    %826 = vmatpush1.bf16.msra.mxu0 %v614
    %827 = vmatprep.subr.bf16.mxu0 0
    %828 = vmatpush1.bf16.msra.mxu0 %v615
    %829 = vmatprep.subr.bf16.mxu0 0
    %830 = vmatpush1.bf16.msra.mxu0 %v616
    %831 = vmatprep.subr.bf16.mxu0 0
    %832 = vmatpush1.bf16.msra.mxu0 %v617
    %833 = vmatprep.subr.bf16.mxu0 0
    %834 = vmatpush1.bf16.msra.mxu0 %v618
    %835 = vmatprep.mubr.bf16.mxu0 %v163
    %836 = vmatmul.mubr.bf16.gmra.mrb[0].mxu0 %v162
    %v837 = vpop.f32.mrb[0].mxu0
    %v838 = vadd.f32 %v798, %v837
    %v839 = vpop.f32.mrb[0].mxu0
    %v840 = vpop.f32.mrb[0].mxu0
    %v841 = vpop.f32.mrb[0].mxu0
    %842 = vdwg.mxu0
    %v843 = vmax.f32 %v838, 0.0
    %v844 = vpack.c.bf16 %v843, %v843
    %v845 = vld [vmem:[#allocation7] sm:$0xff]
    %v846 = vld [vmem:[#allocation7 + $0x8] sm:$0xff]
    %v847 = vld [vmem:[#allocation7 + $0x10] sm:$0xff]
    %v848 = vld [vmem:[#allocation7 + $0x18] sm:$0xff]
    %v849 = vld [vmem:[#allocation7 + $0x20] sm:$0xff]
    %v850 = vld [vmem:[#allocation7 + $0x28] sm:$0xff]
    %v851 = vld [vmem:[#allocation7 + $0x30] sm:$0xff]
    %v852 = vld [vmem:[#allocation7 + $0x38] sm:$0xff]
    %v853 = vld [vmem:[#allocation7 + $0x40] sm:$0xff]
    %v854 = vld [vmem:[#allocation7 + $0x48] sm:$0xff]
    %v855 = vld [vmem:[#allocation7 + $0x50] sm:$0xff]
    %v856 = vld [vmem:[#allocation7 + $0x58] sm:$0xff]
    %v857 = vld [vmem:[#allocation7 + $0x60] sm:$0xff]
    %v858 = vld [vmem:[#allocation7 + $0x68] sm:$0xff]
    %v859 = vld [vmem:[#allocation7 + $0x70] sm:$0xff]
    %v860 = vld [vmem:[#allocation7 + $0x78] sm:$0xff]
    %v861 = vld [vmem:[%s5] sm:$0x3]
    %v863 = vlaneseq
    %v864 = vshrl.u32 %v863, 7
    %v865 = vsub.s32 0, %v864
    %v866 = vrot.slane %v861, %v865
    %v867 = vlaneseq
    %v868 = vshrl.u32 %v867, 7
    %v869 = vsub.s32 1, %v868
    %v870 = vrot.slane %v861, %v869
    %v889 = vunpack.c.l.b16 %v845
    %v890 = vunpack.c.h.b16 %v845
    %v891 = vunpack.c.l.b16 %v846
    %v892 = vunpack.c.h.b16 %v846
    %v893 = vunpack.c.l.b16 %v847
    %v894 = vunpack.c.h.b16 %v847
    %v895 = vunpack.c.l.b16 %v848
    %v896 = vunpack.c.h.b16 %v848
    %v897 = vunpack.c.l.b16 %v849
    %v898 = vunpack.c.h.b16 %v849
    %v899 = vunpack.c.l.b16 %v850
    %v900 = vunpack.c.h.b16 %v850
    %v901 = vunpack.c.l.b16 %v851
    %v902 = vunpack.c.h.b16 %v851
    %v903 = vunpack.c.l.b16 %v852
    %v904 = vunpack.c.h.b16 %v852
    %v905 = vunpack.c.l.b16 %v853
    %v906 = vunpack.c.h.b16 %v853
    %v907 = vunpack.c.l.b16 %v854
    %v908 = vunpack.c.h.b16 %v854
    %v909 = vunpack.c.l.b16 %v855
    %v910 = vunpack.c.h.b16 %v855
    %v911 = vunpack.c.l.b16 %v856
    %v912 = vunpack.c.h.b16 %v856
    %v913 = vunpack.c.l.b16 %v857
    %v914 = vunpack.c.h.b16 %v857
    %v915 = vunpack.c.l.b16 %v858
    %v916 = vunpack.c.h.b16 %v858
    %v917 = vunpack.c.l.b16 %v859
    %v918 = vunpack.c.h.b16 %v859
    %v919 = vunpack.c.l.b16 %v860
    %v920 = vunpack.c.h.b16 %v860
    %v921 = vpack.c.b16 %v891, %v889
    %v922 = vpack.c.b16 %v892, %v890
    %v923 = vpack.c.b16 %v895, %v893
    %v924 = vpack.c.b16 %v896, %v894
    %v925 = vpack.c.b16 %v899, %v897
    %v926 = vpack.c.b16 %v900, %v898
    %v927 = vpack.c.b16 %v903, %v901
    %v928 = vpack.c.b16 %v904, %v902
    %v929 = vpack.c.b16 %v907, %v905
    %v930 = vpack.c.b16 %v908, %v906
    %v931 = vpack.c.b16 %v911, %v909
    %v932 = vpack.c.b16 %v912, %v910
    %v933 = vpack.c.b16 %v915, %v913
    %v934 = vpack.c.b16 %v916, %v914
    %v935 = vpack.c.b16 %v919, %v917
    %v936 = vpack.c.b16 %v920, %v918
    %953 = vmatprep.subr.bf16.mxu0 %v922
    %954 = vmatpush1.bf16.msra.mxu0 %v921
    %955 = vmatprep.subr.bf16.mxu0 %v924
    %956 = vmatpush1.bf16.msra.mxu0 %v923
    %957 = vmatprep.subr.bf16.mxu0 %v926
    %958 = vmatpush1.bf16.msra.mxu0 %v925
    %959 = vmatprep.subr.bf16.mxu0 %v928
    %960 = vmatpush1.bf16.msra.mxu0 %v927
    %961 = vmatprep.subr.bf16.mxu0 %v930
    %962 = vmatpush1.bf16.msra.mxu0 %v929
    %963 = vmatprep.subr.bf16.mxu0 %v932
    %964 = vmatpush1.bf16.msra.mxu0 %v931
    %965 = vmatprep.subr.bf16.mxu0 %v934
    %966 = vmatpush1.bf16.msra.mxu0 %v933
    %967 = vmatprep.subr.bf16.mxu0 %v936
    %968 = vmatpush1.bf16.msra.mxu0 %v935
    %969 = vmatprep.subr.bf16.mxu0 0
    %970 = vmatpush1.bf16.msra.mxu0 0
    %971 = vmatprep.subr.bf16.mxu0 0
    %972 = vmatpush1.bf16.msra.mxu0 0
    %973 = vmatprep.subr.bf16.mxu0 0
    %974 = vmatpush1.bf16.msra.mxu0 0
    %975 = vmatprep.subr.bf16.mxu0 0
    %976 = vmatpush1.bf16.msra.mxu0 0
    %977 = vmatprep.subr.bf16.mxu0 0
    %978 = vmatpush1.bf16.msra.mxu0 0
    %979 = vmatprep.subr.bf16.mxu0 0
    %980 = vmatpush1.bf16.msra.mxu0 0
    %981 = vmatprep.subr.bf16.mxu0 0
    %982 = vmatpush1.bf16.msra.mxu0 0
    %983 = vmatprep.subr.bf16.mxu0 0
    %984 = vmatpush1.bf16.msra.mxu0 0
    %985 = vmatprep.mubr.bf16.mxu0 0
    %986 = vmatmul.mubr.bf16.gmra.mrb[0].mxu0 %v844
    %v987 = vpop.f32.mrb[0].mxu0
    %v988 = vadd.f32 %v866, %v987
    %v989 = vpop.f32.mrb[0].mxu0
    %v990 = vadd.f32 %v870, %v989
    %v991 = vpop.f32.mrb[0].mxu0
    %v992 = vpop.f32.mrb[0].mxu0
    %993 = vdwg.mxu0
    %v994 = vmul.f32 %v990, 0.5
    %v995 = vmul.f32 %v994, 1.442695
    %v996 = vpow.pop %v995
    %v997 = vld [vmem:[%s1] sm:$0x3]
    %v998 = vmul.f32 %v996, %v997
    %v999 = vadd.f32 %v988, %v998
    %1000 = vst [vmem:[#allocation11] sm:$0x3] %v988
    %1001 = vst [vmem:[#allocation12] sm:$0x3] %v990
    %1002 = vst [vmem:[#allocation14] sm:$0x3] %v999
    %v1003 = vpack.c.bf16 %v999, %v999
    %v1004 = vld [vmem:[#allocation8] sm:$0xf]
    %v1005 = vld [vmem:[#allocation8 + $0x4] sm:$0xf]
    %v1006 = vld [vmem:[#allocation8 + $0x8] sm:$0xf]
    %v1007 = vld [vmem:[#allocation8 + $0xc] sm:$0xf]
    %v1008 = vld [vmem:[#allocation8 + $0x10] sm:$0xf]
    %v1009 = vld [vmem:[#allocation8 + $0x14] sm:$0xf]
    %v1010 = vld [vmem:[#allocation8 + $0x18] sm:$0xf]
    %v1011 = vld [vmem:[#allocation8 + $0x1c] sm:$0xf]
    %v1012 = vld [vmem:[#allocation8 + $0x20] sm:$0xf]
    %v1013 = vld [vmem:[#allocation8 + $0x24] sm:$0xf]
    %v1014 = vld [vmem:[#allocation8 + $0x28] sm:$0xf]
    %v1015 = vld [vmem:[#allocation8 + $0x2c] sm:$0xf]
    %v1016 = vld [vmem:[#allocation8 + $0x30] sm:$0xf]
    %v1017 = vld [vmem:[#allocation8 + $0x34] sm:$0xf]
    %v1018 = vld [vmem:[#allocation8 + $0x38] sm:$0xf]
    %v1019 = vld [vmem:[#allocation8 + $0x3c] sm:$0xf]
    %v1020 = vld [vmem:[%s7] sm:$0x1]
    %v1022 = vlaneseq
    %v1023 = vshrl.u32 %v1022, 7
    %v1024 = vsub.s32 0, %v1023
    %v1025 = vrot.slane %v1020, %v1024
    %v1043 = vunpack.c.l.b16 %v1004
    %v1044 = vunpack.c.l.b16 %v1005
    %v1045 = vunpack.c.l.b16 %v1006
    %v1046 = vunpack.c.l.b16 %v1007
    %v1047 = vunpack.c.l.b16 %v1008
    %v1048 = vunpack.c.l.b16 %v1009
    %v1049 = vunpack.c.l.b16 %v1010
    %v1050 = vunpack.c.l.b16 %v1011
    %v1051 = vunpack.c.l.b16 %v1012
    %v1052 = vunpack.c.l.b16 %v1013
    %v1053 = vunpack.c.l.b16 %v1014
    %v1054 = vunpack.c.l.b16 %v1015
    %v1055 = vunpack.c.l.b16 %v1016
    %v1056 = vunpack.c.l.b16 %v1017
    %v1057 = vunpack.c.l.b16 %v1018
    %v1058 = vunpack.c.l.b16 %v1019
    %v1059 = vpack.c.b16 %v1044, %v1043
    %v1060 = vpack.c.b16 %v1046, %v1045
    %v1061 = vpack.c.b16 %v1048, %v1047
    %v1062 = vpack.c.b16 %v1050, %v1049
    %v1063 = vpack.c.b16 %v1052, %v1051
    %v1064 = vpack.c.b16 %v1054, %v1053
    %v1065 = vpack.c.b16 %v1056, %v1055
    %v1066 = vpack.c.b16 %v1058, %v1057
    %1075 = vmatprep.subr.bf16.mxu0 0
    %1076 = vmatpush1.bf16.msra.mxu0 %v1059
    %1077 = vmatprep.subr.bf16.mxu0 0
    %1078 = vmatpush1.bf16.msra.mxu0 %v1060
    %1079 = vmatprep.subr.bf16.mxu0 0
    %1080 = vmatpush1.bf16.msra.mxu0 %v1061
    %1081 = vmatprep.subr.bf16.mxu0 0
    %1082 = vmatpush1.bf16.msra.mxu0 %v1062
    %1083 = vmatprep.subr.bf16.mxu0 0
    %1084 = vmatpush1.bf16.msra.mxu0 %v1063
    %1085 = vmatprep.subr.bf16.mxu0 0
    %1086 = vmatpush1.bf16.msra.mxu0 %v1064
    %1087 = vmatprep.subr.bf16.mxu0 0
    %1088 = vmatpush1.bf16.msra.mxu0 %v1065
    %1089 = vmatprep.subr.bf16.mxu0 0
    %1090 = vmatpush1.bf16.msra.mxu0 %v1066
    %1091 = vmatprep.subr.bf16.mxu0 0
    %1092 = vmatpush1.bf16.msra.mxu0 0
    %1093 = vmatprep.subr.bf16.mxu0 0
    %1094 = vmatpush1.bf16.msra.mxu0 0
    %1095 = vmatprep.subr.bf16.mxu0 0
    %1096 = vmatpush1.bf16.msra.mxu0 0
    %1097 = vmatprep.subr.bf16.mxu0 0
    %1098 = vmatpush1.bf16.msra.mxu0 0
    %1099 = vmatprep.subr.bf16.mxu0 0
    %1100 = vmatpush1.bf16.msra.mxu0 0
    %1101 = vmatprep.subr.bf16.mxu0 0
    %1102 = vmatpush1.bf16.msra.mxu0 0
    %1103 = vmatprep.subr.bf16.mxu0 0
    %1104 = vmatpush1.bf16.msra.mxu0 0
    %1105 = vmatprep.subr.bf16.mxu0 0
    %1106 = vmatpush1.bf16.msra.mxu0 0
    %1107 = vmatprep.mubr.bf16.mxu0 0
    %1108 = vmatmul.mubr.bf16.gmra.mrb[0].mxu0 %v1003
    %v1109 = vpop.f32.mrb[0].mxu0
    %v1110 = vadd.f32 %v1025, %v1109
    %v1111 = vpop.f32.mrb[0].mxu0
    %v1112 = vpop.f32.mrb[0].mxu0
    %v1113 = vpop.f32.mrb[0].mxu0
    %1114 = vdwg.mxu0
    %v1115 = vmax.f32 %v1110, 0.0
    %v1116 = vpack.c.bf16 %v1115, %v1115
    %v1117 = vld [vmem:[#allocation10] sm:$0xff]
    %v1118 = vld [vmem:[#allocation10 + $0x8] sm:$0xff]
    %v1119 = vld [vmem:[#allocation10 + $0x10] sm:$0xff]
    %v1120 = vld [vmem:[#allocation10 + $0x18] sm:$0xff]
    %v1121 = vld [vmem:[#allocation10 + $0x20] sm:$0xff]
    %v1122 = vld [vmem:[#allocation10 + $0x28] sm:$0xff]
    %v1123 = vld [vmem:[#allocation10 + $0x30] sm:$0xff]
    %v1124 = vld [vmem:[#allocation10 + $0x38] sm:$0xff]
    %v1125 = vld [vmem:[#allocation10 + $0x40] sm:$0xff]
    %v1126 = vld [vmem:[#allocation10 + $0x48] sm:$0xff]
    %v1127 = vld [vmem:[#allocation10 + $0x50] sm:$0xff]
    %v1128 = vld [vmem:[#allocation10 + $0x58] sm:$0xff]
    %v1129 = vld [vmem:[#allocation10 + $0x60] sm:$0xff]
    %v1130 = vld [vmem:[#allocation10 + $0x68] sm:$0xff]
    %v1131 = vld [vmem:[#allocation10 + $0x70] sm:$0xff]
    %v1132 = vld [vmem:[#allocation10 + $0x78] sm:$0xff]
    %v1133 = vld [vmem:[#allocation10 + $0x80] sm:$0xff]
    %v1134 = vld [vmem:[#allocation10 + $0x88] sm:$0xff]
    %v1135 = vld [vmem:[#allocation10 + $0x90] sm:$0xff]
    %v1136 = vld [vmem:[#allocation10 + $0x98] sm:$0xff]
    %v1137 = vld [vmem:[#allocation10 + $0xa0] sm:$0xff]
    %v1138 = vld [vmem:[#allocation10 + $0xa8] sm:$0xff]
    %v1139 = vld [vmem:[#allocation10 + $0xb0] sm:$0xff]
    %v1140 = vld [vmem:[#allocation10 + $0xb8] sm:$0xff]
    %v1141 = vld [vmem:[#allocation10 + $0xc0] sm:$0xff]
    %v1142 = vld [vmem:[#allocation10 + $0xc8] sm:$0xff]
    %v1143 = vld [vmem:[#allocation10 + $0xd0] sm:$0xff]
    %v1144 = vld [vmem:[#allocation10 + $0xd8] sm:$0xff]
    %v1145 = vld [vmem:[#allocation10 + $0xe0] sm:$0xff]
    %v1146 = vld [vmem:[#allocation10 + $0xe8] sm:$0xff]
    %v1147 = vld [vmem:[#allocation10 + $0xf0] sm:$0xff]
    %v1148 = vld [vmem:[#allocation10 + $0xf8] sm:$0xff]
    %v1149 = vld [vmem:[#allocation10 + $0x100] sm:$0xff]
    %v1150 = vld [vmem:[#allocation10 + $0x108] sm:$0xff]
    %v1151 = vld [vmem:[#allocation10 + $0x110] sm:$0xff]
    %v1152 = vld [vmem:[#allocation10 + $0x118] sm:$0xff]
    %v1153 = vld [vmem:[#allocation10 + $0x120] sm:$0xff]
    %v1154 = vld [vmem:[#allocation10 + $0x128] sm:$0xff]
    %v1155 = vld [vmem:[#allocation10 + $0x130] sm:$0xff]
    %v1156 = vld [vmem:[#allocation10 + $0x138] sm:$0xff]
    %v1157 = vld [vmem:[#allocation10 + $0x140] sm:$0xff]
    %v1158 = vld [vmem:[#allocation10 + $0x148] sm:$0xff]
    %v1159 = vld [vmem:[#allocation10 + $0x150] sm:$0xff]
    %v1160 = vld [vmem:[#allocation10 + $0x158] sm:$0xff]
    %v1161 = vld [vmem:[#allocation10 + $0x160] sm:$0xff]
    %v1162 = vld [vmem:[#allocation10 + $0x168] sm:$0xff]
    %v1163 = vld [vmem:[#allocation10 + $0x170] sm:$0xff]
    %v1164 = vld [vmem:[#allocation10 + $0x178] sm:$0xff]
    %v1165 = vld [vmem:[#allocation10 + $0x180] sm:$0xff]
    %v1166 = vld [vmem:[#allocation10 + $0x188] sm:$0xff]
    %v1167 = vld [vmem:[#allocation10 + $0x190] sm:$0xff]
    %v1168 = vld [vmem:[#allocation10 + $0x198] sm:$0xff]
    %v1169 = vld [vmem:[#allocation10 + $0x1a0] sm:$0xff]
    %v1170 = vld [vmem:[#allocation10 + $0x1a8] sm:$0xff]
    %v1171 = vld [vmem:[#allocation10 + $0x1b0] sm:$0xff]
    %v1172 = vld [vmem:[#allocation10 + $0x1b8] sm:$0xff]
    %v1173 = vld [vmem:[#allocation10 + $0x1c0] sm:$0xff]
    %v1174 = vld [vmem:[#allocation10 + $0x1c8] sm:$0xff]
    %v1175 = vld [vmem:[#allocation10 + $0x1d0] sm:$0xff]
    %v1176 = vld [vmem:[#allocation10 + $0x1d8] sm:$0xff]
    %v1177 = vld [vmem:[#allocation10 + $0x1e0] sm:$0xff]
    %v1178 = vld [vmem:[#allocation10 + $0x1e8] sm:$0xff]
    %v1179 = vld [vmem:[#allocation10 + $0x1f0] sm:$0xff]
    %v1180 = vld [vmem:[#allocation10 + $0x1f8] sm:$0xff]
    %v1181 = vld [vmem:[#allocation10 + $0x200] sm:$0xff]
    %v1182 = vld [vmem:[#allocation10 + $0x208] sm:$0xff]
    %v1183 = vld [vmem:[#allocation10 + $0x210] sm:$0xff]
    %v1184 = vld [vmem:[#allocation10 + $0x218] sm:$0xff]
    %v1185 = vld [vmem:[#allocation10 + $0x220] sm:$0xff]
    %v1186 = vld [vmem:[#allocation10 + $0x228] sm:$0xff]
    %v1187 = vld [vmem:[#allocation10 + $0x230] sm:$0xff]
    %v1188 = vld [vmem:[#allocation10 + $0x238] sm:$0xff]
    %v1189 = vld [vmem:[#allocation10 + $0x240] sm:$0xff]
    %v1190 = vld [vmem:[#allocation10 + $0x248] sm:$0xff]
    %v1191 = vld [vmem:[#allocation10 + $0x250] sm:$0xff]
    %v1192 = vld [vmem:[#allocation10 + $0x258] sm:$0xff]
    %v1193 = vld [vmem:[#allocation10 + $0x260] sm:$0xff]
    %v1194 = vld [vmem:[#allocation10 + $0x268] sm:$0xff]
    %v1195 = vld [vmem:[#allocation10 + $0x270] sm:$0xff]
    %v1196 = vld [vmem:[#allocation10 + $0x278] sm:$0xff]
    %v1197 = vld [vmem:[#allocation10 + $0x280] sm:$0xff]
    %v1198 = vld [vmem:[#allocation10 + $0x288] sm:$0xff]
    %v1199 = vld [vmem:[#allocation10 + $0x290] sm:$0xff]
    %v1200 = vld [vmem:[#allocation10 + $0x298] sm:$0xff]
    %v1201 = vld [vmem:[#allocation10 + $0x2a0] sm:$0xff]
    %v1202 = vld [vmem:[#allocation10 + $0x2a8] sm:$0xff]
    %v1203 = vld [vmem:[#allocation10 + $0x2b0] sm:$0xff]
    %v1204 = vld [vmem:[#allocation10 + $0x2b8] sm:$0xff]
    %v1205 = vld [vmem:[#allocation10 + $0x2c0] sm:$0xff]
    %v1206 = vld [vmem:[#allocation10 + $0x2c8] sm:$0xff]
    %v1207 = vld [vmem:[#allocation10 + $0x2d0] sm:$0xff]
    %v1208 = vld [vmem:[#allocation10 + $0x2d8] sm:$0xff]
    %v1209 = vld [vmem:[#allocation10 + $0x2e0] sm:$0xff]
    %v1210 = vld [vmem:[#allocation10 + $0x2e8] sm:$0xff]
    %v1211 = vld [vmem:[#allocation10 + $0x2f0] sm:$0xff]
    %v1212 = vld [vmem:[#allocation10 + $0x2f8] sm:$0xff]
    %v1213 = vld [vmem:[#allocation10 + $0x300] sm:$0xff]
    %v1214 = vld [vmem:[#allocation10 + $0x308] sm:$0xff]
    %v1215 = vld [vmem:[#allocation10 + $0x310] sm:$0xff]
    %v1216 = vld [vmem:[#allocation10 + $0x318] sm:$0xff]
    %v1217 = vld [vmem:[#allocation10 + $0x320] sm:$0xff]
    %v1218 = vld [vmem:[#allocation10 + $0x328] sm:$0xff]
    %v1219 = vld [vmem:[#allocation10 + $0x330] sm:$0xff]
    %v1220 = vld [vmem:[#allocation10 + $0x338] sm:$0xff]
    %v1221 = vld [vmem:[#allocation10 + $0x340] sm:$0xff]
    %v1222 = vld [vmem:[#allocation10 + $0x348] sm:$0xff]
    %v1223 = vld [vmem:[#allocation10 + $0x350] sm:$0xff]
    %v1224 = vld [vmem:[#allocation10 + $0x358] sm:$0xff]
    %v1225 = vld [vmem:[#allocation10 + $0x360] sm:$0xff]
    %v1226 = vld [vmem:[#allocation10 + $0x368] sm:$0xff]
    %v1227 = vld [vmem:[#allocation10 + $0x370] sm:$0xff]
    %v1228 = vld [vmem:[#allocation10 + $0x378] sm:$0xff]
    %v1229 = vld [vmem:[#allocation10 + $0x380] sm:$0xff]
    %v1230 = vld [vmem:[#allocation10 + $0x388] sm:$0xff]
    %v1231 = vld [vmem:[#allocation10 + $0x390] sm:$0xff]
    %v1232 = vld [vmem:[#allocation10 + $0x398] sm:$0xff]
    %v1233 = vld [vmem:[#allocation10 + $0x3a0] sm:$0xff]
    %v1234 = vld [vmem:[#allocation10 + $0x3a8] sm:$0xff]
    %v1235 = vld [vmem:[#allocation10 + $0x3b0] sm:$0xff]
    %v1236 = vld [vmem:[#allocation10 + $0x3b8] sm:$0xff]
    %v1237 = vld [vmem:[#allocation10 + $0x3c0] sm:$0xff]
    %v1238 = vld [vmem:[#allocation10 + $0x3c8] sm:$0xff]
    %v1239 = vld [vmem:[#allocation10 + $0x3d0] sm:$0xff]
    %v1240 = vld [vmem:[#allocation10 + $0x3d8] sm:$0xff]
    %v1241 = vld [vmem:[#allocation10 + $0x3e0] sm:$0xff]
    %v1242 = vld [vmem:[#allocation10 + $0x3e8] sm:$0xff]
    %v1243 = vld [vmem:[#allocation10 + $0x3f0] sm:$0xff]
    %v1244 = vld [vmem:[#allocation10 + $0x3f8] sm:$0xff]
    %v1245 = vld [vmem:[%s9] sm:$0xff]
    %v1246 = vld [vmem:[%s9 + $0x8] sm:$0xff]
    %v1249 = vlaneseq
    %v1250 = vshrl.u32 %v1249, 7
    %v1251 = vsub.s32 0, %v1250
    %v1252 = vrot.slane %v1245, %v1251
    %v1253 = vlaneseq
    %v1254 = vshrl.u32 %v1253, 7
    %v1255 = vsub.s32 1, %v1254
    %v1256 = vrot.slane %v1245, %v1255
    %v1257 = vlaneseq
    %v1258 = vshrl.u32 %v1257, 7
    %v1259 = vsub.s32 2, %v1258
    %v1260 = vrot.slane %v1245, %v1259
    %v1261 = vlaneseq
    %v1262 = vshrl.u32 %v1261, 7
    %v1263 = vsub.s32 3, %v1262
    %v1264 = vrot.slane %v1245, %v1263
    %v1265 = vlaneseq
    %v1266 = vshrl.u32 %v1265, 7
    %v1267 = vsub.s32 4, %v1266
    %v1268 = vrot.slane %v1245, %v1267
    %v1269 = vlaneseq
    %v1270 = vshrl.u32 %v1269, 7
    %v1271 = vsub.s32 5, %v1270
    %v1272 = vrot.slane %v1245, %v1271
    %v1273 = vlaneseq
    %v1274 = vshrl.u32 %v1273, 7
    %v1275 = vsub.s32 6, %v1274
    %v1276 = vrot.slane %v1245, %v1275
    %v1277 = vlaneseq
    %v1278 = vshrl.u32 %v1277, 7
    %v1279 = vsub.s32 7, %v1278
    %v1280 = vrot.slane %v1245, %v1279
    %v1281 = vlaneseq
    %v1282 = vshrl.u32 %v1281, 7
    %v1283 = vsub.s32 0, %v1282
    %v1284 = vrot.slane %v1246, %v1283
    %v1285 = vlaneseq
    %v1286 = vshrl.u32 %v1285, 7
    %v1287 = vsub.s32 1, %v1286
    %v1288 = vrot.slane %v1246, %v1287
    %v1289 = vlaneseq
    %v1290 = vshrl.u32 %v1289, 7
    %v1291 = vsub.s32 2, %v1290
    %v1292 = vrot.slane %v1246, %v1291
    %v1293 = vlaneseq
    %v1294 = vshrl.u32 %v1293, 7
    %v1295 = vsub.s32 3, %v1294
    %v1296 = vrot.slane %v1246, %v1295
    %v1297 = vlaneseq
    %v1298 = vshrl.u32 %v1297, 7
    %v1299 = vsub.s32 4, %v1298
    %v1300 = vrot.slane %v1246, %v1299
    %v1301 = vlaneseq
    %v1302 = vshrl.u32 %v1301, 7
    %v1303 = vsub.s32 5, %v1302
    %v1304 = vrot.slane %v1246, %v1303
    %v1305 = vlaneseq
    %v1306 = vshrl.u32 %v1305, 7
    %v1307 = vsub.s32 6, %v1306
    %v1308 = vrot.slane %v1246, %v1307
    %v1309 = vlaneseq
    %v1310 = vshrl.u32 %v1309, 7
    %v1311 = vsub.s32 7, %v1310
    %v1312 = vrot.slane %v1246, %v1311
    %v1457 = vunpack.c.l.b16 %v1117
    %v1458 = vunpack.c.h.b16 %v1117
    %v1459 = vunpack.c.l.b16 %v1118
    %v1460 = vunpack.c.h.b16 %v1118
    %v1461 = vunpack.c.l.b16 %v1119
    %v1462 = vunpack.c.h.b16 %v1119
    %v1463 = vunpack.c.l.b16 %v1120
    %v1464 = vunpack.c.h.b16 %v1120
    %v1465 = vunpack.c.l.b16 %v1121
    %v1466 = vunpack.c.h.b16 %v1121
    %v1467 = vunpack.c.l.b16 %v1122
    %v1468 = vunpack.c.h.b16 %v1122
    %v1469 = vunpack.c.l.b16 %v1123
    %v1470 = vunpack.c.h.b16 %v1123
    %v1471 = vunpack.c.l.b16 %v1124
    %v1472 = vunpack.c.h.b16 %v1124
    %v1473 = vunpack.c.l.b16 %v1125
    %v1474 = vunpack.c.h.b16 %v1125
    %v1475 = vunpack.c.l.b16 %v1126
    %v1476 = vunpack.c.h.b16 %v1126
    %v1477 = vunpack.c.l.b16 %v1127
    %v1478 = vunpack.c.h.b16 %v1127
    %v1479 = vunpack.c.l.b16 %v1128
    %v1480 = vunpack.c.h.b16 %v1128
    %v1481 = vunpack.c.l.b16 %v1129
    %v1482 = vunpack.c.h.b16 %v1129
    %v1483 = vunpack.c.l.b16 %v1130
    %v1484 = vunpack.c.h.b16 %v1130
    %v1485 = vunpack.c.l.b16 %v1131
    %v1486 = vunpack.c.h.b16 %v1131
    %v1487 = vunpack.c.l.b16 %v1132
    %v1488 = vunpack.c.h.b16 %v1132
    %v1489 = vunpack.c.l.b16 %v1133
    %v1490 = vunpack.c.h.b16 %v1133
    %v1491 = vunpack.c.l.b16 %v1134
    %v1492 = vunpack.c.h.b16 %v1134
    %v1493 = vunpack.c.l.b16 %v1135
    %v1494 = vunpack.c.h.b16 %v1135
    %v1495 = vunpack.c.l.b16 %v1136
    %v1496 = vunpack.c.h.b16 %v1136
    %v1497 = vunpack.c.l.b16 %v1137
    %v1498 = vunpack.c.h.b16 %v1137
    %v1499 = vunpack.c.l.b16 %v1138
    %v1500 = vunpack.c.h.b16 %v1138
    %v1501 = vunpack.c.l.b16 %v1139
    %v1502 = vunpack.c.h.b16 %v1139
    %v1503 = vunpack.c.l.b16 %v1140
    %v1504 = vunpack.c.h.b16 %v1140
    %v1505 = vunpack.c.l.b16 %v1141
    %v1506 = vunpack.c.h.b16 %v1141
    %v1507 = vunpack.c.l.b16 %v1142
    %v1508 = vunpack.c.h.b16 %v1142
    %v1509 = vunpack.c.l.b16 %v1143
    %v1510 = vunpack.c.h.b16 %v1143
    %v1511 = vunpack.c.l.b16 %v1144
    %v1512 = vunpack.c.h.b16 %v1144
    %v1513 = vunpack.c.l.b16 %v1145
    %v1514 = vunpack.c.h.b16 %v1145
    %v1515 = vunpack.c.l.b16 %v1146
    %v1516 = vunpack.c.h.b16 %v1146
    %v1517 = vunpack.c.l.b16 %v1147
    %v1518 = vunpack.c.h.b16 %v1147
    %v1519 = vunpack.c.l.b16 %v1148
    %v1520 = vunpack.c.h.b16 %v1148
    %v1521 = vunpack.c.l.b16 %v1149
    %v1522 = vunpack.c.h.b16 %v1149
    %v1523 = vunpack.c.l.b16 %v1150
    %v1524 = vunpack.c.h.b16 %v1150
    %v1525 = vunpack.c.l.b16 %v1151
    %v1526 = vunpack.c.h.b16 %v1151
    %v1527 = vunpack.c.l.b16 %v1152
    %v1528 = vunpack.c.h.b16 %v1152
    %v1529 = vunpack.c.l.b16 %v1153
    %v1530 = vunpack.c.h.b16 %v1153
    %v1531 = vunpack.c.l.b16 %v1154
    %v1532 = vunpack.c.h.b16 %v1154
    %v1533 = vunpack.c.l.b16 %v1155
    %v1534 = vunpack.c.h.b16 %v1155
    %v1535 = vunpack.c.l.b16 %v1156
    %v1536 = vunpack.c.h.b16 %v1156
    %v1537 = vunpack.c.l.b16 %v1157
    %v1538 = vunpack.c.h.b16 %v1157
    %v1539 = vunpack.c.l.b16 %v1158
    %v1540 = vunpack.c.h.b16 %v1158
    %v1541 = vunpack.c.l.b16 %v1159
    %v1542 = vunpack.c.h.b16 %v1159
    %v1543 = vunpack.c.l.b16 %v1160
    %v1544 = vunpack.c.h.b16 %v1160
    %v1545 = vunpack.c.l.b16 %v1161
    %v1546 = vunpack.c.h.b16 %v1161
    %v1547 = vunpack.c.l.b16 %v1162
    %v1548 = vunpack.c.h.b16 %v1162
    %v1549 = vunpack.c.l.b16 %v1163
    %v1550 = vunpack.c.h.b16 %v1163
    %v1551 = vunpack.c.l.b16 %v1164
    %v1552 = vunpack.c.h.b16 %v1164
    %v1553 = vunpack.c.l.b16 %v1165
    %v1554 = vunpack.c.h.b16 %v1165
    %v1555 = vunpack.c.l.b16 %v1166
    %v1556 = vunpack.c.h.b16 %v1166
    %v1557 = vunpack.c.l.b16 %v1167
    %v1558 = vunpack.c.h.b16 %v1167
    %v1559 = vunpack.c.l.b16 %v1168
    %v1560 = vunpack.c.h.b16 %v1168
    %v1561 = vunpack.c.l.b16 %v1169
    %v1562 = vunpack.c.h.b16 %v1169
    %v1563 = vunpack.c.l.b16 %v1170
    %v1564 = vunpack.c.h.b16 %v1170
    %v1565 = vunpack.c.l.b16 %v1171
    %v1566 = vunpack.c.h.b16 %v1171
    %v1567 = vunpack.c.l.b16 %v1172
    %v1568 = vunpack.c.h.b16 %v1172
    %v1569 = vunpack.c.l.b16 %v1173
    %v1570 = vunpack.c.h.b16 %v1173
    %v1571 = vunpack.c.l.b16 %v1174
    %v1572 = vunpack.c.h.b16 %v1174
    %v1573 = vunpack.c.l.b16 %v1175
    %v1574 = vunpack.c.h.b16 %v1175
    %v1575 = vunpack.c.l.b16 %v1176
    %v1576 = vunpack.c.h.b16 %v1176
    %v1577 = vunpack.c.l.b16 %v1177
    %v1578 = vunpack.c.h.b16 %v1177
    %v1579 = vunpack.c.l.b16 %v1178
    %v1580 = vunpack.c.h.b16 %v1178
    %v1581 = vunpack.c.l.b16 %v1179
    %v1582 = vunpack.c.h.b16 %v1179
    %v1583 = vunpack.c.l.b16 %v1180
    %v1584 = vunpack.c.h.b16 %v1180
    %v1585 = vunpack.c.l.b16 %v1181
    %v1586 = vunpack.c.h.b16 %v1181
    %v1587 = vunpack.c.l.b16 %v1182
    %v1588 = vunpack.c.h.b16 %v1182
    %v1589 = vunpack.c.l.b16 %v1183
    %v1590 = vunpack.c.h.b16 %v1183
    %v1591 = vunpack.c.l.b16 %v1184
    %v1592 = vunpack.c.h.b16 %v1184
    %v1593 = vunpack.c.l.b16 %v1185
    %v1594 = vunpack.c.h.b16 %v1185
    %v1595 = vunpack.c.l.b16 %v1186
    %v1596 = vunpack.c.h.b16 %v1186
    %v1597 = vunpack.c.l.b16 %v1187
    %v1598 = vunpack.c.h.b16 %v1187
    %v1599 = vunpack.c.l.b16 %v1188
    %v1600 = vunpack.c.h.b16 %v1188
    %v1601 = vunpack.c.l.b16 %v1189
    %v1602 = vunpack.c.h.b16 %v1189
    %v1603 = vunpack.c.l.b16 %v1190
    %v1604 = vunpack.c.h.b16 %v1190
    %v1605 = vunpack.c.l.b16 %v1191
    %v1606 = vunpack.c.h.b16 %v1191
    %v1607 = vunpack.c.l.b16 %v1192
    %v1608 = vunpack.c.h.b16 %v1192
    %v1609 = vunpack.c.l.b16 %v1193
    %v1610 = vunpack.c.h.b16 %v1193
    %v1611 = vunpack.c.l.b16 %v1194
    %v1612 = vunpack.c.h.b16 %v1194
    %v1613 = vunpack.c.l.b16 %v1195
    %v1614 = vunpack.c.h.b16 %v1195
    %v1615 = vunpack.c.l.b16 %v1196
    %v1616 = vunpack.c.h.b16 %v1196
    %v1617 = vunpack.c.l.b16 %v1197
    %v1618 = vunpack.c.h.b16 %v1197
    %v1619 = vunpack.c.l.b16 %v1198
    %v1620 = vunpack.c.h.b16 %v1198
    %v1621 = vunpack.c.l.b16 %v1199
    %v1622 = vunpack.c.h.b16 %v1199
    %v1623 = vunpack.c.l.b16 %v1200
    %v1624 = vunpack.c.h.b16 %v1200
    %v1625 = vunpack.c.l.b16 %v1201
    %v1626 = vunpack.c.h.b16 %v1201
    %v1627 = vunpack.c.l.b16 %v1202
    %v1628 = vunpack.c.h.b16 %v1202
    %v1629 = vunpack.c.l.b16 %v1203
    %v1630 = vunpack.c.h.b16 %v1203
    %v1631 = vunpack.c.l.b16 %v1204
    %v1632 = vunpack.c.h.b16 %v1204
    %v1633 = vunpack.c.l.b16 %v1205
    %v1634 = vunpack.c.h.b16 %v1205
    %v1635 = vunpack.c.l.b16 %v1206
    %v1636 = vunpack.c.h.b16 %v1206
    %v1637 = vunpack.c.l.b16 %v1207
    %v1638 = vunpack.c.h.b16 %v1207
    %v1639 = vunpack.c.l.b16 %v1208
    %v1640 = vunpack.c.h.b16 %v1208
    %v1641 = vunpack.c.l.b16 %v1209
    %v1642 = vunpack.c.h.b16 %v1209
    %v1643 = vunpack.c.l.b16 %v1210
    %v1644 = vunpack.c.h.b16 %v1210
    %v1645 = vunpack.c.l.b16 %v1211
    %v1646 = vunpack.c.h.b16 %v1211
    %v1647 = vunpack.c.l.b16 %v1212
    %v1648 = vunpack.c.h.b16 %v1212
    %v1649 = vunpack.c.l.b16 %v1213
    %v1650 = vunpack.c.h.b16 %v1213
    %v1651 = vunpack.c.l.b16 %v1214
    %v1652 = vunpack.c.h.b16 %v1214
    %v1653 = vunpack.c.l.b16 %v1215
    %v1654 = vunpack.c.h.b16 %v1215
    %v1655 = vunpack.c.l.b16 %v1216
    %v1656 = vunpack.c.h.b16 %v1216
    %v1657 = vunpack.c.l.b16 %v1217
    %v1658 = vunpack.c.h.b16 %v1217
    %v1659 = vunpack.c.l.b16 %v1218
    %v1660 = vunpack.c.h.b16 %v1218
    %v1661 = vunpack.c.l.b16 %v1219
    %v1662 = vunpack.c.h.b16 %v1219
    %v1663 = vunpack.c.l.b16 %v1220
    %v1664 = vunpack.c.h.b16 %v1220
    %v1665 = vunpack.c.l.b16 %v1221
    %v1666 = vunpack.c.h.b16 %v1221
    %v1667 = vunpack.c.l.b16 %v1222
    %v1668 = vunpack.c.h.b16 %v1222
    %v1669 = vunpack.c.l.b16 %v1223
    %v1670 = vunpack.c.h.b16 %v1223
    %v1671 = vunpack.c.l.b16 %v1224
    %v1672 = vunpack.c.h.b16 %v1224
    %v1673 = vunpack.c.l.b16 %v1225
    %v1674 = vunpack.c.h.b16 %v1225
    %v1675 = vunpack.c.l.b16 %v1226
    %v1676 = vunpack.c.h.b16 %v1226
    %v1677 = vunpack.c.l.b16 %v1227
    %v1678 = vunpack.c.h.b16 %v1227
    %v1679 = vunpack.c.l.b16 %v1228
    %v1680 = vunpack.c.h.b16 %v1228
    %v1681 = vunpack.c.l.b16 %v1229
    %v1682 = vunpack.c.h.b16 %v1229
    %v1683 = vunpack.c.l.b16 %v1230
    %v1684 = vunpack.c.h.b16 %v1230
    %v1685 = vunpack.c.l.b16 %v1231
    %v1686 = vunpack.c.h.b16 %v1231
    %v1687 = vunpack.c.l.b16 %v1232
    %v1688 = vunpack.c.h.b16 %v1232
    %v1689 = vunpack.c.l.b16 %v1233
    %v1690 = vunpack.c.h.b16 %v1233
    %v1691 = vunpack.c.l.b16 %v1234
    %v1692 = vunpack.c.h.b16 %v1234
    %v1693 = vunpack.c.l.b16 %v1235
    %v1694 = vunpack.c.h.b16 %v1235
    %v1695 = vunpack.c.l.b16 %v1236
    %v1696 = vunpack.c.h.b16 %v1236
    %v1697 = vunpack.c.l.b16 %v1237
    %v1698 = vunpack.c.h.b16 %v1237
    %v1699 = vunpack.c.l.b16 %v1238
    %v1700 = vunpack.c.h.b16 %v1238
    %v1701 = vunpack.c.l.b16 %v1239
    %v1702 = vunpack.c.h.b16 %v1239
    %v1703 = vunpack.c.l.b16 %v1240
    %v1704 = vunpack.c.h.b16 %v1240
    %v1705 = vunpack.c.l.b16 %v1241
    %v1706 = vunpack.c.h.b16 %v1241
    %v1707 = vunpack.c.l.b16 %v1242
    %v1708 = vunpack.c.h.b16 %v1242
    %v1709 = vunpack.c.l.b16 %v1243
    %v1710 = vunpack.c.h.b16 %v1243
    %v1711 = vunpack.c.l.b16 %v1244
    %v1712 = vunpack.c.h.b16 %v1244
    %v1713 = vpack.c.b16 %v1473, %v1457
    %v1714 = vpack.c.b16 %v1474, %v1458
    %v1715 = vpack.c.b16 %v1475, %v1459
    %v1716 = vpack.c.b16 %v1476, %v1460
    %v1717 = vpack.c.b16 %v1477, %v1461
    %v1718 = vpack.c.b16 %v1478, %v1462
    %v1719 = vpack.c.b16 %v1479, %v1463
    %v1720 = vpack.c.b16 %v1480, %v1464
    %v1721 = vpack.c.b16 %v1481, %v1465
    %v1722 = vpack.c.b16 %v1482, %v1466
    %v1723 = vpack.c.b16 %v1483, %v1467
    %v1724 = vpack.c.b16 %v1484, %v1468
    %v1725 = vpack.c.b16 %v1485, %v1469
    %v1726 = vpack.c.b16 %v1486, %v1470
    %v1727 = vpack.c.b16 %v1487, %v1471
    %v1728 = vpack.c.b16 %v1488, %v1472
    %v1729 = vpack.c.b16 %v1505, %v1489
    %v1730 = vpack.c.b16 %v1506, %v1490
    %v1731 = vpack.c.b16 %v1507, %v1491
    %v1732 = vpack.c.b16 %v1508, %v1492
    %v1733 = vpack.c.b16 %v1509, %v1493
    %v1734 = vpack.c.b16 %v1510, %v1494
    %v1735 = vpack.c.b16 %v1511, %v1495
    %v1736 = vpack.c.b16 %v1512, %v1496
    %v1737 = vpack.c.b16 %v1513, %v1497
    %v1738 = vpack.c.b16 %v1514, %v1498
    %v1739 = vpack.c.b16 %v1515, %v1499
    %v1740 = vpack.c.b16 %v1516, %v1500
    %v1741 = vpack.c.b16 %v1517, %v1501
    %v1742 = vpack.c.b16 %v1518, %v1502
    %v1743 = vpack.c.b16 %v1519, %v1503
    %v1744 = vpack.c.b16 %v1520, %v1504
    %v1745 = vpack.c.b16 %v1537, %v1521
    %v1746 = vpack.c.b16 %v1538, %v1522
    %v1747 = vpack.c.b16 %v1539, %v1523
    %v1748 = vpack.c.b16 %v1540, %v1524
    %v1749 = vpack.c.b16 %v1541, %v1525
    %v1750 = vpack.c.b16 %v1542, %v1526
    %v1751 = vpack.c.b16 %v1543, %v1527
    %v1752 = vpack.c.b16 %v1544, %v1528
    %v1753 = vpack.c.b16 %v1545, %v1529
    %v1754 = vpack.c.b16 %v1546, %v1530
    %v1755 = vpack.c.b16 %v1547, %v1531
    %v1756 = vpack.c.b16 %v1548, %v1532
    %v1757 = vpack.c.b16 %v1549, %v1533
    %v1758 = vpack.c.b16 %v1550, %v1534
    %v1759 = vpack.c.b16 %v1551, %v1535
    %v1760 = vpack.c.b16 %v1552, %v1536
    %v1761 = vpack.c.b16 %v1569, %v1553
    %v1762 = vpack.c.b16 %v1570, %v1554
    %v1763 = vpack.c.b16 %v1571, %v1555
    %v1764 = vpack.c.b16 %v1572, %v1556
    %v1765 = vpack.c.b16 %v1573, %v1557
    %v1766 = vpack.c.b16 %v1574, %v1558
    %v1767 = vpack.c.b16 %v1575, %v1559
    %v1768 = vpack.c.b16 %v1576, %v1560
    %v1769 = vpack.c.b16 %v1577, %v1561
    %v1770 = vpack.c.b16 %v1578, %v1562
    %v1771 = vpack.c.b16 %v1579, %v1563
    %v1772 = vpack.c.b16 %v1580, %v1564
    %v1773 = vpack.c.b16 %v1581, %v1565
    %v1774 = vpack.c.b16 %v1582, %v1566
    %v1775 = vpack.c.b16 %v1583, %v1567
    %v1776 = vpack.c.b16 %v1584, %v1568
    %v1777 = vpack.c.b16 %v1601, %v1585
    %v1778 = vpack.c.b16 %v1602, %v1586
    %v1779 = vpack.c.b16 %v1603, %v1587
    %v1780 = vpack.c.b16 %v1604, %v1588
    %v1781 = vpack.c.b16 %v1605, %v1589
    %v1782 = vpack.c.b16 %v1606, %v1590
    %v1783 = vpack.c.b16 %v1607, %v1591
    %v1784 = vpack.c.b16 %v1608, %v1592
    %v1785 = vpack.c.b16 %v1609, %v1593
    %v1786 = vpack.c.b16 %v1610, %v1594
    %v1787 = vpack.c.b16 %v1611, %v1595
    %v1788 = vpack.c.b16 %v1612, %v1596
    %v1789 = vpack.c.b16 %v1613, %v1597
    %v1790 = vpack.c.b16 %v1614, %v1598
    %v1791 = vpack.c.b16 %v1615, %v1599
    %v1792 = vpack.c.b16 %v1616, %v1600
    %v1793 = vpack.c.b16 %v1633, %v1617
    %v1794 = vpack.c.b16 %v1634, %v1618
    %v1795 = vpack.c.b16 %v1635, %v1619
    %v1796 = vpack.c.b16 %v1636, %v1620
    %v1797 = vpack.c.b16 %v1637, %v1621
    %v1798 = vpack.c.b16 %v1638, %v1622
    %v1799 = vpack.c.b16 %v1639, %v1623
    %v1800 = vpack.c.b16 %v1640, %v1624
    %v1801 = vpack.c.b16 %v1641, %v1625
    %v1802 = vpack.c.b16 %v1642, %v1626
    %v1803 = vpack.c.b16 %v1643, %v1627
    %v1804 = vpack.c.b16 %v1644, %v1628
    %v1805 = vpack.c.b16 %v1645, %v1629
    %v1806 = vpack.c.b16 %v1646, %v1630
    %v1807 = vpack.c.b16 %v1647, %v1631
    %v1808 = vpack.c.b16 %v1648, %v1632
    %v1809 = vpack.c.b16 %v1665, %v1649
    %v1810 = vpack.c.b16 %v1666, %v1650
    %v1811 = vpack.c.b16 %v1667, %v1651
    %v1812 = vpack.c.b16 %v1668, %v1652
    %v1813 = vpack.c.b16 %v1669, %v1653
    %v1814 = vpack.c.b16 %v1670, %v1654
    %v1815 = vpack.c.b16 %v1671, %v1655
    %v1816 = vpack.c.b16 %v1672, %v1656
    %v1817 = vpack.c.b16 %v1673, %v1657
    %v1818 = vpack.c.b16 %v1674, %v1658
    %v1819 = vpack.c.b16 %v1675, %v1659
    %v1820 = vpack.c.b16 %v1676, %v1660
    %v1821 = vpack.c.b16 %v1677, %v1661
    %v1822 = vpack.c.b16 %v1678, %v1662
    %v1823 = vpack.c.b16 %v1679, %v1663
    %v1824 = vpack.c.b16 %v1680, %v1664
    %v1825 = vpack.c.b16 %v1697, %v1681
    %v1826 = vpack.c.b16 %v1698, %v1682
    %v1827 = vpack.c.b16 %v1699, %v1683
    %v1828 = vpack.c.b16 %v1700, %v1684
    %v1829 = vpack.c.b16 %v1701, %v1685
    %v1830 = vpack.c.b16 %v1702, %v1686
    %v1831 = vpack.c.b16 %v1703, %v1687
    %v1832 = vpack.c.b16 %v1704, %v1688
    %v1833 = vpack.c.b16 %v1705, %v1689
    %v1834 = vpack.c.b16 %v1706, %v1690
    %v1835 = vpack.c.b16 %v1707, %v1691
    %v1836 = vpack.c.b16 %v1708, %v1692
    %v1837 = vpack.c.b16 %v1709, %v1693
    %v1838 = vpack.c.b16 %v1710, %v1694
    %v1839 = vpack.c.b16 %v1711, %v1695
    %v1840 = vpack.c.b16 %v1712, %v1696
    %1969 = vmatprep.subr.bf16.mxu0 %v1714
    %1970 = vmatpush1.bf16.msra.mxu0 %v1713
    %1971 = vmatprep.subr.bf16.mxu0 %v1730
    %1972 = vmatpush1.bf16.msra.mxu0 %v1729
    %1973 = vmatprep.subr.bf16.mxu0 %v1746
    %1974 = vmatpush1.bf16.msra.mxu0 %v1745
    %1975 = vmatprep.subr.bf16.mxu0 %v1762
    %1976 = vmatpush1.bf16.msra.mxu0 %v1761
    %1977 = vmatprep.subr.bf16.mxu0 %v1778
    %1978 = vmatpush1.bf16.msra.mxu0 %v1777
    %1979 = vmatprep.subr.bf16.mxu0 %v1794
    %1980 = vmatpush1.bf16.msra.mxu0 %v1793
    %1981 = vmatprep.subr.bf16.mxu0 %v1810
    %1982 = vmatpush1.bf16.msra.mxu0 %v1809
    %1983 = vmatprep.subr.bf16.mxu0 %v1826
    %1984 = vmatpush1.bf16.msra.mxu0 %v1825
    %1985 = vmatprep.subr.bf16.mxu0 0
    %1986 = vmatpush1.bf16.msra.mxu0 0
    %1987 = vmatprep.subr.bf16.mxu0 0
    %1988 = vmatpush1.bf16.msra.mxu0 0
    %1989 = vmatprep.subr.bf16.mxu0 0
    %1990 = vmatpush1.bf16.msra.mxu0 0
    %1991 = vmatprep.subr.bf16.mxu0 0
    %1992 = vmatpush1.bf16.msra.mxu0 0
    %1993 = vmatprep.subr.bf16.mxu0 0
    %1994 = vmatpush1.bf16.msra.mxu0 0
    %1995 = vmatprep.subr.bf16.mxu0 0
    %1996 = vmatpush1.bf16.msra.mxu0 0
    %1997 = vmatprep.subr.bf16.mxu0 0
    %1998 = vmatpush1.bf16.msra.mxu0 0
    %1999 = vmatprep.subr.bf16.mxu0 0
    %2000 = vmatpush1.bf16.msra.mxu0 0
    %2001 = vmatprep.mubr.bf16.mxu0 0
    %2002 = vmatmul.mubr.bf16.gmra.mrb[0].mxu0 %v1116
    %v2003 = vpop.f32.mrb[0].mxu0
    %v2004 = vadd.f32 %v1252, %v2003
    %v2005 = vpop.f32.mrb[0].mxu0
    %v2006 = vadd.f32 %v1256, %v2005
    %v2007 = vpop.f32.mrb[0].mxu0
    %v2008 = vpop.f32.mrb[0].mxu0
    %2009 = vdwg.mxu0
    %2010 = vmatprep.subr.bf16.mxu0 %v1716
    %2011 = vmatpush1.bf16.msra.mxu0 %v1715
    %2012 = vmatprep.subr.bf16.mxu0 %v1732
    %2013 = vmatpush1.bf16.msra.mxu0 %v1731
    %2014 = vmatprep.subr.bf16.mxu0 %v1748
    %2015 = vmatpush1.bf16.msra.mxu0 %v1747
    %2016 = vmatprep.subr.bf16.mxu0 %v1764
    %2017 = vmatpush1.bf16.msra.mxu0 %v1763
    %2018 = vmatprep.subr.bf16.mxu0 %v1780
    %2019 = vmatpush1.bf16.msra.mxu0 %v1779
    %2020 = vmatprep.subr.bf16.mxu0 %v1796
    %2021 = vmatpush1.bf16.msra.mxu0 %v1795
    %2022 = vmatprep.subr.bf16.mxu0 %v1812
    %2023 = vmatpush1.bf16.msra.mxu0 %v1811
    %2024 = vmatprep.subr.bf16.mxu0 %v1828
    %2025 = vmatpush1.bf16.msra.mxu0 %v1827
    %2026 = vmatprep.subr.bf16.mxu0 0
    %2027 = vmatpush1.bf16.msra.mxu0 0
    %2028 = vmatprep.subr.bf16.mxu0 0
    %2029 = vmatpush1.bf16.msra.mxu0 0
    %2030 = vmatprep.subr.bf16.mxu0 0
    %2031 = vmatpush1.bf16.msra.mxu0 0
    %2032 = vmatprep.subr.bf16.mxu0 0
    %2033 = vmatpush1.bf16.msra.mxu0 0
    %2034 = vmatprep.subr.bf16.mxu0 0
    %2035 = vmatpush1.bf16.msra.mxu0 0
    %2036 = vmatprep.subr.bf16.mxu0 0
    %2037 = vmatpush1.bf16.msra.mxu0 0
    %2038 = vmatprep.subr.bf16.mxu0 0
    %2039 = vmatpush1.bf16.msra.mxu0 0
    %2040 = vmatprep.subr.bf16.mxu0 0
    %2041 = vmatpush1.bf16.msra.mxu0 0
    %2042 = vmatprep.mubr.bf16.mxu0 0
    %2043 = vmatmul.mubr.bf16.gmra.mrb[0].mxu0 %v1116
    %v2044 = vpop.f32.mrb[0].mxu0
    %v2045 = vadd.f32 %v1260, %v2044
    %v2046 = vpop.f32.mrb[0].mxu0
    %v2047 = vadd.f32 %v1264, %v2046
    %v2048 = vpop.f32.mrb[0].mxu0
    %v2049 = vpop.f32.mrb[0].mxu0
    %2050 = vdwg.mxu0
    %2051 = vmatprep.subr.bf16.mxu0 %v1718
    %2052 = vmatpush1.bf16.msra.mxu0 %v1717
    %2053 = vmatprep.subr.bf16.mxu0 %v1734
    %2054 = vmatpush1.bf16.msra.mxu0 %v1733
    %2055 = vmatprep.subr.bf16.mxu0 %v1750
    %2056 = vmatpush1.bf16.msra.mxu0 %v1749
    %2057 = vmatprep.subr.bf16.mxu0 %v1766
    %2058 = vmatpush1.bf16.msra.mxu0 %v1765
    %2059 = vmatprep.subr.bf16.mxu0 %v1782
    %2060 = vmatpush1.bf16.msra.mxu0 %v1781
    %2061 = vmatprep.subr.bf16.mxu0 %v1798
    %2062 = vmatpush1.bf16.msra.mxu0 %v1797
    %2063 = vmatprep.subr.bf16.mxu0 %v1814
    %2064 = vmatpush1.bf16.msra.mxu0 %v1813
    %2065 = vmatprep.subr.bf16.mxu0 %v1830
    %2066 = vmatpush1.bf16.msra.mxu0 %v1829
    %2067 = vmatprep.subr.bf16.mxu0 0
    %2068 = vmatpush1.bf16.msra.mxu0 0
    %2069 = vmatprep.subr.bf16.mxu0 0
    %2070 = vmatpush1.bf16.msra.mxu0 0
    %2071 = vmatprep.subr.bf16.mxu0 0
    %2072 = vmatpush1.bf16.msra.mxu0 0
    %2073 = vmatprep.subr.bf16.mxu0 0
    %2074 = vmatpush1.bf16.msra.mxu0 0
    %2075 = vmatprep.subr.bf16.mxu0 0
    %2076 = vmatpush1.bf16.msra.mxu0 0
    %2077 = vmatprep.subr.bf16.mxu0 0
    %2078 = vmatpush1.bf16.msra.mxu0 0
    %2079 = vmatprep.subr.bf16.mxu0 0
    %2080 = vmatpush1.bf16.msra.mxu0 0
    %2081 = vmatprep.subr.bf16.mxu0 0
    %2082 = vmatpush1.bf16.msra.mxu0 0
    %2083 = vmatprep.mubr.bf16.mxu0 0
    %2084 = vmatmul.mubr.bf16.gmra.mrb[0].mxu0 %v1116
    %v2085 = vpop.f32.mrb[0].mxu0
    %v2086 = vadd.f32 %v1268, %v2085
    %v2087 = vpop.f32.mrb[0].mxu0
    %v2088 = vadd.f32 %v1272, %v2087
    %v2089 = vpop.f32.mrb[0].mxu0
    %v2090 = vpop.f32.mrb[0].mxu0
    %2091 = vdwg.mxu0
    %2092 = vmatprep.subr.bf16.mxu0 %v1720
    %2093 = vmatpush1.bf16.msra.mxu0 %v1719
    %2094 = vmatprep.subr.bf16.mxu0 %v1736
    %2095 = vmatpush1.bf16.msra.mxu0 %v1735
    %2096 = vmatprep.subr.bf16.mxu0 %v1752
    %2097 = vmatpush1.bf16.msra.mxu0 %v1751
    %2098 = vmatprep.subr.bf16.mxu0 %v1768
    %2099 = vmatpush1.bf16.msra.mxu0 %v1767
    %2100 = vmatprep.subr.bf16.mxu0 %v1784
    %2101 = vmatpush1.bf16.msra.mxu0 %v1783
    %2102 = vmatprep.subr.bf16.mxu0 %v1800
    %2103 = vmatpush1.bf16.msra.mxu0 %v1799
    %2104 = vmatprep.subr.bf16.mxu0 %v1816
    %2105 = vmatpush1.bf16.msra.mxu0 %v1815
    %2106 = vmatprep.subr.bf16.mxu0 %v1832
    %2107 = vmatpush1.bf16.msra.mxu0 %v1831
    %2108 = vmatprep.subr.bf16.mxu0 0
    %2109 = vmatpush1.bf16.msra.mxu0 0
    %2110 = vmatprep.subr.bf16.mxu0 0
    %2111 = vmatpush1.bf16.msra.mxu0 0
    %2112 = vmatprep.subr.bf16.mxu0 0
    %2113 = vmatpush1.bf16.msra.mxu0 0
    %2114 = vmatprep.subr.bf16.mxu0 0
    %2115 = vmatpush1.bf16.msra.mxu0 0
    %2116 = vmatprep.subr.bf16.mxu0 0
    %2117 = vmatpush1.bf16.msra.mxu0 0
    %2118 = vmatprep.subr.bf16.mxu0 0
    %2119 = vmatpush1.bf16.msra.mxu0 0
    %2120 = vmatprep.subr.bf16.mxu0 0
    %2121 = vmatpush1.bf16.msra.mxu0 0
    %2122 = vmatprep.subr.bf16.mxu0 0
    %2123 = vmatpush1.bf16.msra.mxu0 0
    %2124 = vmatprep.mubr.bf16.mxu0 0
    %2125 = vmatmul.mubr.bf16.gmra.mrb[0].mxu0 %v1116
    %v2126 = vpop.f32.mrb[0].mxu0
    %v2127 = vadd.f32 %v1276, %v2126
    %v2128 = vpop.f32.mrb[0].mxu0
    %v2129 = vadd.f32 %v1280, %v2128
    %v2130 = vpop.f32.mrb[0].mxu0
    %v2131 = vpop.f32.mrb[0].mxu0
    %2132 = vdwg.mxu0
    %2133 = vmatprep.subr.bf16.mxu0 %v1722
    %2134 = vmatpush1.bf16.msra.mxu0 %v1721
    %2135 = vmatprep.subr.bf16.mxu0 %v1738
    %2136 = vmatpush1.bf16.msra.mxu0 %v1737
    %2137 = vmatprep.subr.bf16.mxu0 %v1754
    %2138 = vmatpush1.bf16.msra.mxu0 %v1753
    %2139 = vmatprep.subr.bf16.mxu0 %v1770
    %2140 = vmatpush1.bf16.msra.mxu0 %v1769
    %2141 = vmatprep.subr.bf16.mxu0 %v1786
    %2142 = vmatpush1.bf16.msra.mxu0 %v1785
    %2143 = vmatprep.subr.bf16.mxu0 %v1802
    %2144 = vmatpush1.bf16.msra.mxu0 %v1801
    %2145 = vmatprep.subr.bf16.mxu0 %v1818
    %2146 = vmatpush1.bf16.msra.mxu0 %v1817
    %2147 = vmatprep.subr.bf16.mxu0 %v1834
    %2148 = vmatpush1.bf16.msra.mxu0 %v1833
    %2149 = vmatprep.subr.bf16.mxu0 0
    %2150 = vmatpush1.bf16.msra.mxu0 0
    %2151 = vmatprep.subr.bf16.mxu0 0
    %2152 = vmatpush1.bf16.msra.mxu0 0
    %2153 = vmatprep.subr.bf16.mxu0 0
    %2154 = vmatpush1.bf16.msra.mxu0 0
    %2155 = vmatprep.subr.bf16.mxu0 0
    %2156 = vmatpush1.bf16.msra.mxu0 0
    %2157 = vmatprep.subr.bf16.mxu0 0
    %2158 = vmatpush1.bf16.msra.mxu0 0
    %2159 = vmatprep.subr.bf16.mxu0 0
    %2160 = vmatpush1.bf16.msra.mxu0 0
    %2161 = vmatprep.subr.bf16.mxu0 0
    %2162 = vmatpush1.bf16.msra.mxu0 0
    %2163 = vmatprep.subr.bf16.mxu0 0
    %2164 = vmatpush1.bf16.msra.mxu0 0
    %2165 = vmatprep.mubr.bf16.mxu0 0
    %2166 = vmatmul.mubr.bf16.gmra.mrb[0].mxu0 %v1116
    %v2167 = vpop.f32.mrb[0].mxu0
    %v2168 = vadd.f32 %v1284, %v2167
    %v2169 = vpop.f32.mrb[0].mxu0
    %v2170 = vadd.f32 %v1288, %v2169
    %v2171 = vpop.f32.mrb[0].mxu0
    %v2172 = vpop.f32.mrb[0].mxu0
    %2173 = vdwg.mxu0
    %2174 = vmatprep.subr.bf16.mxu0 %v1724
    %2175 = vmatpush1.bf16.msra.mxu0 %v1723
    %2176 = vmatprep.subr.bf16.mxu0 %v1740
    %2177 = vmatpush1.bf16.msra.mxu0 %v1739
    %2178 = vmatprep.subr.bf16.mxu0 %v1756
    %2179 = vmatpush1.bf16.msra.mxu0 %v1755
    %2180 = vmatprep.subr.bf16.mxu0 %v1772
    %2181 = vmatpush1.bf16.msra.mxu0 %v1771
    %2182 = vmatprep.subr.bf16.mxu0 %v1788
    %2183 = vmatpush1.bf16.msra.mxu0 %v1787
    %2184 = vmatprep.subr.bf16.mxu0 %v1804
    %2185 = vmatpush1.bf16.msra.mxu0 %v1803
    %2186 = vmatprep.subr.bf16.mxu0 %v1820
    %2187 = vmatpush1.bf16.msra.mxu0 %v1819
    %2188 = vmatprep.subr.bf16.mxu0 %v1836
    %2189 = vmatpush1.bf16.msra.mxu0 %v1835
    %2190 = vmatprep.subr.bf16.mxu0 0
    %2191 = vmatpush1.bf16.msra.mxu0 0
    %2192 = vmatprep.subr.bf16.mxu0 0
    %2193 = vmatpush1.bf16.msra.mxu0 0
    %2194 = vmatprep.subr.bf16.mxu0 0
    %2195 = vmatpush1.bf16.msra.mxu0 0
    %2196 = vmatprep.subr.bf16.mxu0 0
    %2197 = vmatpush1.bf16.msra.mxu0 0
    %2198 = vmatprep.subr.bf16.mxu0 0
    %2199 = vmatpush1.bf16.msra.mxu0 0
    %2200 = vmatprep.subr.bf16.mxu0 0
    %2201 = vmatpush1.bf16.msra.mxu0 0
    %2202 = vmatprep.subr.bf16.mxu0 0
    %2203 = vmatpush1.bf16.msra.mxu0 0
    %2204 = vmatprep.subr.bf16.mxu0 0
    %2205 = vmatpush1.bf16.msra.mxu0 0
    %2206 = vmatprep.mubr.bf16.mxu0 0
    %2207 = vmatmul.mubr.bf16.gmra.mrb[0].mxu0 %v1116
    %v2208 = vpop.f32.mrb[0].mxu0
    %v2209 = vadd.f32 %v1292, %v2208
    %v2210 = vpop.f32.mrb[0].mxu0
    %v2211 = vadd.f32 %v1296, %v2210
    %v2212 = vpop.f32.mrb[0].mxu0
    %v2213 = vpop.f32.mrb[0].mxu0
    %2214 = vdwg.mxu0
    %2215 = vmatprep.subr.bf16.mxu0 %v1726
    %2216 = vmatpush1.bf16.msra.mxu0 %v1725
    %2217 = vmatprep.subr.bf16.mxu0 %v1742
    %2218 = vmatpush1.bf16.msra.mxu0 %v1741
    %2219 = vmatprep.subr.bf16.mxu0 %v1758
    %2220 = vmatpush1.bf16.msra.mxu0 %v1757
    %2221 = vmatprep.subr.bf16.mxu0 %v1774
    %2222 = vmatpush1.bf16.msra.mxu0 %v1773
    %2223 = vmatprep.subr.bf16.mxu0 %v1790
    %2224 = vmatpush1.bf16.msra.mxu0 %v1789
    %2225 = vmatprep.subr.bf16.mxu0 %v1806
    %2226 = vmatpush1.bf16.msra.mxu0 %v1805
    %2227 = vmatprep.subr.bf16.mxu0 %v1822
    %2228 = vmatpush1.bf16.msra.mxu0 %v1821
    %2229 = vmatprep.subr.bf16.mxu0 %v1838
    %2230 = vmatpush1.bf16.msra.mxu0 %v1837
    %2231 = vmatprep.subr.bf16.mxu0 0
    %2232 = vmatpush1.bf16.msra.mxu0 0
    %2233 = vmatprep.subr.bf16.mxu0 0
    %2234 = vmatpush1.bf16.msra.mxu0 0
    %2235 = vmatprep.subr.bf16.mxu0 0
    %2236 = vmatpush1.bf16.msra.mxu0 0
    %2237 = vmatprep.subr.bf16.mxu0 0
    %2238 = vmatpush1.bf16.msra.mxu0 0
    %2239 = vmatprep.subr.bf16.mxu0 0
    %2240 = vmatpush1.bf16.msra.mxu0 0
    %2241 = vmatprep.subr.bf16.mxu0 0
    %2242 = vmatpush1.bf16.msra.mxu0 0
    %2243 = vmatprep.subr.bf16.mxu0 0
    %2244 = vmatpush1.bf16.msra.mxu0 0
    %2245 = vmatprep.subr.bf16.mxu0 0
    %2246 = vmatpush1.bf16.msra.mxu0 0
    %2247 = vmatprep.mubr.bf16.mxu0 0
    %2248 = vmatmul.mubr.bf16.gmra.mrb[0].mxu0 %v1116
    %v2249 = vpop.f32.mrb[0].mxu0
    %v2250 = vadd.f32 %v1300, %v2249
    %v2251 = vpop.f32.mrb[0].mxu0
    %v2252 = vadd.f32 %v1304, %v2251
    %v2253 = vpop.f32.mrb[0].mxu0
    %v2254 = vpop.f32.mrb[0].mxu0
    %2255 = vdwg.mxu0
    %2256 = vmatprep.subr.bf16.mxu0 %v1728
    %2257 = vmatpush1.bf16.msra.mxu0 %v1727
    %2258 = vmatprep.subr.bf16.mxu0 %v1744
    %2259 = vmatpush1.bf16.msra.mxu0 %v1743
    %2260 = vmatprep.subr.bf16.mxu0 %v1760
    %2261 = vmatpush1.bf16.msra.mxu0 %v1759
    %2262 = vmatprep.subr.bf16.mxu0 %v1776
    %2263 = vmatpush1.bf16.msra.mxu0 %v1775
    %2264 = vmatprep.subr.bf16.mxu0 %v1792
    %2265 = vmatpush1.bf16.msra.mxu0 %v1791
    %2266 = vmatprep.subr.bf16.mxu0 %v1808
    %2267 = vmatpush1.bf16.msra.mxu0 %v1807
    %2268 = vmatprep.subr.bf16.mxu0 %v1824
    %2269 = vmatpush1.bf16.msra.mxu0 %v1823
    %2270 = vmatprep.subr.bf16.mxu0 %v1840
    %2271 = vmatpush1.bf16.msra.mxu0 %v1839
    %2272 = vmatprep.subr.bf16.mxu0 0
    %2273 = vmatpush1.bf16.msra.mxu0 0
    %2274 = vmatprep.subr.bf16.mxu0 0
    %2275 = vmatpush1.bf16.msra.mxu0 0
    %2276 = vmatprep.subr.bf16.mxu0 0
    %2277 = vmatpush1.bf16.msra.mxu0 0
    %2278 = vmatprep.subr.bf16.mxu0 0
    %2279 = vmatpush1.bf16.msra.mxu0 0
    %2280 = vmatprep.subr.bf16.mxu0 0
    %2281 = vmatpush1.bf16.msra.mxu0 0
    %2282 = vmatprep.subr.bf16.mxu0 0
    %2283 = vmatpush1.bf16.msra.mxu0 0
    %2284 = vmatprep.subr.bf16.mxu0 0
    %2285 = vmatpush1.bf16.msra.mxu0 0
    %2286 = vmatprep.subr.bf16.mxu0 0
    %2287 = vmatpush1.bf16.msra.mxu0 0
    %2288 = vmatprep.mubr.bf16.mxu0 0
    %2289 = vmatmul.mubr.bf16.gmra.mrb[0].mxu0 %v1116
    %v2290 = vpop.f32.mrb[0].mxu0
    %v2291 = vadd.f32 %v1308, %v2290
    %v2292 = vpop.f32.mrb[0].mxu0
    %v2293 = vadd.f32 %v1312, %v2292
    %v2294 = vpop.f32.mrb[0].mxu0
    %v2295 = vpop.f32.mrb[0].mxu0
    %2296 = vdwg.mxu0
    %v2297 = vpack.c.bf16 %v2004, %v2004
    %v2298 = vpack.c.bf16 %v2006, %v2006
    %v2299 = vpack.c.bf16 %v2045, %v2045
    %v2300 = vpack.c.bf16 %v2047, %v2047
    %v2301 = vpack.c.bf16 %v2086, %v2086
    %v2302 = vpack.c.bf16 %v2088, %v2088
    %v2303 = vpack.c.bf16 %v2127, %v2127
    %v2304 = vpack.c.bf16 %v2129, %v2129
    %v2313 = vcombine.low %v2297, %v2298
    %v2314 = vcombine.low %v2299, %v2300
    %v2315 = vcombine.low %v2301, %v2302
    %v2316 = vcombine.low %v2303, %v2304
    %v2318 = vunpack.c.l.s4 1966171168
    %v2319 = vunpack.c.0.s8 %v2318
    %v2320 = vlaneseq
    %v2321 = vshrl.u32 %v2320, 7
    %v2322 = vsub.s32 %v2319, %v2321
    %v2323 = vrot.slane %v2313, %v2322
    %v2325 = vunpack.c.l.s4 1966171168
    %v2326 = vunpack.c.0.s8 %v2325
    %v2327 = vlaneseq
    %v2328 = vshrl.u32 %v2327, 7
    %v2329 = vsub.s32 %v2326, %v2328
    %v2330 = vrot.slane %v2314, %v2329
    %v2332 = vunpack.c.l.s4 1966171168
    %v2333 = vunpack.c.0.s8 %v2332
    %v2334 = vlaneseq
    %v2335 = vshrl.u32 %v2334, 7
    %v2336 = vsub.s32 %v2333, %v2335
    %v2337 = vrot.slane %v2315, %v2336
    %v2339 = vunpack.c.l.s4 1966171168
    %v2340 = vunpack.c.0.s8 %v2339
    %v2341 = vlaneseq
    %v2342 = vshrl.u32 %v2341, 7
    %v2343 = vsub.s32 %v2340, %v2342
    %v2344 = vrot.slane %v2316, %v2343
    %v2345 = vcombine.low %v2323, %v2330
    %v2346 = vcombine.low %v2337, %v2344
    %v2348 = vunpack.c.l.s4 1966171168
    %v2349 = vunpack.c.0.s8 %v2348
    %v2350 = vlaneseq
    %v2351 = vshrl.u32 %v2350, 7
    %v2352 = vsub.s32 %v2349, %v2351
    %v2353 = vrot.slane %v2345, %v2352
    %v2355 = vunpack.c.l.s4 1966171168
    %v2356 = vunpack.c.0.s8 %v2355
    %v2357 = vlaneseq
    %v2358 = vshrl.u32 %v2357, 7
    %v2359 = vsub.s32 %v2356, %v2358
    %v2360 = vrot.slane %v2346, %v2359
    %v2361 = vcombine.low %v2353, %v2360
    %2363 = vst [vmem:[#allocation15] sm:$0xff] %v2361
    %v2364 = vpack.c.bf16 %v2168, %v2168
    %v2365 = vpack.c.bf16 %v2170, %v2170
    %v2366 = vpack.c.bf16 %v2209, %v2209
    %v2367 = vpack.c.bf16 %v2211, %v2211
    %v2368 = vpack.c.bf16 %v2250, %v2250
    %v2369 = vpack.c.bf16 %v2252, %v2252
    %v2370 = vpack.c.bf16 %v2291, %v2291
    %v2371 = vpack.c.bf16 %v2293, %v2293
    %v2380 = vcombine.low %v2364, %v2365
    %v2381 = vcombine.low %v2366, %v2367
    %v2382 = vcombine.low %v2368, %v2369
    %v2383 = vcombine.low %v2370, %v2371
    %v2385 = vunpack.c.l.s4 1966171168
    %v2386 = vunpack.c.0.s8 %v2385
    %v2387 = vlaneseq
    %v2388 = vshrl.u32 %v2387, 7
    %v2389 = vsub.s32 %v2386, %v2388
    %v2390 = vrot.slane %v2380, %v2389
    %v2392 = vunpack.c.l.s4 1966171168
    %v2393 = vunpack.c.0.s8 %v2392
    %v2394 = vlaneseq
    %v2395 = vshrl.u32 %v2394, 7
    %v2396 = vsub.s32 %v2393, %v2395
    %v2397 = vrot.slane %v2381, %v2396
    %v2399 = vunpack.c.l.s4 1966171168
    %v2400 = vunpack.c.0.s8 %v2399
    %v2401 = vlaneseq
    %v2402 = vshrl.u32 %v2401, 7
    %v2403 = vsub.s32 %v2400, %v2402
    %v2404 = vrot.slane %v2382, %v2403
    %v2406 = vunpack.c.l.s4 1966171168
    %v2407 = vunpack.c.0.s8 %v2406
    %v2408 = vlaneseq
    %v2409 = vshrl.u32 %v2408, 7
    %v2410 = vsub.s32 %v2407, %v2409
    %v2411 = vrot.slane %v2383, %v2410
    %v2412 = vcombine.low %v2390, %v2397
    %v2413 = vcombine.low %v2404, %v2411
    %v2415 = vunpack.c.l.s4 1966171168
    %v2416 = vunpack.c.0.s8 %v2415
    %v2417 = vlaneseq
    %v2418 = vshrl.u32 %v2417, 7
    %v2419 = vsub.s32 %v2416, %v2418
    %v2420 = vrot.slane %v2412, %v2419
    %v2422 = vunpack.c.l.s4 1966171168
    %v2423 = vunpack.c.0.s8 %v2422
    %v2424 = vlaneseq
    %v2425 = vshrl.u32 %v2424, 7
    %v2426 = vsub.s32 %v2423, %v2425
    %v2427 = vrot.slane %v2413, %v2426
    %v2428 = vcombine.low %v2420, %v2427
    %2430 = vst [vmem:[#allocation17] sm:$0xff] %v2428
    // Predicated region
    $region62: #{tpu_custom_call.1} parent=1 // pred_check
      _
    $region63: #{tpu_custom_call.1} parent=1 // pred_check_branch
      %2432 = sbr.rel (0) target = $region65
    $region64: #{tpu_custom_call.1} parent=1 // pred_region
      %s2434 = ssub.s32 32, 32
      %2435 = vsyncadd [#allocation4], %s2434
      %s2437 = sshll.u32 [#allocation11], 4
      %s2438 = int_to_ptr.vmem [resolvable:$true] %s2437
      %2440 = dma.vmem_to_hbm [thread:$0]  %s2438, 32, %s10, [#allocation4]
    $region65: #{tpu_custom_call.1} parent=1 // pred_fallthru
      _
    // Predicated region
    $region66: #{tpu_custom_call.1} parent=1 // pred_check
      _
    $region67: #{tpu_custom_call.1} parent=1 // pred_check_branch
      %2442 = sbr.rel (0) target = $region69
    $region68: #{tpu_custom_call.1} parent=1 // pred_region
      %s2444 = ssub.s32 32, 32
      %2445 = vsyncadd [#allocation13], %s2444
      %s2447 = sshll.u32 [#allocation12], 4
      %s2448 = int_to_ptr.vmem [resolvable:$true] %s2447
      %2450 = dma.vmem_to_hbm [thread:$0]  %s2448, 32, %s11, [#allocation13]
    $region69: #{tpu_custom_call.1} parent=1 // pred_fallthru
      _
    // Predicated region
    $region70: #{tpu_custom_call.1} parent=1 // pred_check
      _
    $region71: #{tpu_custom_call.1} parent=1 // pred_check_branch
      %2452 = sbr.rel (0) target = $region73
    $region72: #{tpu_custom_call.1} parent=1 // pred_region
      %s2454 = ssub.s32 32, 32
      %2455 = vsyncadd [#allocation13], %s2454
      %s2457 = sshll.u32 [#allocation14], 4
      %s2458 = int_to_ptr.vmem [resolvable:$true] %s2457
      %2460 = dma.vmem_to_hbm [thread:$0]  %s2458, 32, %s12, [#allocation13]
    $region73: #{tpu_custom_call.1} parent=1 // pred_fallthru
      _
    // Predicated region
    $region74: #{tpu_custom_call.1} parent=1 // pred_check
      _
    $region75: #{tpu_custom_call.1} parent=1 // pred_check_branch
      %2462 = sbr.rel (0) target = $region77
    $region76: #{tpu_custom_call.1} parent=1 // pred_region
      %s2464 = ssub.s32 128, 128
      %2465 = vsyncadd [#allocation16], %s2464
      %s2467 = sshll.u32 [#allocation15], 4
      %s2468 = int_to_ptr.vmem [resolvable:$true] %s2467
      %2470 = dma.vmem_to_hbm [thread:$0]  %s2468, 128, %s13, [#allocation16]
    $region77: #{tpu_custom_call.1} parent=1 // pred_fallthru
      _
    // Predicated region
    $region78: #{tpu_custom_call.1} parent=1 // pred_check
      _
    $region79: #{tpu_custom_call.1} parent=1 // pred_check_branch
      %2472 = sbr.rel (0) target = $region81
    $region80: #{tpu_custom_call.1} parent=1 // pred_region
      %s2474 = ssub.s32 128, 128
      %2475 = vsyncadd [#allocation16], %s2474
      %s2477 = sshll.u32 [#allocation17], 4
      %s2478 = int_to_ptr.vmem [resolvable:$true] %s2477
      %2480 = dma.vmem_to_hbm [thread:$0]  %s2478, 128, %s14, [#allocation16]
    $region81: #{tpu_custom_call.1} parent=1 // pred_fallthru
      _
    // Predicated region
    $region82: #{tpu_custom_call.1} parent=1 // pred_check
      _
    $region83: #{tpu_custom_call.1} parent=1 // pred_check_branch
      %2482 = sbr.rel (0) target = $region85
    $region84: #{tpu_custom_call.1} parent=1 // pred_region
      %2483 = dma.done [#allocation4], 32
    $region85: #{tpu_custom_call.1} parent=1 // pred_fallthru
      _
    // Predicated region
    $region86: #{tpu_custom_call.1} parent=1 // pred_check
      _
    $region87: #{tpu_custom_call.1} parent=1 // pred_check_branch
      %2485 = sbr.rel (0) target = $region89
    $region88: #{tpu_custom_call.1} parent=1 // pred_region
      %2486 = dma.done [#allocation13], 32
    $region89: #{tpu_custom_call.1} parent=1 // pred_fallthru
      _
    // Predicated region
    $region90: #{tpu_custom_call.1} parent=1 // pred_check
      _
    $region91: #{tpu_custom_call.1} parent=1 // pred_check_branch
      %2488 = sbr.rel (0) target = $region93
    $region92: #{tpu_custom_call.1} parent=1 // pred_region
      %2489 = dma.done [#allocation13], 32
    $region93: #{tpu_custom_call.1} parent=1 // pred_fallthru
      _
    // Predicated region
    $region94: #{tpu_custom_call.1} parent=1 // pred_check
      _
    $region95: #{tpu_custom_call.1} parent=1 // pred_check_branch
      %2491 = sbr.rel (0) target = $region97
    $region96: #{tpu_custom_call.1} parent=1 // pred_region
      %2492 = dma.done [#allocation16], 128
    $region97: #{tpu_custom_call.1} parent=1 // pred_fallthru
      _
    // Predicated region
    $region98: #{tpu_custom_call.1} parent=1 // pred_check
      _
    $region99: #{tpu_custom_call.1} parent=1 // pred_check_branch
      %2494 = sbr.rel (0) target = $region101
    $region100: #{tpu_custom_call.1} parent=1 // pred_region
      %2495 = dma.done [#allocation16], 128
    $region101: #{tpu_custom_call.1} parent=1 // pred_fallthru
      _
    %2496 = vsyncpa [#allocation3], 1
    %2497 = vsyncpa [#allocation6], 1
    %2498 = vsyncpa [#allocation9], 1
    %2499 = vsyncpa [#allocation4], 1
    %2500 = vsyncpa [#allocation13], 1
    %2501 = vsyncpa [#allocation16], 1

</llo_original>
